<compile_context>
chip_gen: v6e
topology: v6e:2x2x1
jax: 0.10.0
libtpu: 0.0.40
codegen_flags: <defaults>
</compile_context>

<pallas_src>
import functools

import jax
import jax.numpy as jnp
from jax.experimental import pallas as pl
from jax.experimental.pallas import tpu as pltpu


# --------------------------------------------------------------------------
# Fused whole-batch kernel (single step, everything resident in VMEM)
# --------------------------------------------------------------------------

def _encoder_fused_kernel(emb_ref, mask_ref, wid_ref,
                          wqkv_ref, bqkv_ref, wo_ref,
                          w1_ref, b1_ref, w2_ref,
                          vecd_ref, o_ref,
                          *, batch, seq, num_heads, eps):
    B, S = batch, seq
    N, D = emb_ref.shape                    # N = B*S
    H = num_heads
    dh = D // H
    f32, bf16 = jnp.float32, jnp.bfloat16

    x0 = emb_ref[...]                        # (N, D) f32 token+pos embedding
    mask = mask_ref[...]                     # (B, S) f32
    wid = wid_ref[...]                       # (B, S) i32
    vecd = vecd_ref[...]                     # (9, D) f32 packed LN/bias vectors
    bqkv = bqkv_ref[...]                     # (2, 3D) f32 packed in-proj biases

    # Key-padding mask -> additive f32 bias, computed ONCE, reused by both MHAs.
    kbias = jnp.where(mask >= f32(0.5), f32(0.0), f32(-1e30))   # (B, S)

    def layer_norm(h, g_row, b_row):
        mu = jnp.mean(h, axis=-1, keepdims=True)
        d = h - mu
        var = jnp.mean(d * d, axis=-1, keepdims=True)
        return d * jax.lax.rsqrt(var + f32(eps)) * g_row + b_row

    def mha(x, wqkv, bvec, wo, bo_row):
        """nn.MultiheadAttention(batch_first=True), fused QKV / fused out-proj.

        x: (N, D) f32; wqkv: (D, 3D) bf16 (q-scale folded); bvec: (1, 3D) f32;
        wo: (D, D) bf16; bo_row: (1, D) f32.
        """
        # One MXU-friendly fused projection for the whole batch.
        qkv = jnp.dot(x.astype(bf16), wqkv,
                      preferred_element_type=f32) + bvec          # (N, 3D) f32
        ctx_rows = []
        for b in range(B):                    # static unrolled; per-(b,h) only
            r0 = b * S                        # for the tiny score/context stage
            kb = kbias[b:b + 1, :]            # (1, S)
            heads = []
            for h in range(H):
                c0 = h * dh
                q = qkv[r0:r0 + S, c0:c0 + dh].astype(bf16)          # (S, dh)
                k = qkv[r0:r0 + S, D + c0:D + c0 + dh].astype(bf16)
                v = qkv[r0:r0 + S, 2 * D + c0:2 * D + c0 + dh].astype(bf16)
                # scores: q @ k^T (NT contraction), f32 accumulate, then bias.
                s = jax.lax.dot_general(q, k, (((1,), (1,)), ((), ())),
                                        preferred_element_type=f32) + kb
                m = jnp.max(s, axis=-1, keepdims=True)
                e = jnp.exp(s - m)
                p = e * pl.reciprocal(jnp.sum(e, axis=-1, keepdims=True),
                                      approx=True)
                heads.append(jnp.dot(p.astype(bf16), v,
                                     preferred_element_type=f32))    # (S, dh)
            ctx_rows.append(jnp.concatenate(heads, axis=-1))          # (S, D)
        ctx = jnp.concatenate(ctx_rows, axis=0)                       # (N, D)
        # Single full-width output projection (no cross-head reduction).
        return jnp.dot(ctx.astype(bf16), wo,
                       preferred_element_type=f32) + bo_row

    # ---- 1) synthetic mini-BERT encoder layer -> last_hidden_state ----------
    x = layer_norm(x0, vecd[0:1], vecd[1:2])
    attn = mha(x, wqkv_ref[0], bqkv[0:1], wo_ref[0], vecd[6:7])
    x = layer_norm(x + attn, vecd[2:3], vecd[3:4])
    hdn = jnp.dot(x.astype(bf16), w1_ref[...],
                  preferred_element_type=f32) + b1_ref[...]
    hdn = jax.nn.gelu(hdn)                       # tanh approx -> EUP
    ffn = jnp.dot(hdn.astype(bf16), w2_ref[...],
                  preferred_element_type=f32) + vecd[7:8]
    hid = layer_norm(x + ffn, vecd[4:5], vecd[5:6])              # (N, D)

    # ---- 2) merge_subword_representation ------------------------------------
    t_idx = jax.lax.broadcasted_iota(jnp.int32, (S, 1), 0)
    tgt = jax.lax.broadcasted_iota(jnp.int32, (S, S), 0)         # row = word id
    merged_rows = []
    for b in range(B):
        hb = hid[b * S:(b + 1) * S, :]                           # (S, D)
        widb = wid[b:b + 1, :]                                   # (1, S)
        tot_words = jnp.max(widb) + 1                            # scalar
        sel = (jnp.broadcast_to(widb, (S, S)) == tgt).astype(f32)  # (word, tok)
        counts = jnp.sum(sel, axis=1, keepdims=True)
        summed = jnp.dot(sel, hb, preferred_element_type=f32)    # f32 exact
        mean = summed / jnp.maximum(counts, f32(1.0))            # exact division
        merged_rows.append(jnp.where(t_idx < tot_words, mean, hb))
    merged = jnp.concatenate(merged_rows, axis=0)                # (N, D)

    # ---- 3) final self.mha (dropout=0.2 is eval-mode identity) --------------
    out = mha(merged, wqkv_ref[1], bqkv[1:2], wo_ref[1], vecd[8:9])
    o_ref[...] = out.astype(o_ref.dtype)


# --------------------------------------------------------------------------
# Wrapper: single grid-free pallas_call for the whole pipeline
# --------------------------------------------------------------------------

def encoder_forward(prep, input_ids, attention_mask, word_ids, num_heads,
                    eps=1e-12):
    B, S = input_ids.shape
    D = prep["wo"].shape[-1]

    # Embedding lookup (gather) stays in XLA; everything after is one kernel.
    emb = (prep["tok_emb"][input_ids]
           + prep["pos_emb"][:S][None, :, :]).astype(jnp.float32)
    emb2 = emb.reshape(B * S, D)                       # slab layout (free)
    mask = attention_mask.astype(jnp.float32)          # (B, S)
    wid = word_ids.astype(jnp.int32)                   # (B, S)

    kernel = functools.partial(_encoder_fused_kernel,
                               batch=B, seq=S, num_heads=num_heads, eps=eps)
    out = pl.pallas_call(
        kernel,
        out_shape=jax.ShapeDtypeStruct((B * S, D), jnp.float32),
    )(emb2, mask, wid,
      prep["wqkv"], prep["bqkv"], prep["wo"],
      prep["ffn_w1"], prep["ffn_b1"], prep["ffn_w2"],
      prep["vecd"])
    return out.reshape(B, S, D)


# --------------------------------------------------------------------------
# Parameters: PyTorch-layout init + one-time kernel-layout preparation
# --------------------------------------------------------------------------

def init_params(key, vocab, max_pos, D, Hf):
    ks = jax.random.split(key, 8)
    s = 0.02
    return {
        "tok_emb": jax.random.normal(ks[0], (vocab, D), jnp.float32) * s,
        "pos_emb": jax.random.normal(ks[1], (max_pos, D), jnp.float32) * s,
        "ln_emb": (jnp.ones((D,), jnp.float32), jnp.zeros((D,), jnp.float32)),
        # encoder-layer self-attention (MultiheadAttention weight layout)
        "enc_w_in": jax.random.normal(ks[2], (3 * D, D), jnp.float32) * s,
        "enc_b_in": jnp.zeros((3 * D,), jnp.float32),
        "enc_w_out": jax.random.normal(ks[3], (D, D), jnp.float32) * s,
        "enc_b_out": jnp.zeros((D,), jnp.float32),
        "ln1": (jnp.ones((D,), jnp.float32), jnp.zeros((D,), jnp.float32)),
        "ffn_w1": jax.random.normal(ks[4], (Hf, D), jnp.float32) * s,
        "ffn_b1": jnp.zeros((Hf,), jnp.float32),
        "ffn_w2": jax.random.normal(ks[5], (D, Hf), jnp.float32) * s,
        "ffn_b2": jnp.zeros((D,), jnp.float32),
        "ln2": (jnp.ones((D,), jnp.float32), jnp.zeros((D,), jnp.float32)),
        # final self.mha
        "mha_w_in": jax.random.normal(ks[6], (3 * D, D), jnp.float32) * s,
        "mha_b_in": jnp.zeros((3 * D,), jnp.float32),
        "mha_w_out": jax.random.normal(ks[7], (D, D), jnp.float32) * s,
        "mha_b_out": jnp.zeros((D,), jnp.float32),
    }


def prepare_params(p, num_heads):
    """One-time conversion to kernel-ready layouts.

    * in-proj weights fused to (D, 3D) with the 1/sqrt(dh) q-scale folded in,
    * out-proj / FFN weights transposed to (in, out),
    * all matmul weights cast to bf16 (f32 accumulation in-kernel),
    * LayerNorm gammas/betas and biases packed into a single (9, D) array,
    * in-proj biases packed into a (2, 3D) array.
    """
    D = p["enc_w_out"].shape[0]
    dh = D // num_heads
    scale = jnp.float32(1.0 / (dh ** 0.5))

    def fuse_in(w_in, b_in):
        # PyTorch in_proj_weight (3D, D): rows [0:D]=q, [D:2D]=k, [2D:3D]=v.
        wq = jnp.transpose(w_in[0 * D:1 * D]) * scale     # (D, D), scale folded
        wk = jnp.transpose(w_in[1 * D:2 * D])
        wv = jnp.transpose(w_in[2 * D:3 * D])
        w = jnp.concatenate([wq, wk, wv], axis=1)         # (D, 3D)
        b = jnp.concatenate([b_in[:D] * scale, b_in[D:2 * D], b_in[2 * D:]])
        return w, b

    enc_w, enc_b = fuse_in(p["enc_w_in"], p["enc_b_in"])
    mha_w, mha_b = fuse_in(p["mha_w_in"], p["mha_b_in"])

    vecd = jnp.stack([
        p["ln_emb"][0], p["ln_emb"][1],     # 0,1
        p["ln1"][0], p["ln1"][1],           # 2,3
        p["ln2"][0], p["ln2"][1],           # 4,5
        p["enc_b_out"],                     # 6
        p["ffn_b2"],                        # 7
        p["mha_b_out"],                     # 8
    ]).astype(jnp.float32)                                  # (9, D)

    return {
        "tok_emb": p["tok_emb"],
        "pos_emb": p["pos_emb"],
        "wqkv": jnp.stack([enc_w, mha_w]).astype(jnp.bfloat16),      # (2,D,3D)
        "bqkv": jnp.stack([enc_b, mha_b]).astype(jnp.float32),       # (2,3D)
        "wo": jnp.stack([jnp.transpose(p["enc_w_out"]),
                         jnp.transpose(p["mha_w_out"])]).astype(jnp.bfloat16),
        "ffn_w1": jnp.transpose(p["ffn_w1"]).astype(jnp.bfloat16),   # (D, Hf)
        "ffn_b1": p["ffn_b1"].reshape(1, -1).astype(jnp.float32),
        "ffn_w2": jnp.transpose(p["ffn_w2"]).astype(jnp.bfloat16),   # (Hf, D)
        "vecd": vecd,
    }


# --------------------------------------------------------------------------

if __name__ == "__main__":
    B, S, D = 2, 8, 32          # encoder_output_dim = 32
    NUM_HEADS = 4               # self_attention_heads = 4
    VOCAB, MAX_POS, HFF = 64, 16, 64

    key = jax.random.PRNGKey(0)
    k_param, k_ids = jax.random.split(key)

    params = init_params(k_param, VOCAB, MAX_POS, D, HFF)
    prep = prepare_params(params, NUM_HEADS)

    input_ids = jax.random.randint(k_ids, (B, S), 0, VOCAB, dtype=jnp.int32)
    attention_mask = jnp.array(
        [[1, 1, 1, 1, 1, 1, 1, 1],
         [1, 1, 1, 1, 1, 1, 0, 0]], dtype=jnp.float32)
    # word_ids_custom: subword -> word mapping; -1 marks padding positions
    word_ids = jnp.array(
        [[0, 0, 1, 2, 2, 2, 3, 4],
         [0, 1, 1, 2, 3, 3, -1, -1]], dtype=jnp.int32)

    fwd = jax.jit(functools.partial(encoder_forward, num_heads=NUM_HEADS))
    out = fwd(prep, input_ids, attention_mask, word_ids)
    out = jax.block_until_ready(out)

    assert out.shape == (B, S, D)
    assert bool(jnp.all(jnp.isfinite(out)))
    print("KERNEL_OK")
</pallas_src>

<mosaic_0001>
module attributes {stable_mosaic.version = 11 : i64} {
  func.func @_encoder_fused_kernel(%arg0: memref<16x32xf32, #tpu.memory_space<vmem>>, %arg1: memref<2x8xf32, #tpu.memory_space<vmem>>, %arg2: memref<2x8xi32, #tpu.memory_space<vmem>>, %arg3: memref<2x32x96xbf16, #tpu.memory_space<vmem>>, %arg4: memref<2x96xf32, #tpu.memory_space<vmem>>, %arg5: memref<2x32x32xbf16, #tpu.memory_space<vmem>>, %arg6: memref<32x64xbf16, #tpu.memory_space<vmem>>, %arg7: memref<1x64xf32, #tpu.memory_space<vmem>>, %arg8: memref<64x32xbf16, #tpu.memory_space<vmem>>, %arg9: memref<9x32xf32, #tpu.memory_space<vmem>>, %arg10: memref<16x32xf32, #tpu.memory_space<vmem>>) attributes {dimension_semantics = [], scalar_prefetch = 0 : i64, scratch_operands = 0 : i64, tpu.core_type = #tpu.core_type<tc>} {
    %c0 = arith.constant 0 : index
    %c0_0 = arith.constant 0 : index
    %0 = vector.load %arg0[%c0, %c0_0] : memref<16x32xf32, #tpu.memory_space<vmem>>, vector<16x32xf32>
    %c0_1 = arith.constant 0 : index
    %c0_2 = arith.constant 0 : index
    %1 = vector.load %arg1[%c0_1, %c0_2] : memref<2x8xf32, #tpu.memory_space<vmem>>, vector<2x8xf32>
    %c0_3 = arith.constant 0 : index
    %c0_4 = arith.constant 0 : index
    %2 = vector.load %arg2[%c0_3, %c0_4] : memref<2x8xi32, #tpu.memory_space<vmem>>, vector<2x8xi32>
    %c0_5 = arith.constant 0 : index
    %c0_6 = arith.constant 0 : index
    %3 = vector.load %arg9[%c0_5, %c0_6] : memref<9x32xf32, #tpu.memory_space<vmem>>, vector<9x32xf32>
    %c0_7 = arith.constant 0 : index
    %c0_8 = arith.constant 0 : index
    %4 = vector.load %arg4[%c0_7, %c0_8] : memref<2x96xf32, #tpu.memory_space<vmem>>, vector<2x96xf32>
    %cst = arith.constant 5.000000e-01 : f32
    %5 = vector.broadcast %cst : f32 to vector<2x8xf32>
    %6 = arith.cmpf oge, %1, %5 : vector<2x8xf32>
    %cst_9 = arith.constant 0.000000e+00 : f32
    %cst_10 = arith.constant -1.000000e+30 : f32
    %7 = vector.broadcast %cst_9 : f32 to vector<2x8xf32>
    %8 = vector.broadcast %cst_10 : f32 to vector<2x8xf32>
    %9 = arith.select %6, %7, %8 : vector<2x8xi1>, vector<2x8xf32>
    %10 = vector.extract_strided_slice %3 {offsets = [0, 0], sizes = [1, 32], strides = [1, 1]} : vector<9x32xf32> to vector<1x32xf32>
    %11 = vector.extract_strided_slice %3 {offsets = [1, 0], sizes = [1, 32], strides = [1, 1]} : vector<9x32xf32> to vector<1x32xf32>
    %cst_11 = arith.constant dense<0.000000e+00> : vector<16xf32>
    %12 = vector.multi_reduction <add>, %0, %cst_11 [1] : vector<16x32xf32> to vector<16xf32>
    %13 = vector.shape_cast %12 : vector<16xf32> to vector<16x1xf32>
    %cst_12 = arith.constant 3.200000e+01 : f32
    %14 = vector.broadcast %cst_12 : f32 to vector<16x1xf32>
    %15 = arith.divf %13, %14 : vector<16x1xf32>
    %16 = vector.broadcast %15 : vector<16x1xf32> to vector<16x32xf32>
    %17 = arith.subf %0, %16 : vector<16x32xf32>
    %18 = arith.mulf %17, %17 : vector<16x32xf32>
    %cst_13 = arith.constant dense<0.000000e+00> : vector<16xf32>
    %19 = vector.multi_reduction <add>, %18, %cst_13 [1] : vector<16x32xf32> to vector<16xf32>
    %20 = vector.shape_cast %19 : vector<16xf32> to vector<16x1xf32>
    %cst_14 = arith.constant 3.200000e+01 : f32
    %21 = vector.broadcast %cst_14 : f32 to vector<16x1xf32>
    %22 = arith.divf %20, %21 : vector<16x1xf32>
    %cst_15 = arith.constant 9.99999996E-13 : f32
    %23 = vector.broadcast %cst_15 : f32 to vector<16x1xf32>
    %24 = arith.addf %22, %23 : vector<16x1xf32>
    %25 = math.rsqrt %24 : vector<16x1xf32>
    %26 = vector.broadcast %25 : vector<16x1xf32> to vector<16x32xf32>
    %27 = arith.mulf %17, %26 : vector<16x32xf32>
    %28 = vector.broadcast %10 : vector<1x32xf32> to vector<16x32xf32>
    %29 = arith.mulf %27, %28 : vector<16x32xf32>
    %30 = vector.broadcast %11 : vector<1x32xf32> to vector<16x32xf32>
    %31 = arith.addf %29, %30 : vector<16x32xf32>
    %c0_16 = arith.constant 0 : index
    %c0_17 = arith.constant 0 : index
    %c0_18 = arith.constant 0 : index
    %32 = vector.load %arg3[%c0_16, %c0_17, %c0_18] : memref<2x32x96xbf16, #tpu.memory_space<vmem>>, vector<1x32x96xbf16>
    %33 = vector.shape_cast %32 : vector<1x32x96xbf16> to vector<32x96xbf16>
    %34 = vector.extract_strided_slice %4 {offsets = [0, 0], sizes = [1, 96], strides = [1, 1]} : vector<2x96xf32> to vector<1x96xf32>
    %c0_19 = arith.constant 0 : index
    %c0_20 = arith.constant 0 : index
    %c0_21 = arith.constant 0 : index
    %35 = vector.load %arg5[%c0_19, %c0_20, %c0_21] : memref<2x32x32xbf16, #tpu.memory_space<vmem>>, vector<1x32x32xbf16>
    %36 = vector.shape_cast %35 : vector<1x32x32xbf16> to vector<32x32xbf16>
    %37 = vector.extract_strided_slice %3 {offsets = [6, 0], sizes = [1, 32], strides = [1, 1]} : vector<9x32xf32> to vector<1x32xf32>
    %38 = arith.truncf %31 : vector<16x32xf32> to vector<16x32xbf16>
    %cst_22 = arith.constant dense<0.000000e+00> : vector<16x96xf32>
    %39 = tpu.matmul %38, %33, %cst_22 {dimension_numbers = #tpu.dot_dimension_numbers<[1], [0], [0], [1], [0, 0, 1, 1], [], []>} : vector<16x32xbf16>, vector<32x96xbf16>, vector<16x96xf32> -> vector<16x96xf32>
    %40 = vector.broadcast %34 : vector<1x96xf32> to vector<16x96xf32>
    %41 = arith.addf %39, %40 : vector<16x96xf32>
    %42 = vector.extract_strided_slice %9 {offsets = [0, 0], sizes = [1, 8], strides = [1, 1]} : vector<2x8xf32> to vector<1x8xf32>
    %43 = vector.extract_strided_slice %41 {offsets = [0, 0], sizes = [8, 8], strides = [1, 1]} : vector<16x96xf32> to vector<8x8xf32>
    %44 = arith.truncf %43 : vector<8x8xf32> to vector<8x8xbf16>
    %45 = vector.extract_strided_slice %41 {offsets = [0, 32], sizes = [8, 8], strides = [1, 1]} : vector<16x96xf32> to vector<8x8xf32>
    %46 = arith.truncf %45 : vector<8x8xf32> to vector<8x8xbf16>
    %47 = vector.extract_strided_slice %41 {offsets = [0, 64], sizes = [8, 8], strides = [1, 1]} : vector<16x96xf32> to vector<8x8xf32>
    %48 = arith.truncf %47 : vector<8x8xf32> to vector<8x8xbf16>
    %cst_23 = arith.constant dense<0.000000e+00> : vector<8x8xf32>
    %49 = tpu.matmul %44, %46, %cst_23 {dimension_numbers = #tpu.dot_dimension_numbers<[1], [1], [0], [0], [0, 0, 1, 0], [], []>} : vector<8x8xbf16>, vector<8x8xbf16>, vector<8x8xf32> -> vector<8x8xf32>
    %50 = vector.broadcast %42 : vector<1x8xf32> to vector<8x8xf32>
    %51 = arith.addf %49, %50 : vector<8x8xf32>
    %cst_24 = arith.constant dense<0xFF800000> : vector<8xf32>
    %52 = vector.multi_reduction <maximumf>, %51, %cst_24 [1] : vector<8x8xf32> to vector<8xf32>
    %53 = vector.shape_cast %52 : vector<8xf32> to vector<8x1xf32>
    %54 = vector.broadcast %53 : vector<8x1xf32> to vector<8x8xf32>
    %55 = arith.subf %51, %54 : vector<8x8xf32>
    %56 = math.exp %55 : vector<8x8xf32>
    %cst_25 = arith.constant dense<0.000000e+00> : vector<8xf32>
    %57 = vector.multi_reduction <add>, %56, %cst_25 [1] : vector<8x8xf32> to vector<8xf32>
    %58 = vector.shape_cast %57 : vector<8xf32> to vector<8x1xf32>
    %59 = tpu.reciprocal %58 {approx = true} : vector<8x1xf32> -> vector<8x1xf32>
    %60 = vector.broadcast %59 : vector<8x1xf32> to vector<8x8xf32>
    %61 = arith.mulf %56, %60 : vector<8x8xf32>
    %62 = arith.truncf %61 : vector<8x8xf32> to vector<8x8xbf16>
    %cst_26 = arith.constant dense<0.000000e+00> : vector<8x8xf32>
    %63 = tpu.matmul %62, %48, %cst_26 {dimension_numbers = #tpu.dot_dimension_numbers<[1], [0], [0], [1], [0, 0, 1, 1], [], []>} : vector<8x8xbf16>, vector<8x8xbf16>, vector<8x8xf32> -> vector<8x8xf32>
    %64 = vector.extract_strided_slice %41 {offsets = [0, 8], sizes = [8, 8], strides = [1, 1]} : vector<16x96xf32> to vector<8x8xf32>
    %65 = arith.truncf %64 : vector<8x8xf32> to vector<8x8xbf16>
    %66 = vector.extract_strided_slice %41 {offsets = [0, 40], sizes = [8, 8], strides = [1, 1]} : vector<16x96xf32> to vector<8x8xf32>
    %67 = arith.truncf %66 : vector<8x8xf32> to vector<8x8xbf16>
    %68 = vector.extract_strided_slice %41 {offsets = [0, 72], sizes = [8, 8], strides = [1, 1]} : vector<16x96xf32> to vector<8x8xf32>
    %69 = arith.truncf %68 : vector<8x8xf32> to vector<8x8xbf16>
    %cst_27 = arith.constant dense<0.000000e+00> : vector<8x8xf32>
    %70 = tpu.matmul %65, %67, %cst_27 {dimension_numbers = #tpu.dot_dimension_numbers<[1], [1], [0], [0], [0, 0, 1, 0], [], []>} : vector<8x8xbf16>, vector<8x8xbf16>, vector<8x8xf32> -> vector<8x8xf32>
    %71 = vector.broadcast %42 : vector<1x8xf32> to vector<8x8xf32>
    %72 = arith.addf %70, %71 : vector<8x8xf32>
    %cst_28 = arith.constant dense<0xFF800000> : vector<8xf32>
    %73 = vector.multi_reduction <maximumf>, %72, %cst_28 [1] : vector<8x8xf32> to vector<8xf32>
    %74 = vector.shape_cast %73 : vector<8xf32> to vector<8x1xf32>
    %75 = vector.broadcast %74 : vector<8x1xf32> to vector<8x8xf32>
    %76 = arith.subf %72, %75 : vector<8x8xf32>
    %77 = math.exp %76 : vector<8x8xf32>
    %cst_29 = arith.constant dense<0.000000e+00> : vector<8xf32>
    %78 = vector.multi_reduction <add>, %77, %cst_29 [1] : vector<8x8xf32> to vector<8xf32>
    %79 = vector.shape_cast %78 : vector<8xf32> to vector<8x1xf32>
    %80 = tpu.reciprocal %79 {approx = true} : vector<8x1xf32> -> vector<8x1xf32>
    %81 = vector.broadcast %80 : vector<8x1xf32> to vector<8x8xf32>
    %82 = arith.mulf %77, %81 : vector<8x8xf32>
    %83 = arith.truncf %82 : vector<8x8xf32> to vector<8x8xbf16>
    %cst_30 = arith.constant dense<0.000000e+00> : vector<8x8xf32>
    %84 = tpu.matmul %83, %69, %cst_30 {dimension_numbers = #tpu.dot_dimension_numbers<[1], [0], [0], [1], [0, 0, 1, 1], [], []>} : vector<8x8xbf16>, vector<8x8xbf16>, vector<8x8xf32> -> vector<8x8xf32>
    %85 = vector.extract_strided_slice %41 {offsets = [0, 16], sizes = [8, 8], strides = [1, 1]} : vector<16x96xf32> to vector<8x8xf32>
    %86 = arith.truncf %85 : vector<8x8xf32> to vector<8x8xbf16>
    %87 = vector.extract_strided_slice %41 {offsets = [0, 48], sizes = [8, 8], strides = [1, 1]} : vector<16x96xf32> to vector<8x8xf32>
    %88 = arith.truncf %87 : vector<8x8xf32> to vector<8x8xbf16>
    %89 = vector.extract_strided_slice %41 {offsets = [0, 80], sizes = [8, 8], strides = [1, 1]} : vector<16x96xf32> to vector<8x8xf32>
    %90 = arith.truncf %89 : vector<8x8xf32> to vector<8x8xbf16>
    %cst_31 = arith.constant dense<0.000000e+00> : vector<8x8xf32>
    %91 = tpu.matmul %86, %88, %cst_31 {dimension_numbers = #tpu.dot_dimension_numbers<[1], [1], [0], [0], [0, 0, 1, 0], [], []>} : vector<8x8xbf16>, vector<8x8xbf16>, vector<8x8xf32> -> vector<8x8xf32>
    %92 = vector.broadcast %42 : vector<1x8xf32> to vector<8x8xf32>
    %93 = arith.addf %91, %92 : vector<8x8xf32>
    %cst_32 = arith.constant dense<0xFF800000> : vector<8xf32>
    %94 = vector.multi_reduction <maximumf>, %93, %cst_32 [1] : vector<8x8xf32> to vector<8xf32>
    %95 = vector.shape_cast %94 : vector<8xf32> to vector<8x1xf32>
    %96 = vector.broadcast %95 : vector<8x1xf32> to vector<8x8xf32>
    %97 = arith.subf %93, %96 : vector<8x8xf32>
    %98 = math.exp %97 : vector<8x8xf32>
    %cst_33 = arith.constant dense<0.000000e+00> : vector<8xf32>
    %99 = vector.multi_reduction <add>, %98, %cst_33 [1] : vector<8x8xf32> to vector<8xf32>
    %100 = vector.shape_cast %99 : vector<8xf32> to vector<8x1xf32>
    %101 = tpu.reciprocal %100 {approx = true} : vector<8x1xf32> -> vector<8x1xf32>
    %102 = vector.broadcast %101 : vector<8x1xf32> to vector<8x8xf32>
    %103 = arith.mulf %98, %102 : vector<8x8xf32>
    %104 = arith.truncf %103 : vector<8x8xf32> to vector<8x8xbf16>
    %cst_34 = arith.constant dense<0.000000e+00> : vector<8x8xf32>
    %105 = tpu.matmul %104, %90, %cst_34 {dimension_numbers = #tpu.dot_dimension_numbers<[1], [0], [0], [1], [0, 0, 1, 1], [], []>} : vector<8x8xbf16>, vector<8x8xbf16>, vector<8x8xf32> -> vector<8x8xf32>
    %106 = vector.extract_strided_slice %41 {offsets = [0, 24], sizes = [8, 8], strides = [1, 1]} : vector<16x96xf32> to vector<8x8xf32>
    %107 = arith.truncf %106 : vector<8x8xf32> to vector<8x8xbf16>
    %108 = vector.extract_strided_slice %41 {offsets = [0, 56], sizes = [8, 8], strides = [1, 1]} : vector<16x96xf32> to vector<8x8xf32>
    %109 = arith.truncf %108 : vector<8x8xf32> to vector<8x8xbf16>
    %110 = vector.extract_strided_slice %41 {offsets = [0, 88], sizes = [8, 8], strides = [1, 1]} : vector<16x96xf32> to vector<8x8xf32>
    %111 = arith.truncf %110 : vector<8x8xf32> to vector<8x8xbf16>
    %cst_35 = arith.constant dense<0.000000e+00> : vector<8x8xf32>
    %112 = tpu.matmul %107, %109, %cst_35 {dimension_numbers = #tpu.dot_dimension_numbers<[1], [1], [0], [0], [0, 0, 1, 0], [], []>} : vector<8x8xbf16>, vector<8x8xbf16>, vector<8x8xf32> -> vector<8x8xf32>
    %113 = vector.broadcast %42 : vector<1x8xf32> to vector<8x8xf32>
    %114 = arith.addf %112, %113 : vector<8x8xf32>
    %cst_36 = arith.constant dense<0xFF800000> : vector<8xf32>
    %115 = vector.multi_reduction <maximumf>, %114, %cst_36 [1] : vector<8x8xf32> to vector<8xf32>
    %116 = vector.shape_cast %115 : vector<8xf32> to vector<8x1xf32>
    %117 = vector.broadcast %116 : vector<8x1xf32> to vector<8x8xf32>
    %118 = arith.subf %114, %117 : vector<8x8xf32>
    %119 = math.exp %118 : vector<8x8xf32>
    %cst_37 = arith.constant dense<0.000000e+00> : vector<8xf32>
    %120 = vector.multi_reduction <add>, %119, %cst_37 [1] : vector<8x8xf32> to vector<8xf32>
    %121 = vector.shape_cast %120 : vector<8xf32> to vector<8x1xf32>
    %122 = tpu.reciprocal %121 {approx = true} : vector<8x1xf32> -> vector<8x1xf32>
    %123 = vector.broadcast %122 : vector<8x1xf32> to vector<8x8xf32>
    %124 = arith.mulf %119, %123 : vector<8x8xf32>
    %125 = arith.truncf %124 : vector<8x8xf32> to vector<8x8xbf16>
    %cst_38 = arith.constant dense<0.000000e+00> : vector<8x8xf32>
    %126 = tpu.matmul %125, %111, %cst_38 {dimension_numbers = #tpu.dot_dimension_numbers<[1], [0], [0], [1], [0, 0, 1, 1], [], []>} : vector<8x8xbf16>, vector<8x8xbf16>, vector<8x8xf32> -> vector<8x8xf32>
    %127 = tpu.concatenate %63, %84, %105, %126 in 1 : vector<8x8xf32>, vector<8x8xf32>, vector<8x8xf32>, vector<8x8xf32> -> vector<8x32xf32>
    %128 = vector.extract_strided_slice %9 {offsets = [1, 0], sizes = [1, 8], strides = [1, 1]} : vector<2x8xf32> to vector<1x8xf32>
    %129 = vector.extract_strided_slice %41 {offsets = [8, 0], sizes = [8, 8], strides = [1, 1]} : vector<16x96xf32> to vector<8x8xf32>
    %130 = arith.truncf %129 : vector<8x8xf32> to vector<8x8xbf16>
    %131 = vector.extract_strided_slice %41 {offsets = [8, 32], sizes = [8, 8], strides = [1, 1]} : vector<16x96xf32> to vector<8x8xf32>
    %132 = arith.truncf %131 : vector<8x8xf32> to vector<8x8xbf16>
    %133 = vector.extract_strided_slice %41 {offsets = [8, 64], sizes = [8, 8], strides = [1, 1]} : vector<16x96xf32> to vector<8x8xf32>
    %134 = arith.truncf %133 : vector<8x8xf32> to vector<8x8xbf16>
    %cst_39 = arith.constant dense<0.000000e+00> : vector<8x8xf32>
    %135 = tpu.matmul %130, %132, %cst_39 {dimension_numbers = #tpu.dot_dimension_numbers<[1], [1], [0], [0], [0, 0, 1, 0], [], []>} : vector<8x8xbf16>, vector<8x8xbf16>, vector<8x8xf32> -> vector<8x8xf32>
    %136 = vector.broadcast %128 : vector<1x8xf32> to vector<8x8xf32>
    %137 = arith.addf %135, %136 : vector<8x8xf32>
    %cst_40 = arith.constant dense<0xFF800000> : vector<8xf32>
    %138 = vector.multi_reduction <maximumf>, %137, %cst_40 [1] : vector<8x8xf32> to vector<8xf32>
    %139 = vector.shape_cast %138 : vector<8xf32> to vector<8x1xf32>
    %140 = vector.broadcast %139 : vector<8x1xf32> to vector<8x8xf32>
    %141 = arith.subf %137, %140 : vector<8x8xf32>
    %142 = math.exp %141 : vector<8x8xf32>
    %cst_41 = arith.constant dense<0.000000e+00> : vector<8xf32>
    %143 = vector.multi_reduction <add>, %142, %cst_41 [1] : vector<8x8xf32> to vector<8xf32>
    %144 = vector.shape_cast %143 : vector<8xf32> to vector<8x1xf32>
    %145 = tpu.reciprocal %144 {approx = true} : vector<8x1xf32> -> vector<8x1xf32>
    %146 = vector.broadcast %145 : vector<8x1xf32> to vector<8x8xf32>
    %147 = arith.mulf %142, %146 : vector<8x8xf32>
    %148 = arith.truncf %147 : vector<8x8xf32> to vector<8x8xbf16>
    %cst_42 = arith.constant dense<0.000000e+00> : vector<8x8xf32>
    %149 = tpu.matmul %148, %134, %cst_42 {dimension_numbers = #tpu.dot_dimension_numbers<[1], [0], [0], [1], [0, 0, 1, 1], [], []>} : vector<8x8xbf16>, vector<8x8xbf16>, vector<8x8xf32> -> vector<8x8xf32>
    %150 = vector.extract_strided_slice %41 {offsets = [8, 8], sizes = [8, 8], strides = [1, 1]} : vector<16x96xf32> to vector<8x8xf32>
    %151 = arith.truncf %150 : vector<8x8xf32> to vector<8x8xbf16>
    %152 = vector.extract_strided_slice %41 {offsets = [8, 40], sizes = [8, 8], strides = [1, 1]} : vector<16x96xf32> to vector<8x8xf32>
    %153 = arith.truncf %152 : vector<8x8xf32> to vector<8x8xbf16>
    %154 = vector.extract_strided_slice %41 {offsets = [8, 72], sizes = [8, 8], strides = [1, 1]} : vector<16x96xf32> to vector<8x8xf32>
    %155 = arith.truncf %154 : vector<8x8xf32> to vector<8x8xbf16>
    %cst_43 = arith.constant dense<0.000000e+00> : vector<8x8xf32>
    %156 = tpu.matmul %151, %153, %cst_43 {dimension_numbers = #tpu.dot_dimension_numbers<[1], [1], [0], [0], [0, 0, 1, 0], [], []>} : vector<8x8xbf16>, vector<8x8xbf16>, vector<8x8xf32> -> vector<8x8xf32>
    %157 = vector.broadcast %128 : vector<1x8xf32> to vector<8x8xf32>
    %158 = arith.addf %156, %157 : vector<8x8xf32>
    %cst_44 = arith.constant dense<0xFF800000> : vector<8xf32>
    %159 = vector.multi_reduction <maximumf>, %158, %cst_44 [1] : vector<8x8xf32> to vector<8xf32>
    %160 = vector.shape_cast %159 : vector<8xf32> to vector<8x1xf32>
    %161 = vector.broadcast %160 : vector<8x1xf32> to vector<8x8xf32>
    %162 = arith.subf %158, %161 : vector<8x8xf32>
    %163 = math.exp %162 : vector<8x8xf32>
    %cst_45 = arith.constant dense<0.000000e+00> : vector<8xf32>
    %164 = vector.multi_reduction <add>, %163, %cst_45 [1] : vector<8x8xf32> to vector<8xf32>
    %165 = vector.shape_cast %164 : vector<8xf32> to vector<8x1xf32>
    %166 = tpu.reciprocal %165 {approx = true} : vector<8x1xf32> -> vector<8x1xf32>
    %167 = vector.broadcast %166 : vector<8x1xf32> to vector<8x8xf32>
    %168 = arith.mulf %163, %167 : vector<8x8xf32>
    %169 = arith.truncf %168 : vector<8x8xf32> to vector<8x8xbf16>
    %cst_46 = arith.constant dense<0.000000e+00> : vector<8x8xf32>
    %170 = tpu.matmul %169, %155, %cst_46 {dimension_numbers = #tpu.dot_dimension_numbers<[1], [0], [0], [1], [0, 0, 1, 1], [], []>} : vector<8x8xbf16>, vector<8x8xbf16>, vector<8x8xf32> -> vector<8x8xf32>
    %171 = vector.extract_strided_slice %41 {offsets = [8, 16], sizes = [8, 8], strides = [1, 1]} : vector<16x96xf32> to vector<8x8xf32>
    %172 = arith.truncf %171 : vector<8x8xf32> to vector<8x8xbf16>
    %173 = vector.extract_strided_slice %41 {offsets = [8, 48], sizes = [8, 8], strides = [1, 1]} : vector<16x96xf32> to vector<8x8xf32>
    %174 = arith.truncf %173 : vector<8x8xf32> to vector<8x8xbf16>
    %175 = vector.extract_strided_slice %41 {offsets = [8, 80], sizes = [8, 8], strides = [1, 1]} : vector<16x96xf32> to vector<8x8xf32>
    %176 = arith.truncf %175 : vector<8x8xf32> to vector<8x8xbf16>
    %cst_47 = arith.constant dense<0.000000e+00> : vector<8x8xf32>
    %177 = tpu.matmul %172, %174, %cst_47 {dimension_numbers = #tpu.dot_dimension_numbers<[1], [1], [0], [0], [0, 0, 1, 0], [], []>} : vector<8x8xbf16>, vector<8x8xbf16>, vector<8x8xf32> -> vector<8x8xf32>
    %178 = vector.broadcast %128 : vector<1x8xf32> to vector<8x8xf32>
    %179 = arith.addf %177, %178 : vector<8x8xf32>
    %cst_48 = arith.constant dense<0xFF800000> : vector<8xf32>
    %180 = vector.multi_reduction <maximumf>, %179, %cst_48 [1] : vector<8x8xf32> to vector<8xf32>
    %181 = vector.shape_cast %180 : vector<8xf32> to vector<8x1xf32>
    %182 = vector.broadcast %181 : vector<8x1xf32> to vector<8x8xf32>
    %183 = arith.subf %179, %182 : vector<8x8xf32>
    %184 = math.exp %183 : vector<8x8xf32>
    %cst_49 = arith.constant dense<0.000000e+00> : vector<8xf32>
    %185 = vector.multi_reduction <add>, %184, %cst_49 [1] : vector<8x8xf32> to vector<8xf32>
    %186 = vector.shape_cast %185 : vector<8xf32> to vector<8x1xf32>
    %187 = tpu.reciprocal %186 {approx = true} : vector<8x1xf32> -> vector<8x1xf32>
    %188 = vector.broadcast %187 : vector<8x1xf32> to vector<8x8xf32>
    %189 = arith.mulf %184, %188 : vector<8x8xf32>
    %190 = arith.truncf %189 : vector<8x8xf32> to vector<8x8xbf16>
    %cst_50 = arith.constant dense<0.000000e+00> : vector<8x8xf32>
    %191 = tpu.matmul %190, %176, %cst_50 {dimension_numbers = #tpu.dot_dimension_numbers<[1], [0], [0], [1], [0, 0, 1, 1], [], []>} : vector<8x8xbf16>, vector<8x8xbf16>, vector<8x8xf32> -> vector<8x8xf32>
    %192 = vector.extract_strided_slice %41 {offsets = [8, 24], sizes = [8, 8], strides = [1, 1]} : vector<16x96xf32> to vector<8x8xf32>
    %193 = arith.truncf %192 : vector<8x8xf32> to vector<8x8xbf16>
    %194 = vector.extract_strided_slice %41 {offsets = [8, 56], sizes = [8, 8], strides = [1, 1]} : vector<16x96xf32> to vector<8x8xf32>
    %195 = arith.truncf %194 : vector<8x8xf32> to vector<8x8xbf16>
    %196 = vector.extract_strided_slice %41 {offsets = [8, 88], sizes = [8, 8], strides = [1, 1]} : vector<16x96xf32> to vector<8x8xf32>
    %197 = arith.truncf %196 : vector<8x8xf32> to vector<8x8xbf16>
    %cst_51 = arith.constant dense<0.000000e+00> : vector<8x8xf32>
    %198 = tpu.matmul %193, %195, %cst_51 {dimension_numbers = #tpu.dot_dimension_numbers<[1], [1], [0], [0], [0, 0, 1, 0], [], []>} : vector<8x8xbf16>, vector<8x8xbf16>, vector<8x8xf32> -> vector<8x8xf32>
    %199 = vector.broadcast %128 : vector<1x8xf32> to vector<8x8xf32>
    %200 = arith.addf %198, %199 : vector<8x8xf32>
    %cst_52 = arith.constant dense<0xFF800000> : vector<8xf32>
    %201 = vector.multi_reduction <maximumf>, %200, %cst_52 [1] : vector<8x8xf32> to vector<8xf32>
    %202 = vector.shape_cast %201 : vector<8xf32> to vector<8x1xf32>
    %203 = vector.broadcast %202 : vector<8x1xf32> to vector<8x8xf32>
    %204 = arith.subf %200, %203 : vector<8x8xf32>
    %205 = math.exp %204 : vector<8x8xf32>
    %cst_53 = arith.constant dense<0.000000e+00> : vector<8xf32>
    %206 = vector.multi_reduction <add>, %205, %cst_53 [1] : vector<8x8xf32> to vector<8xf32>
    %207 = vector.shape_cast %206 : vector<8xf32> to vector<8x1xf32>
    %208 = tpu.reciprocal %207 {approx = true} : vector<8x1xf32> -> vector<8x1xf32>
    %209 = vector.broadcast %208 : vector<8x1xf32> to vector<8x8xf32>
    %210 = arith.mulf %205, %209 : vector<8x8xf32>
    %211 = arith.truncf %210 : vector<8x8xf32> to vector<8x8xbf16>
    %cst_54 = arith.constant dense<0.000000e+00> : vector<8x8xf32>
    %212 = tpu.matmul %211, %197, %cst_54 {dimension_numbers = #tpu.dot_dimension_numbers<[1], [0], [0], [1], [0, 0, 1, 1], [], []>} : vector<8x8xbf16>, vector<8x8xbf16>, vector<8x8xf32> -> vector<8x8xf32>
    %213 = tpu.concatenate %149, %170, %191, %212 in 1 : vector<8x8xf32>, vector<8x8xf32>, vector<8x8xf32>, vector<8x8xf32> -> vector<8x32xf32>
    %214 = tpu.concatenate %127, %213 in 0 : vector<8x32xf32>, vector<8x32xf32> -> vector<16x32xf32>
    %215 = arith.truncf %214 : vector<16x32xf32> to vector<16x32xbf16>
    %cst_55 = arith.constant dense<0.000000e+00> : vector<16x32xf32>
    %216 = tpu.matmul %215, %36, %cst_55 {dimension_numbers = #tpu.dot_dimension_numbers<[1], [0], [0], [1], [0, 0, 1, 1], [], []>} : vector<16x32xbf16>, vector<32x32xbf16>, vector<16x32xf32> -> vector<16x32xf32>
    %217 = vector.broadcast %37 : vector<1x32xf32> to vector<16x32xf32>
    %218 = arith.addf %216, %217 : vector<16x32xf32>
    %219 = arith.addf %31, %218 : vector<16x32xf32>
    %220 = vector.extract_strided_slice %3 {offsets = [2, 0], sizes = [1, 32], strides = [1, 1]} : vector<9x32xf32> to vector<1x32xf32>
    %221 = vector.extract_strided_slice %3 {offsets = [3, 0], sizes = [1, 32], strides = [1, 1]} : vector<9x32xf32> to vector<1x32xf32>
    %cst_56 = arith.constant dense<0.000000e+00> : vector<16xf32>
    %222 = vector.multi_reduction <add>, %219, %cst_56 [1] : vector<16x32xf32> to vector<16xf32>
    %223 = vector.shape_cast %222 : vector<16xf32> to vector<16x1xf32>
    %cst_57 = arith.constant 3.200000e+01 : f32
    %224 = vector.broadcast %cst_57 : f32 to vector<16x1xf32>
    %225 = arith.divf %223, %224 : vector<16x1xf32>
    %226 = vector.broadcast %225 : vector<16x1xf32> to vector<16x32xf32>
    %227 = arith.subf %219, %226 : vector<16x32xf32>
    %228 = arith.mulf %227, %227 : vector<16x32xf32>
    %cst_58 = arith.constant dense<0.000000e+00> : vector<16xf32>
    %229 = vector.multi_reduction <add>, %228, %cst_58 [1] : vector<16x32xf32> to vector<16xf32>
    %230 = vector.shape_cast %229 : vector<16xf32> to vector<16x1xf32>
    %cst_59 = arith.constant 3.200000e+01 : f32
    %231 = vector.broadcast %cst_59 : f32 to vector<16x1xf32>
    %232 = arith.divf %230, %231 : vector<16x1xf32>
    %cst_60 = arith.constant 9.99999996E-13 : f32
    %233 = vector.broadcast %cst_60 : f32 to vector<16x1xf32>
    %234 = arith.addf %232, %233 : vector<16x1xf32>
    %235 = math.rsqrt %234 : vector<16x1xf32>
    %236 = vector.broadcast %235 : vector<16x1xf32> to vector<16x32xf32>
    %237 = arith.mulf %227, %236 : vector<16x32xf32>
    %238 = vector.broadcast %220 : vector<1x32xf32> to vector<16x32xf32>
    %239 = arith.mulf %237, %238 : vector<16x32xf32>
    %240 = vector.broadcast %221 : vector<1x32xf32> to vector<16x32xf32>
    %241 = arith.addf %239, %240 : vector<16x32xf32>
    %242 = arith.truncf %241 : vector<16x32xf32> to vector<16x32xbf16>
    %c0_61 = arith.constant 0 : index
    %c0_62 = arith.constant 0 : index
    %243 = vector.load %arg6[%c0_61, %c0_62] : memref<32x64xbf16, #tpu.memory_space<vmem>>, vector<32x64xbf16>
    %cst_63 = arith.constant dense<0.000000e+00> : vector<16x64xf32>
    %244 = tpu.matmul %242, %243, %cst_63 {dimension_numbers = #tpu.dot_dimension_numbers<[1], [0], [0], [1], [0, 0, 1, 1], [], []>} : vector<16x32xbf16>, vector<32x64xbf16>, vector<16x64xf32> -> vector<16x64xf32>
    %c0_64 = arith.constant 0 : index
    %c0_65 = arith.constant 0 : index
    %245 = vector.load %arg7[%c0_64, %c0_65] : memref<1x64xf32, #tpu.memory_space<vmem>>, vector<1x64xf32>
    %246 = vector.broadcast %245 : vector<1x64xf32> to vector<16x64xf32>
    %247 = arith.addf %244, %246 : vector<16x64xf32>
    %248 = arith.mulf %247, %247 : vector<16x64xf32>
    %249 = arith.mulf %247, %248 : vector<16x64xf32>
    %cst_66 = arith.constant 4.471500e-02 : f32
    %250 = vector.broadcast %cst_66 : f32 to vector<16x64xf32>
    %251 = arith.mulf %250, %249 : vector<16x64xf32>
    %252 = arith.addf %247, %251 : vector<16x64xf32>
    %cst_67 = arith.constant 0.797884583 : f32
    %253 = vector.broadcast %cst_67 : f32 to vector<16x64xf32>
    %254 = arith.mulf %253, %252 : vector<16x64xf32>
    %255 = math.tanh %254 : vector<16x64xf32>
    %cst_68 = arith.constant 1.000000e+00 : f32
    %256 = vector.broadcast %cst_68 : f32 to vector<16x64xf32>
    %257 = arith.addf %256, %255 : vector<16x64xf32>
    %cst_69 = arith.constant 5.000000e-01 : f32
    %258 = vector.broadcast %cst_69 : f32 to vector<16x64xf32>
    %259 = arith.mulf %258, %257 : vector<16x64xf32>
    %260 = arith.mulf %247, %259 : vector<16x64xf32>
    %261 = arith.truncf %260 : vector<16x64xf32> to vector<16x64xbf16>
    %c0_70 = arith.constant 0 : index
    %c0_71 = arith.constant 0 : index
    %262 = vector.load %arg8[%c0_70, %c0_71] : memref<64x32xbf16, #tpu.memory_space<vmem>>, vector<64x32xbf16>
    %cst_72 = arith.constant dense<0.000000e+00> : vector<16x32xf32>
    %263 = tpu.matmul %261, %262, %cst_72 {dimension_numbers = #tpu.dot_dimension_numbers<[1], [0], [0], [1], [0, 0, 1, 1], [], []>} : vector<16x64xbf16>, vector<64x32xbf16>, vector<16x32xf32> -> vector<16x32xf32>
    %264 = vector.extract_strided_slice %3 {offsets = [7, 0], sizes = [1, 32], strides = [1, 1]} : vector<9x32xf32> to vector<1x32xf32>
    %265 = vector.broadcast %264 : vector<1x32xf32> to vector<16x32xf32>
    %266 = arith.addf %263, %265 : vector<16x32xf32>
    %267 = arith.addf %241, %266 : vector<16x32xf32>
    %268 = vector.extract_strided_slice %3 {offsets = [4, 0], sizes = [1, 32], strides = [1, 1]} : vector<9x32xf32> to vector<1x32xf32>
    %269 = vector.extract_strided_slice %3 {offsets = [5, 0], sizes = [1, 32], strides = [1, 1]} : vector<9x32xf32> to vector<1x32xf32>
    %cst_73 = arith.constant dense<0.000000e+00> : vector<16xf32>
    %270 = vector.multi_reduction <add>, %267, %cst_73 [1] : vector<16x32xf32> to vector<16xf32>
    %271 = vector.shape_cast %270 : vector<16xf32> to vector<16x1xf32>
    %cst_74 = arith.constant 3.200000e+01 : f32
    %272 = vector.broadcast %cst_74 : f32 to vector<16x1xf32>
    %273 = arith.divf %271, %272 : vector<16x1xf32>
    %274 = vector.broadcast %273 : vector<16x1xf32> to vector<16x32xf32>
    %275 = arith.subf %267, %274 : vector<16x32xf32>
    %276 = arith.mulf %275, %275 : vector<16x32xf32>
    %cst_75 = arith.constant dense<0.000000e+00> : vector<16xf32>
    %277 = vector.multi_reduction <add>, %276, %cst_75 [1] : vector<16x32xf32> to vector<16xf32>
    %278 = vector.shape_cast %277 : vector<16xf32> to vector<16x1xf32>
    %cst_76 = arith.constant 3.200000e+01 : f32
    %279 = vector.broadcast %cst_76 : f32 to vector<16x1xf32>
    %280 = arith.divf %278, %279 : vector<16x1xf32>
    %cst_77 = arith.constant 9.99999996E-13 : f32
    %281 = vector.broadcast %cst_77 : f32 to vector<16x1xf32>
    %282 = arith.addf %280, %281 : vector<16x1xf32>
    %283 = math.rsqrt %282 : vector<16x1xf32>
    %284 = vector.broadcast %283 : vector<16x1xf32> to vector<16x32xf32>
    %285 = arith.mulf %275, %284 : vector<16x32xf32>
    %286 = vector.broadcast %268 : vector<1x32xf32> to vector<16x32xf32>
    %287 = arith.mulf %285, %286 : vector<16x32xf32>
    %288 = vector.broadcast %269 : vector<1x32xf32> to vector<16x32xf32>
    %289 = arith.addf %287, %288 : vector<16x32xf32>
    %290 = tpu.iota {dimensions = array<i32: 0>} : vector<8x1xi32>
    %291 = tpu.iota {dimensions = array<i32: 0>} : vector<8x8xi32>
    %292 = vector.extract_strided_slice %289 {offsets = [0, 0], sizes = [8, 32], strides = [1, 1]} : vector<16x32xf32> to vector<8x32xf32>
    %293 = vector.extract_strided_slice %2 {offsets = [0, 0], sizes = [1, 8], strides = [1, 1]} : vector<2x8xi32> to vector<1x8xi32>
    %294 = vector.shape_cast %293 : vector<1x8xi32> to vector<1x1x8xi32>
    %cst_78 = arith.constant dense<-2147483648> : vector<1xi32>
    %295 = vector.multi_reduction <maxsi>, %294, %cst_78 [1, 2] : vector<1x1x8xi32> to vector<1xi32>
    %296 = vector.shape_cast %295 : vector<1xi32> to vector<1x1x1xi32>
    %297 = vector.extract %296[0, 0, 0] : i32 from vector<1x1x1xi32>
    %c1_i32 = arith.constant 1 : i32
    %298 = arith.addi %297, %c1_i32 : i32
    %299 = vector.shape_cast %293 : vector<1x8xi32> to vector<1x8xi32>
    %300 = vector.broadcast %299 : vector<1x8xi32> to vector<8x8xi32>
    %301 = arith.cmpi eq, %300, %291 : vector<8x8xi32>
    %302 = arith.extui %301 : vector<8x8xi1> to vector<8x8xi32>
    %303 = arith.sitofp %302 : vector<8x8xi32> to vector<8x8xf32>
    %cst_79 = arith.constant dense<0.000000e+00> : vector<8xf32>
    %304 = vector.multi_reduction <add>, %303, %cst_79 [1] : vector<8x8xf32> to vector<8xf32>
    %305 = vector.shape_cast %304 : vector<8xf32> to vector<8x1xf32>
    %cst_80 = arith.constant dense<0.000000e+00> : vector<8x32xf32>
    %306 = tpu.matmul %303, %292, %cst_80 {dimension_numbers = #tpu.dot_dimension_numbers<[1], [0], [0], [1], [0, 0, 1, 1], [], []>} : vector<8x8xf32>, vector<8x32xf32>, vector<8x32xf32> -> vector<8x32xf32>
    %cst_81 = arith.constant 1.000000e+00 : f32
    %307 = vector.broadcast %cst_81 : f32 to vector<8x1xf32>
    %308 = arith.maximumf %305, %307 : vector<8x1xf32>
    %309 = vector.broadcast %308 : vector<8x1xf32> to vector<8x32xf32>
    %310 = arith.divf %306, %309 : vector<8x32xf32>
    %311 = vector.broadcast %298 : i32 to vector<8x1xi32>
    %312 = arith.cmpi slt, %290, %311 : vector<8x1xi32>
    %313 = vector.shape_cast %312 : vector<8x1xi1> to vector<8x1xi1>
    %314 = vector.broadcast %313 : vector<8x1xi1> to vector<8x32xi1>
    %315 = arith.select %314, %310, %292 : vector<8x32xi1>, vector<8x32xf32>
    %316 = vector.extract_strided_slice %289 {offsets = [8, 0], sizes = [8, 32], strides = [1, 1]} : vector<16x32xf32> to vector<8x32xf32>
    %317 = vector.extract_strided_slice %2 {offsets = [1, 0], sizes = [1, 8], strides = [1, 1]} : vector<2x8xi32> to vector<1x8xi32>
    %318 = vector.shape_cast %317 : vector<1x8xi32> to vector<1x1x8xi32>
    %cst_82 = arith.constant dense<-2147483648> : vector<1xi32>
    %319 = vector.multi_reduction <maxsi>, %318, %cst_82 [1, 2] : vector<1x1x8xi32> to vector<1xi32>
    %320 = vector.shape_cast %319 : vector<1xi32> to vector<1x1x1xi32>
    %321 = vector.extract %320[0, 0, 0] : i32 from vector<1x1x1xi32>
    %c1_i32_83 = arith.constant 1 : i32
    %322 = arith.addi %321, %c1_i32_83 : i32
    %323 = vector.shape_cast %317 : vector<1x8xi32> to vector<1x8xi32>
    %324 = vector.broadcast %323 : vector<1x8xi32> to vector<8x8xi32>
    %325 = arith.cmpi eq, %324, %291 : vector<8x8xi32>
    %326 = arith.extui %325 : vector<8x8xi1> to vector<8x8xi32>
    %327 = arith.sitofp %326 : vector<8x8xi32> to vector<8x8xf32>
    %cst_84 = arith.constant dense<0.000000e+00> : vector<8xf32>
    %328 = vector.multi_reduction <add>, %327, %cst_84 [1] : vector<8x8xf32> to vector<8xf32>
    %329 = vector.shape_cast %328 : vector<8xf32> to vector<8x1xf32>
    %cst_85 = arith.constant dense<0.000000e+00> : vector<8x32xf32>
    %330 = tpu.matmul %327, %316, %cst_85 {dimension_numbers = #tpu.dot_dimension_numbers<[1], [0], [0], [1], [0, 0, 1, 1], [], []>} : vector<8x8xf32>, vector<8x32xf32>, vector<8x32xf32> -> vector<8x32xf32>
    %cst_86 = arith.constant 1.000000e+00 : f32
    %331 = vector.broadcast %cst_86 : f32 to vector<8x1xf32>
    %332 = arith.maximumf %329, %331 : vector<8x1xf32>
    %333 = vector.broadcast %332 : vector<8x1xf32> to vector<8x32xf32>
    %334 = arith.divf %330, %333 : vector<8x32xf32>
    %335 = vector.broadcast %322 : i32 to vector<8x1xi32>
    %336 = arith.cmpi slt, %290, %335 : vector<8x1xi32>
    %337 = vector.shape_cast %336 : vector<8x1xi1> to vector<8x1xi1>
    %338 = vector.broadcast %337 : vector<8x1xi1> to vector<8x32xi1>
    %339 = arith.select %338, %334, %316 : vector<8x32xi1>, vector<8x32xf32>
    %340 = tpu.concatenate %315, %339 in 0 : vector<8x32xf32>, vector<8x32xf32> -> vector<16x32xf32>
    %c1 = arith.constant 1 : index
    %c0_87 = arith.constant 0 : index
    %c0_88 = arith.constant 0 : index
    %341 = vector.load %arg3[%c1, %c0_87, %c0_88] : memref<2x32x96xbf16, #tpu.memory_space<vmem>>, vector<1x32x96xbf16>
    %342 = vector.shape_cast %341 : vector<1x32x96xbf16> to vector<32x96xbf16>
    %343 = vector.extract_strided_slice %4 {offsets = [1, 0], sizes = [1, 96], strides = [1, 1]} : vector<2x96xf32> to vector<1x96xf32>
    %c1_89 = arith.constant 1 : index
    %c0_90 = arith.constant 0 : index
    %c0_91 = arith.constant 0 : index
    %344 = vector.load %arg5[%c1_89, %c0_90, %c0_91] : memref<2x32x32xbf16, #tpu.memory_space<vmem>>, vector<1x32x32xbf16>
    %345 = vector.shape_cast %344 : vector<1x32x32xbf16> to vector<32x32xbf16>
    %346 = vector.extract_strided_slice %3 {offsets = [8, 0], sizes = [1, 32], strides = [1, 1]} : vector<9x32xf32> to vector<1x32xf32>
    %347 = arith.truncf %340 : vector<16x32xf32> to vector<16x32xbf16>
    %cst_92 = arith.constant dense<0.000000e+00> : vector<16x96xf32>
    %348 = tpu.matmul %347, %342, %cst_92 {dimension_numbers = #tpu.dot_dimension_numbers<[1], [0], [0], [1], [0, 0, 1, 1], [], []>} : vector<16x32xbf16>, vector<32x96xbf16>, vector<16x96xf32> -> vector<16x96xf32>
    %349 = vector.broadcast %343 : vector<1x96xf32> to vector<16x96xf32>
    %350 = arith.addf %348, %349 : vector<16x96xf32>
    %351 = vector.extract_strided_slice %9 {offsets = [0, 0], sizes = [1, 8], strides = [1, 1]} : vector<2x8xf32> to vector<1x8xf32>
    %352 = vector.extract_strided_slice %350 {offsets = [0, 0], sizes = [8, 8], strides = [1, 1]} : vector<16x96xf32> to vector<8x8xf32>
    %353 = arith.truncf %352 : vector<8x8xf32> to vector<8x8xbf16>
    %354 = vector.extract_strided_slice %350 {offsets = [0, 32], sizes = [8, 8], strides = [1, 1]} : vector<16x96xf32> to vector<8x8xf32>
    %355 = arith.truncf %354 : vector<8x8xf32> to vector<8x8xbf16>
    %356 = vector.extract_strided_slice %350 {offsets = [0, 64], sizes = [8, 8], strides = [1, 1]} : vector<16x96xf32> to vector<8x8xf32>
    %357 = arith.truncf %356 : vector<8x8xf32> to vector<8x8xbf16>
    %cst_93 = arith.constant dense<0.000000e+00> : vector<8x8xf32>
    %358 = tpu.matmul %353, %355, %cst_93 {dimension_numbers = #tpu.dot_dimension_numbers<[1], [1], [0], [0], [0, 0, 1, 0], [], []>} : vector<8x8xbf16>, vector<8x8xbf16>, vector<8x8xf32> -> vector<8x8xf32>
    %359 = vector.broadcast %351 : vector<1x8xf32> to vector<8x8xf32>
    %360 = arith.addf %358, %359 : vector<8x8xf32>
    %cst_94 = arith.constant dense<0xFF800000> : vector<8xf32>
    %361 = vector.multi_reduction <maximumf>, %360, %cst_94 [1] : vector<8x8xf32> to vector<8xf32>
    %362 = vector.shape_cast %361 : vector<8xf32> to vector<8x1xf32>
    %363 = vector.broadcast %362 : vector<8x1xf32> to vector<8x8xf32>
    %364 = arith.subf %360, %363 : vector<8x8xf32>
    %365 = math.exp %364 : vector<8x8xf32>
    %cst_95 = arith.constant dense<0.000000e+00> : vector<8xf32>
    %366 = vector.multi_reduction <add>, %365, %cst_95 [1] : vector<8x8xf32> to vector<8xf32>
    %367 = vector.shape_cast %366 : vector<8xf32> to vector<8x1xf32>
    %368 = tpu.reciprocal %367 {approx = true} : vector<8x1xf32> -> vector<8x1xf32>
    %369 = vector.broadcast %368 : vector<8x1xf32> to vector<8x8xf32>
    %370 = arith.mulf %365, %369 : vector<8x8xf32>
    %371 = arith.truncf %370 : vector<8x8xf32> to vector<8x8xbf16>
    %cst_96 = arith.constant dense<0.000000e+00> : vector<8x8xf32>
    %372 = tpu.matmul %371, %357, %cst_96 {dimension_numbers = #tpu.dot_dimension_numbers<[1], [0], [0], [1], [0, 0, 1, 1], [], []>} : vector<8x8xbf16>, vector<8x8xbf16>, vector<8x8xf32> -> vector<8x8xf32>
    %373 = vector.extract_strided_slice %350 {offsets = [0, 8], sizes = [8, 8], strides = [1, 1]} : vector<16x96xf32> to vector<8x8xf32>
    %374 = arith.truncf %373 : vector<8x8xf32> to vector<8x8xbf16>
    %375 = vector.extract_strided_slice %350 {offsets = [0, 40], sizes = [8, 8], strides = [1, 1]} : vector<16x96xf32> to vector<8x8xf32>
    %376 = arith.truncf %375 : vector<8x8xf32> to vector<8x8xbf16>
    %377 = vector.extract_strided_slice %350 {offsets = [0, 72], sizes = [8, 8], strides = [1, 1]} : vector<16x96xf32> to vector<8x8xf32>
    %378 = arith.truncf %377 : vector<8x8xf32> to vector<8x8xbf16>
    %cst_97 = arith.constant dense<0.000000e+00> : vector<8x8xf32>
    %379 = tpu.matmul %374, %376, %cst_97 {dimension_numbers = #tpu.dot_dimension_numbers<[1], [1], [0], [0], [0, 0, 1, 0], [], []>} : vector<8x8xbf16>, vector<8x8xbf16>, vector<8x8xf32> -> vector<8x8xf32>
    %380 = vector.broadcast %351 : vector<1x8xf32> to vector<8x8xf32>
    %381 = arith.addf %379, %380 : vector<8x8xf32>
    %cst_98 = arith.constant dense<0xFF800000> : vector<8xf32>
    %382 = vector.multi_reduction <maximumf>, %381, %cst_98 [1] : vector<8x8xf32> to vector<8xf32>
    %383 = vector.shape_cast %382 : vector<8xf32> to vector<8x1xf32>
    %384 = vector.broadcast %383 : vector<8x1xf32> to vector<8x8xf32>
    %385 = arith.subf %381, %384 : vector<8x8xf32>
    %386 = math.exp %385 : vector<8x8xf32>
    %cst_99 = arith.constant dense<0.000000e+00> : vector<8xf32>
    %387 = vector.multi_reduction <add>, %386, %cst_99 [1] : vector<8x8xf32> to vector<8xf32>
    %388 = vector.shape_cast %387 : vector<8xf32> to vector<8x1xf32>
    %389 = tpu.reciprocal %388 {approx = true} : vector<8x1xf32> -> vector<8x1xf32>
    %390 = vector.broadcast %389 : vector<8x1xf32> to vector<8x8xf32>
    %391 = arith.mulf %386, %390 : vector<8x8xf32>
    %392 = arith.truncf %391 : vector<8x8xf32> to vector<8x8xbf16>
    %cst_100 = arith.constant dense<0.000000e+00> : vector<8x8xf32>
    %393 = tpu.matmul %392, %378, %cst_100 {dimension_numbers = #tpu.dot_dimension_numbers<[1], [0], [0], [1], [0, 0, 1, 1], [], []>} : vector<8x8xbf16>, vector<8x8xbf16>, vector<8x8xf32> -> vector<8x8xf32>
    %394 = vector.extract_strided_slice %350 {offsets = [0, 16], sizes = [8, 8], strides = [1, 1]} : vector<16x96xf32> to vector<8x8xf32>
    %395 = arith.truncf %394 : vector<8x8xf32> to vector<8x8xbf16>
    %396 = vector.extract_strided_slice %350 {offsets = [0, 48], sizes = [8, 8], strides = [1, 1]} : vector<16x96xf32> to vector<8x8xf32>
    %397 = arith.truncf %396 : vector<8x8xf32> to vector<8x8xbf16>
    %398 = vector.extract_strided_slice %350 {offsets = [0, 80], sizes = [8, 8], strides = [1, 1]} : vector<16x96xf32> to vector<8x8xf32>
    %399 = arith.truncf %398 : vector<8x8xf32> to vector<8x8xbf16>
    %cst_101 = arith.constant dense<0.000000e+00> : vector<8x8xf32>
    %400 = tpu.matmul %395, %397, %cst_101 {dimension_numbers = #tpu.dot_dimension_numbers<[1], [1], [0], [0], [0, 0, 1, 0], [], []>} : vector<8x8xbf16>, vector<8x8xbf16>, vector<8x8xf32> -> vector<8x8xf32>
    %401 = vector.broadcast %351 : vector<1x8xf32> to vector<8x8xf32>
    %402 = arith.addf %400, %401 : vector<8x8xf32>
    %cst_102 = arith.constant dense<0xFF800000> : vector<8xf32>
    %403 = vector.multi_reduction <maximumf>, %402, %cst_102 [1] : vector<8x8xf32> to vector<8xf32>
    %404 = vector.shape_cast %403 : vector<8xf32> to vector<8x1xf32>
    %405 = vector.broadcast %404 : vector<8x1xf32> to vector<8x8xf32>
    %406 = arith.subf %402, %405 : vector<8x8xf32>
    %407 = math.exp %406 : vector<8x8xf32>
    %cst_103 = arith.constant dense<0.000000e+00> : vector<8xf32>
    %408 = vector.multi_reduction <add>, %407, %cst_103 [1] : vector<8x8xf32> to vector<8xf32>
    %409 = vector.shape_cast %408 : vector<8xf32> to vector<8x1xf32>
    %410 = tpu.reciprocal %409 {approx = true} : vector<8x1xf32> -> vector<8x1xf32>
    %411 = vector.broadcast %410 : vector<8x1xf32> to vector<8x8xf32>
    %412 = arith.mulf %407, %411 : vector<8x8xf32>
    %413 = arith.truncf %412 : vector<8x8xf32> to vector<8x8xbf16>
    %cst_104 = arith.constant dense<0.000000e+00> : vector<8x8xf32>
    %414 = tpu.matmul %413, %399, %cst_104 {dimension_numbers = #tpu.dot_dimension_numbers<[1], [0], [0], [1], [0, 0, 1, 1], [], []>} : vector<8x8xbf16>, vector<8x8xbf16>, vector<8x8xf32> -> vector<8x8xf32>
    %415 = vector.extract_strided_slice %350 {offsets = [0, 24], sizes = [8, 8], strides = [1, 1]} : vector<16x96xf32> to vector<8x8xf32>
    %416 = arith.truncf %415 : vector<8x8xf32> to vector<8x8xbf16>
    %417 = vector.extract_strided_slice %350 {offsets = [0, 56], sizes = [8, 8], strides = [1, 1]} : vector<16x96xf32> to vector<8x8xf32>
    %418 = arith.truncf %417 : vector<8x8xf32> to vector<8x8xbf16>
    %419 = vector.extract_strided_slice %350 {offsets = [0, 88], sizes = [8, 8], strides = [1, 1]} : vector<16x96xf32> to vector<8x8xf32>
    %420 = arith.truncf %419 : vector<8x8xf32> to vector<8x8xbf16>
    %cst_105 = arith.constant dense<0.000000e+00> : vector<8x8xf32>
    %421 = tpu.matmul %416, %418, %cst_105 {dimension_numbers = #tpu.dot_dimension_numbers<[1], [1], [0], [0], [0, 0, 1, 0], [], []>} : vector<8x8xbf16>, vector<8x8xbf16>, vector<8x8xf32> -> vector<8x8xf32>
    %422 = vector.broadcast %351 : vector<1x8xf32> to vector<8x8xf32>
    %423 = arith.addf %421, %422 : vector<8x8xf32>
    %cst_106 = arith.constant dense<0xFF800000> : vector<8xf32>
    %424 = vector.multi_reduction <maximumf>, %423, %cst_106 [1] : vector<8x8xf32> to vector<8xf32>
    %425 = vector.shape_cast %424 : vector<8xf32> to vector<8x1xf32>
    %426 = vector.broadcast %425 : vector<8x1xf32> to vector<8x8xf32>
    %427 = arith.subf %423, %426 : vector<8x8xf32>
    %428 = math.exp %427 : vector<8x8xf32>
    %cst_107 = arith.constant dense<0.000000e+00> : vector<8xf32>
    %429 = vector.multi_reduction <add>, %428, %cst_107 [1] : vector<8x8xf32> to vector<8xf32>
    %430 = vector.shape_cast %429 : vector<8xf32> to vector<8x1xf32>
    %431 = tpu.reciprocal %430 {approx = true} : vector<8x1xf32> -> vector<8x1xf32>
    %432 = vector.broadcast %431 : vector<8x1xf32> to vector<8x8xf32>
    %433 = arith.mulf %428, %432 : vector<8x8xf32>
    %434 = arith.truncf %433 : vector<8x8xf32> to vector<8x8xbf16>
    %cst_108 = arith.constant dense<0.000000e+00> : vector<8x8xf32>
    %435 = tpu.matmul %434, %420, %cst_108 {dimension_numbers = #tpu.dot_dimension_numbers<[1], [0], [0], [1], [0, 0, 1, 1], [], []>} : vector<8x8xbf16>, vector<8x8xbf16>, vector<8x8xf32> -> vector<8x8xf32>
    %436 = tpu.concatenate %372, %393, %414, %435 in 1 : vector<8x8xf32>, vector<8x8xf32>, vector<8x8xf32>, vector<8x8xf32> -> vector<8x32xf32>
    %437 = vector.extract_strided_slice %9 {offsets = [1, 0], sizes = [1, 8], strides = [1, 1]} : vector<2x8xf32> to vector<1x8xf32>
    %438 = vector.extract_strided_slice %350 {offsets = [8, 0], sizes = [8, 8], strides = [1, 1]} : vector<16x96xf32> to vector<8x8xf32>
    %439 = arith.truncf %438 : vector<8x8xf32> to vector<8x8xbf16>
    %440 = vector.extract_strided_slice %350 {offsets = [8, 32], sizes = [8, 8], strides = [1, 1]} : vector<16x96xf32> to vector<8x8xf32>
    %441 = arith.truncf %440 : vector<8x8xf32> to vector<8x8xbf16>
    %442 = vector.extract_strided_slice %350 {offsets = [8, 64], sizes = [8, 8], strides = [1, 1]} : vector<16x96xf32> to vector<8x8xf32>
    %443 = arith.truncf %442 : vector<8x8xf32> to vector<8x8xbf16>
    %cst_109 = arith.constant dense<0.000000e+00> : vector<8x8xf32>
    %444 = tpu.matmul %439, %441, %cst_109 {dimension_numbers = #tpu.dot_dimension_numbers<[1], [1], [0], [0], [0, 0, 1, 0], [], []>} : vector<8x8xbf16>, vector<8x8xbf16>, vector<8x8xf32> -> vector<8x8xf32>
    %445 = vector.broadcast %437 : vector<1x8xf32> to vector<8x8xf32>
    %446 = arith.addf %444, %445 : vector<8x8xf32>
    %cst_110 = arith.constant dense<0xFF800000> : vector<8xf32>
    %447 = vector.multi_reduction <maximumf>, %446, %cst_110 [1] : vector<8x8xf32> to vector<8xf32>
    %448 = vector.shape_cast %447 : vector<8xf32> to vector<8x1xf32>
    %449 = vector.broadcast %448 : vector<8x1xf32> to vector<8x8xf32>
    %450 = arith.subf %446, %449 : vector<8x8xf32>
    %451 = math.exp %450 : vector<8x8xf32>
    %cst_111 = arith.constant dense<0.000000e+00> : vector<8xf32>
    %452 = vector.multi_reduction <add>, %451, %cst_111 [1] : vector<8x8xf32> to vector<8xf32>
    %453 = vector.shape_cast %452 : vector<8xf32> to vector<8x1xf32>
    %454 = tpu.reciprocal %453 {approx = true} : vector<8x1xf32> -> vector<8x1xf32>
    %455 = vector.broadcast %454 : vector<8x1xf32> to vector<8x8xf32>
    %456 = arith.mulf %451, %455 : vector<8x8xf32>
    %457 = arith.truncf %456 : vector<8x8xf32> to vector<8x8xbf16>
    %cst_112 = arith.constant dense<0.000000e+00> : vector<8x8xf32>
    %458 = tpu.matmul %457, %443, %cst_112 {dimension_numbers = #tpu.dot_dimension_numbers<[1], [0], [0], [1], [0, 0, 1, 1], [], []>} : vector<8x8xbf16>, vector<8x8xbf16>, vector<8x8xf32> -> vector<8x8xf32>
    %459 = vector.extract_strided_slice %350 {offsets = [8, 8], sizes = [8, 8], strides = [1, 1]} : vector<16x96xf32> to vector<8x8xf32>
    %460 = arith.truncf %459 : vector<8x8xf32> to vector<8x8xbf16>
    %461 = vector.extract_strided_slice %350 {offsets = [8, 40], sizes = [8, 8], strides = [1, 1]} : vector<16x96xf32> to vector<8x8xf32>
    %462 = arith.truncf %461 : vector<8x8xf32> to vector<8x8xbf16>
    %463 = vector.extract_strided_slice %350 {offsets = [8, 72], sizes = [8, 8], strides = [1, 1]} : vector<16x96xf32> to vector<8x8xf32>
    %464 = arith.truncf %463 : vector<8x8xf32> to vector<8x8xbf16>
    %cst_113 = arith.constant dense<0.000000e+00> : vector<8x8xf32>
    %465 = tpu.matmul %460, %462, %cst_113 {dimension_numbers = #tpu.dot_dimension_numbers<[1], [1], [0], [0], [0, 0, 1, 0], [], []>} : vector<8x8xbf16>, vector<8x8xbf16>, vector<8x8xf32> -> vector<8x8xf32>
    %466 = vector.broadcast %437 : vector<1x8xf32> to vector<8x8xf32>
    %467 = arith.addf %465, %466 : vector<8x8xf32>
    %cst_114 = arith.constant dense<0xFF800000> : vector<8xf32>
    %468 = vector.multi_reduction <maximumf>, %467, %cst_114 [1] : vector<8x8xf32> to vector<8xf32>
    %469 = vector.shape_cast %468 : vector<8xf32> to vector<8x1xf32>
    %470 = vector.broadcast %469 : vector<8x1xf32> to vector<8x8xf32>
    %471 = arith.subf %467, %470 : vector<8x8xf32>
    %472 = math.exp %471 : vector<8x8xf32>
    %cst_115 = arith.constant dense<0.000000e+00> : vector<8xf32>
    %473 = vector.multi_reduction <add>, %472, %cst_115 [1] : vector<8x8xf32> to vector<8xf32>
    %474 = vector.shape_cast %473 : vector<8xf32> to vector<8x1xf32>
    %475 = tpu.reciprocal %474 {approx = true} : vector<8x1xf32> -> vector<8x1xf32>
    %476 = vector.broadcast %475 : vector<8x1xf32> to vector<8x8xf32>
    %477 = arith.mulf %472, %476 : vector<8x8xf32>
    %478 = arith.truncf %477 : vector<8x8xf32> to vector<8x8xbf16>
    %cst_116 = arith.constant dense<0.000000e+00> : vector<8x8xf32>
    %479 = tpu.matmul %478, %464, %cst_116 {dimension_numbers = #tpu.dot_dimension_numbers<[1], [0], [0], [1], [0, 0, 1, 1], [], []>} : vector<8x8xbf16>, vector<8x8xbf16>, vector<8x8xf32> -> vector<8x8xf32>
    %480 = vector.extract_strided_slice %350 {offsets = [8, 16], sizes = [8, 8], strides = [1, 1]} : vector<16x96xf32> to vector<8x8xf32>
    %481 = arith.truncf %480 : vector<8x8xf32> to vector<8x8xbf16>
    %482 = vector.extract_strided_slice %350 {offsets = [8, 48], sizes = [8, 8], strides = [1, 1]} : vector<16x96xf32> to vector<8x8xf32>
    %483 = arith.truncf %482 : vector<8x8xf32> to vector<8x8xbf16>
    %484 = vector.extract_strided_slice %350 {offsets = [8, 80], sizes = [8, 8], strides = [1, 1]} : vector<16x96xf32> to vector<8x8xf32>
    %485 = arith.truncf %484 : vector<8x8xf32> to vector<8x8xbf16>
    %cst_117 = arith.constant dense<0.000000e+00> : vector<8x8xf32>
    %486 = tpu.matmul %481, %483, %cst_117 {dimension_numbers = #tpu.dot_dimension_numbers<[1], [1], [0], [0], [0, 0, 1, 0], [], []>} : vector<8x8xbf16>, vector<8x8xbf16>, vector<8x8xf32> -> vector<8x8xf32>
    %487 = vector.broadcast %437 : vector<1x8xf32> to vector<8x8xf32>
    %488 = arith.addf %486, %487 : vector<8x8xf32>
    %cst_118 = arith.constant dense<0xFF800000> : vector<8xf32>
    %489 = vector.multi_reduction <maximumf>, %488, %cst_118 [1] : vector<8x8xf32> to vector<8xf32>
    %490 = vector.shape_cast %489 : vector<8xf32> to vector<8x1xf32>
    %491 = vector.broadcast %490 : vector<8x1xf32> to vector<8x8xf32>
    %492 = arith.subf %488, %491 : vector<8x8xf32>
    %493 = math.exp %492 : vector<8x8xf32>
    %cst_119 = arith.constant dense<0.000000e+00> : vector<8xf32>
    %494 = vector.multi_reduction <add>, %493, %cst_119 [1] : vector<8x8xf32> to vector<8xf32>
    %495 = vector.shape_cast %494 : vector<8xf32> to vector<8x1xf32>
    %496 = tpu.reciprocal %495 {approx = true} : vector<8x1xf32> -> vector<8x1xf32>
    %497 = vector.broadcast %496 : vector<8x1xf32> to vector<8x8xf32>
    %498 = arith.mulf %493, %497 : vector<8x8xf32>
    %499 = arith.truncf %498 : vector<8x8xf32> to vector<8x8xbf16>
    %cst_120 = arith.constant dense<0.000000e+00> : vector<8x8xf32>
    %500 = tpu.matmul %499, %485, %cst_120 {dimension_numbers = #tpu.dot_dimension_numbers<[1], [0], [0], [1], [0, 0, 1, 1], [], []>} : vector<8x8xbf16>, vector<8x8xbf16>, vector<8x8xf32> -> vector<8x8xf32>
    %501 = vector.extract_strided_slice %350 {offsets = [8, 24], sizes = [8, 8], strides = [1, 1]} : vector<16x96xf32> to vector<8x8xf32>
    %502 = arith.truncf %501 : vector<8x8xf32> to vector<8x8xbf16>
    %503 = vector.extract_strided_slice %350 {offsets = [8, 56], sizes = [8, 8], strides = [1, 1]} : vector<16x96xf32> to vector<8x8xf32>
    %504 = arith.truncf %503 : vector<8x8xf32> to vector<8x8xbf16>
    %505 = vector.extract_strided_slice %350 {offsets = [8, 88], sizes = [8, 8], strides = [1, 1]} : vector<16x96xf32> to vector<8x8xf32>
    %506 = arith.truncf %505 : vector<8x8xf32> to vector<8x8xbf16>
    %cst_121 = arith.constant dense<0.000000e+00> : vector<8x8xf32>
    %507 = tpu.matmul %502, %504, %cst_121 {dimension_numbers = #tpu.dot_dimension_numbers<[1], [1], [0], [0], [0, 0, 1, 0], [], []>} : vector<8x8xbf16>, vector<8x8xbf16>, vector<8x8xf32> -> vector<8x8xf32>
    %508 = vector.broadcast %437 : vector<1x8xf32> to vector<8x8xf32>
    %509 = arith.addf %507, %508 : vector<8x8xf32>
    %cst_122 = arith.constant dense<0xFF800000> : vector<8xf32>
    %510 = vector.multi_reduction <maximumf>, %509, %cst_122 [1] : vector<8x8xf32> to vector<8xf32>
    %511 = vector.shape_cast %510 : vector<8xf32> to vector<8x1xf32>
    %512 = vector.broadcast %511 : vector<8x1xf32> to vector<8x8xf32>
    %513 = arith.subf %509, %512 : vector<8x8xf32>
    %514 = math.exp %513 : vector<8x8xf32>
    %cst_123 = arith.constant dense<0.000000e+00> : vector<8xf32>
    %515 = vector.multi_reduction <add>, %514, %cst_123 [1] : vector<8x8xf32> to vector<8xf32>
    %516 = vector.shape_cast %515 : vector<8xf32> to vector<8x1xf32>
    %517 = tpu.reciprocal %516 {approx = true} : vector<8x1xf32> -> vector<8x1xf32>
    %518 = vector.broadcast %517 : vector<8x1xf32> to vector<8x8xf32>
    %519 = arith.mulf %514, %518 : vector<8x8xf32>
    %520 = arith.truncf %519 : vector<8x8xf32> to vector<8x8xbf16>
    %cst_124 = arith.constant dense<0.000000e+00> : vector<8x8xf32>
    %521 = tpu.matmul %520, %506, %cst_124 {dimension_numbers = #tpu.dot_dimension_numbers<[1], [0], [0], [1], [0, 0, 1, 1], [], []>} : vector<8x8xbf16>, vector<8x8xbf16>, vector<8x8xf32> -> vector<8x8xf32>
    %522 = tpu.concatenate %458, %479, %500, %521 in 1 : vector<8x8xf32>, vector<8x8xf32>, vector<8x8xf32>, vector<8x8xf32> -> vector<8x32xf32>
    %523 = tpu.concatenate %436, %522 in 0 : vector<8x32xf32>, vector<8x32xf32> -> vector<16x32xf32>
    %524 = arith.truncf %523 : vector<16x32xf32> to vector<16x32xbf16>
    %cst_125 = arith.constant dense<0.000000e+00> : vector<16x32xf32>
    %525 = tpu.matmul %524, %345, %cst_125 {dimension_numbers = #tpu.dot_dimension_numbers<[1], [0], [0], [1], [0, 0, 1, 1], [], []>} : vector<16x32xbf16>, vector<32x32xbf16>, vector<16x32xf32> -> vector<16x32xf32>
    %526 = vector.broadcast %346 : vector<1x32xf32> to vector<16x32xf32>
    %527 = arith.addf %525, %526 : vector<16x32xf32>
    %c0_126 = arith.constant 0 : index
    %c0_127 = arith.constant 0 : index
    %528 = vector.load %arg10[%c0_126, %c0_127] : memref<16x32xf32, #tpu.memory_space<vmem>>, vector<16x32xf32>
    tpu.vector_store %arg10[%c0_126, %c0_127], %527 {strides = array<i32>} : memref<16x32xf32, #tpu.memory_space<vmem>>, vector<16x32xf32>,
    return
  }
}

</mosaic_0001>

<llo_original>
// kernel: encoder_forward.1
$region0: #{encoder_forward.1}
  #allocation0 [shape = 'u32[]', space=smem, size = 0x4, offset = 0x4, fixed_abs, tag = 'smem constant byte address 0x4 - core index']
  #allocation1 [shape = 'u32[144,128]{1,0:T(1,128)}', space=vmem, size = 0x12000, scoped, tag = 'internal scratch']
  %s0 = inlined_call_operand.vmem [shape: f32[16,32], index: 0, kind: input, shape index: {}]
  %s1 = inlined_call_operand.vmem [shape: f32[2,8], index: 1, kind: input, shape index: {}]
  %s2 = inlined_call_operand.vmem [shape: s32[2,8], index: 2, kind: input, shape index: {}]
  %s3 = inlined_call_operand.vmem [shape: bf16[2,32,96], index: 3, kind: input, shape index: {}]
  %s4 = inlined_call_operand.vmem [shape: f32[2,96], index: 4, kind: input, shape index: {}]
  %s5 = inlined_call_operand.vmem [shape: bf16[2,32,32], index: 5, kind: input, shape index: {}]
  %s6 = inlined_call_operand.vmem [shape: bf16[32,64], index: 6, kind: input, shape index: {}]
  %s7 = inlined_call_operand.vmem [shape: f32[1,64], index: 7, kind: input, shape index: {}]
  %s8 = inlined_call_operand.vmem [shape: bf16[64,32], index: 8, kind: input, shape index: {}]
  %s9 = inlined_call_operand.vmem [shape: f32[9,32], index: 9, kind: input, shape index: {}]
  %s10 = inlined_call_operand.hbm [shape: f32[16,32], index: 10, kind: output, shape index: {}]
  %s11 = sld [smem:[#allocation0]]
  $region50: #{encoder_forward.1} parent=0
    _
  %s13 = ssub.s32 1, %s11
  %s14 = scalar_select 0, %s13, %s11
  $region1: #{encoder_forward.1} parent=0
    #allocation2 [shape = 'u8[8192]{0}', space=vmem, size = 0x2000, scoped, tag = 'output window, operand 0, single buffered']
    #allocation3 [shape = 's32[1]{0}', space=sflag, size = 0x4, scoped, tag = 'scoped memory for encoder_forward.1']
    %15 = vsyncpa [#allocation3], 0
    // Predicated region
    $region2: #{encoder_forward.1} parent=1 // pred_check
      _
    $region3: #{encoder_forward.1} parent=1 // pred_check_branch
      %17 = sbr.rel (0) target = $region5
    $region4: #{encoder_forward.1} parent=1 // pred_region
      _
    $region5: #{encoder_forward.1} parent=1 // pred_fallthru
      _
    // Predicated region
    $region6: #{encoder_forward.1} parent=1 // pred_check
      _
    $region7: #{encoder_forward.1} parent=1 // pred_check_branch
      %19 = sbr.rel (0) target = $region9
    $region8: #{encoder_forward.1} parent=1 // pred_region
      _
    $region9: #{encoder_forward.1} parent=1 // pred_fallthru
      _
    // Predicated region
    $region10: #{encoder_forward.1} parent=1 // pred_check
      _
    $region11: #{encoder_forward.1} parent=1 // pred_check_branch
      %21 = sbr.rel (0) target = $region13
    $region12: #{encoder_forward.1} parent=1 // pred_region
      _
    $region13: #{encoder_forward.1} parent=1 // pred_fallthru
      _
    // Predicated region
    $region14: #{encoder_forward.1} parent=1 // pred_check
      _
    $region15: #{encoder_forward.1} parent=1 // pred_check_branch
      %23 = sbr.rel (0) target = $region17
    $region16: #{encoder_forward.1} parent=1 // pred_region
      _
    $region17: #{encoder_forward.1} parent=1 // pred_fallthru
      _
    // Predicated region
    $region18: #{encoder_forward.1} parent=1 // pred_check
      _
    $region19: #{encoder_forward.1} parent=1 // pred_check_branch
      %25 = sbr.rel (0) target = $region21
    $region20: #{encoder_forward.1} parent=1 // pred_region
      _
    $region21: #{encoder_forward.1} parent=1 // pred_fallthru
      _
    // Predicated region
    $region22: #{encoder_forward.1} parent=1 // pred_check
      _
    $region23: #{encoder_forward.1} parent=1 // pred_check_branch
      %27 = sbr.rel (0) target = $region25
    $region24: #{encoder_forward.1} parent=1 // pred_region
      _
    $region25: #{encoder_forward.1} parent=1 // pred_fallthru
      _
    // Predicated region
    $region26: #{encoder_forward.1} parent=1 // pred_check
      _
    $region27: #{encoder_forward.1} parent=1 // pred_check_branch
      %29 = sbr.rel (0) target = $region29
    $region28: #{encoder_forward.1} parent=1 // pred_region
      _
    $region29: #{encoder_forward.1} parent=1 // pred_fallthru
      _
    // Predicated region
    $region30: #{encoder_forward.1} parent=1 // pred_check
      _
    $region31: #{encoder_forward.1} parent=1 // pred_check_branch
      %31 = sbr.rel (0) target = $region33
    $region32: #{encoder_forward.1} parent=1 // pred_region
      _
    $region33: #{encoder_forward.1} parent=1 // pred_fallthru
      _
    // Predicated region
    $region34: #{encoder_forward.1} parent=1 // pred_check
      _
    $region35: #{encoder_forward.1} parent=1 // pred_check_branch
      %33 = sbr.rel (0) target = $region37
    $region36: #{encoder_forward.1} parent=1 // pred_region
      _
    $region37: #{encoder_forward.1} parent=1 // pred_fallthru
      _
    // Predicated region
    $region38: #{encoder_forward.1} parent=1 // pred_check
      _
    $region39: #{encoder_forward.1} parent=1 // pred_check_branch
      %35 = sbr.rel (0) target = $region41
    $region40: #{encoder_forward.1} parent=1 // pred_region
      _
    $region41: #{encoder_forward.1} parent=1 // pred_fallthru
      _
    %v37 = vld [vmem:[%s0] sm:$0xff]
    %v38 = vld [vmem:[%s0 + $0x8] sm:$0xff]
    %v39 = vld [vmem:[%s1] sm:$0x3]
    %v40 = vld [vmem:[%s2] sm:$0x3]
    %v41 = vld [vmem:[%s9] sm:$0xff]
    %v42 = vld [vmem:[%s9 + $0x8] sm:$0x1]
    %v43 = vld [vmem:[%s4] sm:$0x3]
    %vm44 = vcmp.ge.f32.partialorder %v39, 0.5
    %v45 = vsel %vm44, 0.0, -1e+30
    %vm46 = vcmask 261120
    %v47 = vsel %vm46, %v37, 0.0
    %48 = vadd.xlane.f32.xlu0 %v47
    %v49 = vpop.xlane.xlu0 %48
    %v50 = vsel %vm46, %v38, 0.0
    %51 = vadd.xlane.f32.xlu0 %v50
    %v52 = vpop.xlane.xlu0 %51
    %v53 = vrcp.pop 32.0
    %v54 = vmul.f32 %v49, %v53
    %v55 = vmul.f32 %v52, %v53
    %v56 = vsub.f32 %v37, %v54
    %v57 = vsub.f32 %v38, %v55
    %v58 = vmul.f32 %v56, %v56
    %v59 = vmul.f32 %v57, %v57
    %v60 = vsel %vm46, %v58, 0.0
    %61 = vadd.xlane.f32.xlu0 %v60
    %v62 = vpop.xlane.xlu0 %61
    %v63 = vsel %vm46, %v59, 0.0
    %64 = vadd.xlane.f32.xlu0 %v63
    %v65 = vpop.xlane.xlu0 %64
    %v66 = vmul.f32 %v62, %v53
    %v67 = vmul.f32 %v65, %v53
    %v68 = vadd.f32 %v66, 1e-12
    %v69 = vadd.f32 %v67, 1e-12
    %v70 = vrsqrt.pop %v68
    %v71 = vrsqrt.pop %v69
    %v72 = vmul.f32 %v56, %v70
    %v73 = vmul.f32 %v57, %v71
    %v74 = vlaneseq
    %v75 = vshrl.u32 %v74, 7
    %v76 = vsub.s32 0, %v75
    %v77 = vrot.slane %v41, %v76
    %v78 = vmul.f32 %v72, %v77
    %v79 = vmul.f32 %v73, %v77
    %v80 = vlaneseq
    %v81 = vshrl.u32 %v80, 7
    %v82 = vsub.s32 1, %v81
    %v83 = vrot.slane %v41, %v82
    %v84 = vadd.f32 %v78, %v83
    %v85 = vadd.f32 %v79, %v83
    %v86 = vld [vmem:[%s3] sm:$0xf]
    %v87 = vld [vmem:[%s3 + $0x4] sm:$0xf]
    %v88 = vld [vmem:[%s3 + $0x8] sm:$0xf]
    %v89 = vld [vmem:[%s3 + $0xc] sm:$0xf]
    %v90 = vld [vmem:[%s5] sm:$0xf]
    %v91 = vld [vmem:[%s5 + $0x4] sm:$0xf]
    %v92 = vld [vmem:[%s5 + $0x8] sm:$0xf]
    %v93 = vld [vmem:[%s5 + $0xc] sm:$0xf]
    %v94 = vpack.c.bf16 %v85, %v84
    %v95 = vlaneseq
    %v96 = vshrl.u32 %v95, 7
    %v97 = vsub.s32 0, %v96
    %v98 = vrot.slane %v43, %v97
    %v103 = vunpack.c.l.b16 %v86
    %v104 = vunpack.c.l.b16 %v87
    %v105 = vunpack.c.l.b16 %v88
    %v106 = vunpack.c.l.b16 %v89
    %v107 = vpack.c.b16 %v104, %v103
    %v108 = vpack.c.b16 %v106, %v105
    %v112 = vsel %vm46, %v94, 0
    %114 = vmatprep.subr.bf16.mxu0 0
    %115 = vmatpush1.bf16.msra.mxu0 0
    %116 = vmatprep.subr.bf16.mxu0 0
    %117 = vmatpush1.bf16.msra.mxu0 0
    %118 = vmatprep.subr.bf16.mxu0 0
    %119 = vmatpush1.bf16.msra.mxu0 0
    %120 = vmatprep.subr.bf16.mxu0 0
    %121 = vmatpush1.bf16.msra.mxu0 0
    %122 = vmatprep.subr.bf16.mxu0 0
    %123 = vmatpush1.bf16.msra.mxu0 0
    %124 = vmatprep.subr.bf16.mxu0 0
    %125 = vmatpush1.bf16.msra.mxu0 0
    %126 = vmatprep.subr.bf16.mxu0 0
    %127 = vmatpush1.bf16.msra.mxu0 %v108
    %128 = vmatprep.subr.bf16.mxu0 0
    %129 = vmatpush1.bf16.msra.mxu0 %v107
    %130 = vmatprep.subr.bf16.mxu0 0
    %131 = vmatpush2.bf16.msra.mxu0 0
    %132 = vmatprep.subr.bf16.mxu0 0
    %133 = vmatpush2.bf16.msra.mxu0 0
    %134 = vmatprep.subr.bf16.mxu0 0
    %135 = vmatpush2.bf16.msra.mxu0 0
    %136 = vmatprep.subr.bf16.mxu0 0
    %137 = vmatpush2.bf16.msra.mxu0 0
    %138 = vmatprep.subr.bf16.mxu0 0
    %139 = vmatpush2.bf16.msra.mxu0 0
    %140 = vmatprep.subr.bf16.mxu0 0
    %141 = vmatpush2.bf16.msra.mxu0 0
    %142 = vmatprep.subr.bf16.mxu0 0
    %143 = vmatpush2.bf16.msra.mxu0 0
    %144 = vmatprep.subr.bf16.mxu0 0
    %145 = vmatpush2.bf16.msra.mxu0 0
    %146 = vmatprep.mubr.bf16.mxu0 0
    %147 = vmatmul.mubr.bf16.gmra.mxu0 %v112
    %v148 = vpop.f32.mrf.mxu0
    %v149 = vadd.f32 %v98, %v148
    %v150 = vpop.f32.mrf.mxu0
    %v151 = vpop.f32.mrf.mxu0
    %v152 = vadd.f32 %v98, %v151
    %v153 = vpop.f32.mrf.mxu0
    %154 = vdwg.mxu0
    %v155 = vpack.c.bf16 %v149, %v149
    %v156 = vlaneseq
    %v157 = vshrl.u32 %v156, 7
    %v158 = vsub.s32 0, %v157
    %v159 = vrot.slane %v45, %v158
    %161 = vrot.lane.b32.xlu0 %v155, 96
    %v162 = vpop.permute.xlu0 %161
    %vm163 = vcmask 64512
    %v165 = vsel %vm163, %v155, 0
    %v168 = vsel %vm163, %v162, 0
    %170 = vmatprep.subr.bf16.mxu0 0
    %171 = vmatpush1.bf16.xpose.msra.mxu0 0
    %172 = vmatprep.subr.bf16.mxu0 0
    %173 = vmatpush1.bf16.xpose.msra.mxu0 0
    %174 = vmatprep.subr.bf16.mxu0 0
    %175 = vmatpush1.bf16.xpose.msra.mxu0 0
    %176 = vmatprep.subr.bf16.mxu0 0
    %177 = vmatpush1.bf16.xpose.msra.mxu0 0
    %178 = vmatprep.subr.bf16.mxu0 0
    %179 = vmatpush1.bf16.xpose.msra.mxu0 0
    %180 = vmatprep.subr.bf16.mxu0 0
    %181 = vmatpush1.bf16.xpose.msra.mxu0 0
    %182 = vmatprep.subr.bf16.mxu0 0
    %183 = vmatpush1.bf16.xpose.msra.mxu0 0
    %184 = vmatprep.subr.bf16.mxu0 0
    %185 = vmatpush1.bf16.xpose.msra.mxu0 %v168
    %186 = vmatprep.subr.bf16.mxu0 0
    %187 = vmatpush2.bf16.xpose.msra.mxu0 0
    %188 = vmatprep.subr.bf16.mxu0 0
    %189 = vmatpush2.bf16.xpose.msra.mxu0 0
    %190 = vmatprep.subr.bf16.mxu0 0
    %191 = vmatpush2.bf16.xpose.msra.mxu0 0
    %192 = vmatprep.subr.bf16.mxu0 0
    %193 = vmatpush2.bf16.xpose.msra.mxu0 0
    %194 = vmatprep.subr.bf16.mxu0 0
    %195 = vmatpush2.bf16.xpose.msra.mxu0 0
    %196 = vmatprep.subr.bf16.mxu0 0
    %197 = vmatpush2.bf16.xpose.msra.mxu0 0
    %198 = vmatprep.subr.bf16.mxu0 0
    %199 = vmatpush2.bf16.xpose.msra.mxu0 0
    %200 = vmatprep.subr.bf16.mxu0 0
    %201 = vmatpush2.bf16.xpose.msra.mxu0 0
    %202 = vmatprep.mubr.bf16.mxu0 0
    %203 = vmatmul.mubr.bf16.gmra.mxu0 %v165
    %v204 = vpop.f32.mrf.mxu0
    %v205 = vadd.f32 %v159, %v204
    %v206 = vpop.f32.mrf.mxu0
    %v207 = vpop.f32.mrf.mxu0
    %v208 = vpop.f32.mrf.mxu0
    %209 = vdwg.mxu0
    %v210 = vsel %vm163, %v205, -inf
    %211 = vmax.xlane.f32.xlu0 %v210
    %v212 = vpop.xlane.xlu0 %211
    %v213 = vsub.f32 %v205, %v212
    %v214 = vmul.f32 %v213, 1.442695
    %v215 = vpow.pop %v214
    %v216 = vsel %vm163, %v215, 0.0
    %217 = vadd.xlane.f32.xlu0 %v216
    %v218 = vpop.xlane.xlu0 %217
    %v219 = vrcp.pop %v218
    %v220 = vmul.f32 %v215, %v219
    %v221 = vpack.c.bf16 %v220, %v220
    %222 = vrot.lane.b32.xlu0 %v155, 64
    %v223 = vpop.permute.xlu0 %222
    %v225 = vsel %vm163, %v221, 0
    %vm227 = vcmask 1043456
    %v229 = vsel %vm227, %v223, 0
    %231 = vmatprep.subr.bf16.mxu0 0
    %232 = vmatpush1.bf16.msra.mxu0 0
    %233 = vmatprep.subr.bf16.mxu0 0
    %234 = vmatpush1.bf16.msra.mxu0 0
    %235 = vmatprep.subr.bf16.mxu0 0
    %236 = vmatpush1.bf16.msra.mxu0 0
    %237 = vmatprep.subr.bf16.mxu0 0
    %238 = vmatpush1.bf16.msra.mxu0 0
    %239 = vmatprep.subr.bf16.mxu0 0
    %240 = vmatpush1.bf16.msra.mxu0 0
    %241 = vmatprep.subr.bf16.mxu0 0
    %242 = vmatpush1.bf16.msra.mxu0 0
    %243 = vmatprep.subr.bf16.mxu0 0
    %244 = vmatpush1.bf16.msra.mxu0 0
    %245 = vmatprep.subr.bf16.mxu0 0
    %246 = vmatpush1.bf16.msra.mxu0 %v229
    %247 = vmatprep.subr.bf16.mxu0 0
    %248 = vmatpush2.bf16.msra.mxu0 0
    %249 = vmatprep.subr.bf16.mxu0 0
    %250 = vmatpush2.bf16.msra.mxu0 0
    %251 = vmatprep.subr.bf16.mxu0 0
    %252 = vmatpush2.bf16.msra.mxu0 0
    %253 = vmatprep.subr.bf16.mxu0 0
    %254 = vmatpush2.bf16.msra.mxu0 0
    %255 = vmatprep.subr.bf16.mxu0 0
    %256 = vmatpush2.bf16.msra.mxu0 0
    %257 = vmatprep.subr.bf16.mxu0 0
    %258 = vmatpush2.bf16.msra.mxu0 0
    %259 = vmatprep.subr.bf16.mxu0 0
    %260 = vmatpush2.bf16.msra.mxu0 0
    %261 = vmatprep.subr.bf16.mxu0 0
    %262 = vmatpush2.bf16.msra.mxu0 0
    %263 = vmatprep.mubr.bf16.mxu0 0
    %264 = vmatmul.mubr.bf16.gmra.mxu0 %v225
    %v265 = vpop.f32.mrf.mxu0
    %v266 = vadd.f32 0.0, %v265
    %v267 = vpop.f32.mrf.mxu0
    %v268 = vpop.f32.mrf.mxu0
    %v269 = vpop.f32.mrf.mxu0
    %270 = vdwg.mxu0
    %271 = vrot.lane.b32.xlu0 %v155, 120
    %v272 = vpop.permute.xlu0 %271
    %273 = vrot.lane.b32.xlu0 %v155, 88
    %v274 = vpop.permute.xlu0 %273
    %v276 = vsel %vm163, %v272, 0
    %v279 = vsel %vm163, %v274, 0
    %281 = vmatprep.subr.bf16.mxu0 0
    %282 = vmatpush1.bf16.xpose.msra.mxu0 0
    %283 = vmatprep.subr.bf16.mxu0 0
    %284 = vmatpush1.bf16.xpose.msra.mxu0 0
    %285 = vmatprep.subr.bf16.mxu0 0
    %286 = vmatpush1.bf16.xpose.msra.mxu0 0
    %287 = vmatprep.subr.bf16.mxu0 0
    %288 = vmatpush1.bf16.xpose.msra.mxu0 0
    %289 = vmatprep.subr.bf16.mxu0 0
    %290 = vmatpush1.bf16.xpose.msra.mxu0 0
    %291 = vmatprep.subr.bf16.mxu0 0
    %292 = vmatpush1.bf16.xpose.msra.mxu0 0
    %293 = vmatprep.subr.bf16.mxu0 0
    %294 = vmatpush1.bf16.xpose.msra.mxu0 0
    %295 = vmatprep.subr.bf16.mxu0 0
    %296 = vmatpush1.bf16.xpose.msra.mxu0 %v279
    %297 = vmatprep.subr.bf16.mxu0 0
    %298 = vmatpush2.bf16.xpose.msra.mxu0 0
    %299 = vmatprep.subr.bf16.mxu0 0
    %300 = vmatpush2.bf16.xpose.msra.mxu0 0
    %301 = vmatprep.subr.bf16.mxu0 0
    %302 = vmatpush2.bf16.xpose.msra.mxu0 0
    %303 = vmatprep.subr.bf16.mxu0 0
    %304 = vmatpush2.bf16.xpose.msra.mxu0 0
    %305 = vmatprep.subr.bf16.mxu0 0
    %306 = vmatpush2.bf16.xpose.msra.mxu0 0
    %307 = vmatprep.subr.bf16.mxu0 0
    %308 = vmatpush2.bf16.xpose.msra.mxu0 0
    %309 = vmatprep.subr.bf16.mxu0 0
    %310 = vmatpush2.bf16.xpose.msra.mxu0 0
    %311 = vmatprep.subr.bf16.mxu0 0
    %312 = vmatpush2.bf16.xpose.msra.mxu0 0
    %313 = vmatprep.mubr.bf16.mxu0 0
    %314 = vmatmul.mubr.bf16.gmra.mxu0 %v276
    %v315 = vpop.f32.mrf.mxu0
    %v316 = vadd.f32 %v159, %v315
    %v317 = vpop.f32.mrf.mxu0
    %v318 = vpop.f32.mrf.mxu0
    %v319 = vpop.f32.mrf.mxu0
    %320 = vdwg.mxu0
    %v321 = vsel %vm163, %v316, -inf
    %322 = vmax.xlane.f32.xlu0 %v321
    %v323 = vpop.xlane.xlu0 %322
    %v324 = vsub.f32 %v316, %v323
    %v325 = vmul.f32 %v324, 1.442695
    %v326 = vpow.pop %v325
    %v327 = vsel %vm163, %v326, 0.0
    %328 = vadd.xlane.f32.xlu0 %v327
    %v329 = vpop.xlane.xlu0 %328
    %v330 = vrcp.pop %v329
    %v331 = vmul.f32 %v326, %v330
    %v332 = vpack.c.bf16 %v331, %v331
    %333 = vrot.lane.b32.xlu0 %v155, 56
    %v334 = vpop.permute.xlu0 %333
    %v336 = vsel %vm163, %v332, 0
    %v339 = vsel %vm227, %v334, 0
    %341 = vmatprep.subr.bf16.mxu0 0
    %342 = vmatpush1.bf16.msra.mxu0 0
    %343 = vmatprep.subr.bf16.mxu0 0
    %344 = vmatpush1.bf16.msra.mxu0 0
    %345 = vmatprep.subr.bf16.mxu0 0
    %346 = vmatpush1.bf16.msra.mxu0 0
    %347 = vmatprep.subr.bf16.mxu0 0
    %348 = vmatpush1.bf16.msra.mxu0 0
    %349 = vmatprep.subr.bf16.mxu0 0
    %350 = vmatpush1.bf16.msra.mxu0 0
    %351 = vmatprep.subr.bf16.mxu0 0
    %352 = vmatpush1.bf16.msra.mxu0 0
    %353 = vmatprep.subr.bf16.mxu0 0
    %354 = vmatpush1.bf16.msra.mxu0 0
    %355 = vmatprep.subr.bf16.mxu0 0
    %356 = vmatpush1.bf16.msra.mxu0 %v339
    %357 = vmatprep.subr.bf16.mxu0 0
    %358 = vmatpush2.bf16.msra.mxu0 0
    %359 = vmatprep.subr.bf16.mxu0 0
    %360 = vmatpush2.bf16.msra.mxu0 0
    %361 = vmatprep.subr.bf16.mxu0 0
    %362 = vmatpush2.bf16.msra.mxu0 0
    %363 = vmatprep.subr.bf16.mxu0 0
    %364 = vmatpush2.bf16.msra.mxu0 0
    %365 = vmatprep.subr.bf16.mxu0 0
    %366 = vmatpush2.bf16.msra.mxu0 0
    %367 = vmatprep.subr.bf16.mxu0 0
    %368 = vmatpush2.bf16.msra.mxu0 0
    %369 = vmatprep.subr.bf16.mxu0 0
    %370 = vmatpush2.bf16.msra.mxu0 0
    %371 = vmatprep.subr.bf16.mxu0 0
    %372 = vmatpush2.bf16.msra.mxu0 0
    %373 = vmatprep.mubr.bf16.mxu0 0
    %374 = vmatmul.mubr.bf16.gmra.mxu0 %v336
    %v375 = vpop.f32.mrf.mxu0
    %v376 = vadd.f32 0.0, %v375
    %v377 = vpop.f32.mrf.mxu0
    %v378 = vpop.f32.mrf.mxu0
    %v379 = vpop.f32.mrf.mxu0
    %380 = vdwg.mxu0
    %381 = vrot.lane.b32.xlu0 %v155, 112
    %v382 = vpop.permute.xlu0 %381
    %383 = vrot.lane.b32.xlu0 %v155, 80
    %v384 = vpop.permute.xlu0 %383
    %v386 = vsel %vm163, %v382, 0
    %v389 = vsel %vm163, %v384, 0
    %391 = vmatprep.subr.bf16.mxu0 0
    %392 = vmatpush1.bf16.xpose.msra.mxu0 0
    %393 = vmatprep.subr.bf16.mxu0 0
    %394 = vmatpush1.bf16.xpose.msra.mxu0 0
    %395 = vmatprep.subr.bf16.mxu0 0
    %396 = vmatpush1.bf16.xpose.msra.mxu0 0
    %397 = vmatprep.subr.bf16.mxu0 0
    %398 = vmatpush1.bf16.xpose.msra.mxu0 0
    %399 = vmatprep.subr.bf16.mxu0 0
    %400 = vmatpush1.bf16.xpose.msra.mxu0 0
    %401 = vmatprep.subr.bf16.mxu0 0
    %402 = vmatpush1.bf16.xpose.msra.mxu0 0
    %403 = vmatprep.subr.bf16.mxu0 0
    %404 = vmatpush1.bf16.xpose.msra.mxu0 0
    %405 = vmatprep.subr.bf16.mxu0 0
    %406 = vmatpush1.bf16.xpose.msra.mxu0 %v389
    %407 = vmatprep.subr.bf16.mxu0 0
    %408 = vmatpush2.bf16.xpose.msra.mxu0 0
    %409 = vmatprep.subr.bf16.mxu0 0
    %410 = vmatpush2.bf16.xpose.msra.mxu0 0
    %411 = vmatprep.subr.bf16.mxu0 0
    %412 = vmatpush2.bf16.xpose.msra.mxu0 0
    %413 = vmatprep.subr.bf16.mxu0 0
    %414 = vmatpush2.bf16.xpose.msra.mxu0 0
    %415 = vmatprep.subr.bf16.mxu0 0
    %416 = vmatpush2.bf16.xpose.msra.mxu0 0
    %417 = vmatprep.subr.bf16.mxu0 0
    %418 = vmatpush2.bf16.xpose.msra.mxu0 0
    %419 = vmatprep.subr.bf16.mxu0 0
    %420 = vmatpush2.bf16.xpose.msra.mxu0 0
    %421 = vmatprep.subr.bf16.mxu0 0
    %422 = vmatpush2.bf16.xpose.msra.mxu0 0
    %423 = vmatprep.mubr.bf16.mxu0 0
    %424 = vmatmul.mubr.bf16.gmra.mxu0 %v386
    %v425 = vpop.f32.mrf.mxu0
    %v426 = vadd.f32 %v159, %v425
    %v427 = vpop.f32.mrf.mxu0
    %v428 = vpop.f32.mrf.mxu0
    %v429 = vpop.f32.mrf.mxu0
    %430 = vdwg.mxu0
    %v431 = vsel %vm163, %v426, -inf
    %432 = vmax.xlane.f32.xlu0 %v431
    %v433 = vpop.xlane.xlu0 %432
    %v434 = vsub.f32 %v426, %v433
    %v435 = vmul.f32 %v434, 1.442695
    %v436 = vpow.pop %v435
    %v437 = vsel %vm163, %v436, 0.0
    %438 = vadd.xlane.f32.xlu0 %v437
    %v439 = vpop.xlane.xlu0 %438
    %v440 = vrcp.pop %v439
    %v441 = vmul.f32 %v436, %v440
    %v442 = vpack.c.bf16 %v441, %v441
    %443 = vrot.lane.b32.xlu0 %v155, 48
    %v444 = vpop.permute.xlu0 %443
    %v446 = vsel %vm163, %v442, 0
    %v449 = vsel %vm227, %v444, 0
    %451 = vmatprep.subr.bf16.mxu0 0
    %452 = vmatpush1.bf16.msra.mxu0 0
    %453 = vmatprep.subr.bf16.mxu0 0
    %454 = vmatpush1.bf16.msra.mxu0 0
    %455 = vmatprep.subr.bf16.mxu0 0
    %456 = vmatpush1.bf16.msra.mxu0 0
    %457 = vmatprep.subr.bf16.mxu0 0
    %458 = vmatpush1.bf16.msra.mxu0 0
    %459 = vmatprep.subr.bf16.mxu0 0
    %460 = vmatpush1.bf16.msra.mxu0 0
    %461 = vmatprep.subr.bf16.mxu0 0
    %462 = vmatpush1.bf16.msra.mxu0 0
    %463 = vmatprep.subr.bf16.mxu0 0
    %464 = vmatpush1.bf16.msra.mxu0 0
    %465 = vmatprep.subr.bf16.mxu0 0
    %466 = vmatpush1.bf16.msra.mxu0 %v449
    %467 = vmatprep.subr.bf16.mxu0 0
    %468 = vmatpush2.bf16.msra.mxu0 0
    %469 = vmatprep.subr.bf16.mxu0 0
    %470 = vmatpush2.bf16.msra.mxu0 0
    %471 = vmatprep.subr.bf16.mxu0 0
    %472 = vmatpush2.bf16.msra.mxu0 0
    %473 = vmatprep.subr.bf16.mxu0 0
    %474 = vmatpush2.bf16.msra.mxu0 0
    %475 = vmatprep.subr.bf16.mxu0 0
    %476 = vmatpush2.bf16.msra.mxu0 0
    %477 = vmatprep.subr.bf16.mxu0 0
    %478 = vmatpush2.bf16.msra.mxu0 0
    %479 = vmatprep.subr.bf16.mxu0 0
    %480 = vmatpush2.bf16.msra.mxu0 0
    %481 = vmatprep.subr.bf16.mxu0 0
    %482 = vmatpush2.bf16.msra.mxu0 0
    %483 = vmatprep.mubr.bf16.mxu0 0
    %484 = vmatmul.mubr.bf16.gmra.mxu0 %v446
    %v485 = vpop.f32.mrf.mxu0
    %v486 = vadd.f32 0.0, %v485
    %v487 = vpop.f32.mrf.mxu0
    %v488 = vpop.f32.mrf.mxu0
    %v489 = vpop.f32.mrf.mxu0
    %490 = vdwg.mxu0
    %491 = vrot.lane.b32.xlu0 %v155, 104
    %v492 = vpop.permute.xlu0 %491
    %493 = vrot.lane.b32.xlu0 %v155, 72
    %v494 = vpop.permute.xlu0 %493
    %v496 = vsel %vm163, %v492, 0
    %v499 = vsel %vm163, %v494, 0
    %501 = vmatprep.subr.bf16.mxu0 0
    %502 = vmatpush1.bf16.xpose.msra.mxu0 0
    %503 = vmatprep.subr.bf16.mxu0 0
    %504 = vmatpush1.bf16.xpose.msra.mxu0 0
    %505 = vmatprep.subr.bf16.mxu0 0
    %506 = vmatpush1.bf16.xpose.msra.mxu0 0
    %507 = vmatprep.subr.bf16.mxu0 0
    %508 = vmatpush1.bf16.xpose.msra.mxu0 0
    %509 = vmatprep.subr.bf16.mxu0 0
    %510 = vmatpush1.bf16.xpose.msra.mxu0 0
    %511 = vmatprep.subr.bf16.mxu0 0
    %512 = vmatpush1.bf16.xpose.msra.mxu0 0
    %513 = vmatprep.subr.bf16.mxu0 0
    %514 = vmatpush1.bf16.xpose.msra.mxu0 0
    %515 = vmatprep.subr.bf16.mxu0 0
    %516 = vmatpush1.bf16.xpose.msra.mxu0 %v499
    %517 = vmatprep.subr.bf16.mxu0 0
    %518 = vmatpush2.bf16.xpose.msra.mxu0 0
    %519 = vmatprep.subr.bf16.mxu0 0
    %520 = vmatpush2.bf16.xpose.msra.mxu0 0
    %521 = vmatprep.subr.bf16.mxu0 0
    %522 = vmatpush2.bf16.xpose.msra.mxu0 0
    %523 = vmatprep.subr.bf16.mxu0 0
    %524 = vmatpush2.bf16.xpose.msra.mxu0 0
    %525 = vmatprep.subr.bf16.mxu0 0
    %526 = vmatpush2.bf16.xpose.msra.mxu0 0
    %527 = vmatprep.subr.bf16.mxu0 0
    %528 = vmatpush2.bf16.xpose.msra.mxu0 0
    %529 = vmatprep.subr.bf16.mxu0 0
    %530 = vmatpush2.bf16.xpose.msra.mxu0 0
    %531 = vmatprep.subr.bf16.mxu0 0
    %532 = vmatpush2.bf16.xpose.msra.mxu0 0
    %533 = vmatprep.mubr.bf16.mxu0 0
    %534 = vmatmul.mubr.bf16.gmra.mxu0 %v496
    %v535 = vpop.f32.mrf.mxu0
    %v536 = vadd.f32 %v159, %v535
    %v537 = vpop.f32.mrf.mxu0
    %v538 = vpop.f32.mrf.mxu0
    %v539 = vpop.f32.mrf.mxu0
    %540 = vdwg.mxu0
    %v541 = vsel %vm163, %v536, -inf
    %542 = vmax.xlane.f32.xlu0 %v541
    %v543 = vpop.xlane.xlu0 %542
    %v544 = vsub.f32 %v536, %v543
    %v545 = vmul.f32 %v544, 1.442695
    %v546 = vpow.pop %v545
    %v547 = vsel %vm163, %v546, 0.0
    %548 = vadd.xlane.f32.xlu0 %v547
    %v549 = vpop.xlane.xlu0 %548
    %v550 = vrcp.pop %v549
    %v551 = vmul.f32 %v546, %v550
    %v552 = vpack.c.bf16 %v551, %v551
    %553 = vrot.lane.b32.xlu0 %v155, 40
    %v554 = vpop.permute.xlu0 %553
    %v556 = vsel %vm163, %v552, 0
    %v559 = vsel %vm227, %v554, 0
    %561 = vmatprep.subr.bf16.mxu0 0
    %562 = vmatpush1.bf16.msra.mxu0 0
    %563 = vmatprep.subr.bf16.mxu0 0
    %564 = vmatpush1.bf16.msra.mxu0 0
    %565 = vmatprep.subr.bf16.mxu0 0
    %566 = vmatpush1.bf16.msra.mxu0 0
    %567 = vmatprep.subr.bf16.mxu0 0
    %568 = vmatpush1.bf16.msra.mxu0 0
    %569 = vmatprep.subr.bf16.mxu0 0
    %570 = vmatpush1.bf16.msra.mxu0 0
    %571 = vmatprep.subr.bf16.mxu0 0
    %572 = vmatpush1.bf16.msra.mxu0 0
    %573 = vmatprep.subr.bf16.mxu0 0
    %574 = vmatpush1.bf16.msra.mxu0 0
    %575 = vmatprep.subr.bf16.mxu0 0
    %576 = vmatpush1.bf16.msra.mxu0 %v559
    %577 = vmatprep.subr.bf16.mxu0 0
    %578 = vmatpush2.bf16.msra.mxu0 0
    %579 = vmatprep.subr.bf16.mxu0 0
    %580 = vmatpush2.bf16.msra.mxu0 0
    %581 = vmatprep.subr.bf16.mxu0 0
    %582 = vmatpush2.bf16.msra.mxu0 0
    %583 = vmatprep.subr.bf16.mxu0 0
    %584 = vmatpush2.bf16.msra.mxu0 0
    %585 = vmatprep.subr.bf16.mxu0 0
    %586 = vmatpush2.bf16.msra.mxu0 0
    %587 = vmatprep.subr.bf16.mxu0 0
    %588 = vmatpush2.bf16.msra.mxu0 0
    %589 = vmatprep.subr.bf16.mxu0 0
    %590 = vmatpush2.bf16.msra.mxu0 0
    %591 = vmatprep.subr.bf16.mxu0 0
    %592 = vmatpush2.bf16.msra.mxu0 0
    %593 = vmatprep.mubr.bf16.mxu0 0
    %594 = vmatmul.mubr.bf16.gmra.mxu0 %v556
    %v595 = vpop.f32.mrf.mxu0
    %v596 = vadd.f32 0.0, %v595
    %v597 = vpop.f32.mrf.mxu0
    %v598 = vpop.f32.mrf.mxu0
    %v599 = vpop.f32.mrf.mxu0
    %600 = vdwg.mxu0
    %602 = vrot.lane.b32.xlu0 %v376, 8
    %v603 = vpop.permute.xlu0 %602
    %606 = vrot.lane.b32.xlu0 %v486, 16
    %v607 = vpop.permute.xlu0 %606
    %610 = vrot.lane.b32.xlu0 %v596, 24
    %v611 = vpop.permute.xlu0 %610
    %v613 = vsel %vm163, %v266, %v603
    %vm614 = vcmask 130048
    %v615 = vsel %vm614, %v613, %v607
    %vm616 = vcmask 195584
    %v617 = vsel %vm616, %v615, %v611
    %v618 = vpack.c.bf16 %v152, %v152
    %v619 = vlaneseq
    %v620 = vshrl.u32 %v619, 7
    %v621 = vsub.s32 1, %v620
    %v622 = vrot.slane %v45, %v621
    %624 = vrot.lane.b32.xlu0 %v618, 96
    %v625 = vpop.permute.xlu0 %624
    %v627 = vsel %vm163, %v618, 0
    %v630 = vsel %vm163, %v625, 0
    %632 = vmatprep.subr.bf16.mxu0 0
    %633 = vmatpush1.bf16.xpose.msra.mxu0 0
    %634 = vmatprep.subr.bf16.mxu0 0
    %635 = vmatpush1.bf16.xpose.msra.mxu0 0
    %636 = vmatprep.subr.bf16.mxu0 0
    %637 = vmatpush1.bf16.xpose.msra.mxu0 0
    %638 = vmatprep.subr.bf16.mxu0 0
    %639 = vmatpush1.bf16.xpose.msra.mxu0 0
    %640 = vmatprep.subr.bf16.mxu0 0
    %641 = vmatpush1.bf16.xpose.msra.mxu0 0
    %642 = vmatprep.subr.bf16.mxu0 0
    %643 = vmatpush1.bf16.xpose.msra.mxu0 0
    %644 = vmatprep.subr.bf16.mxu0 0
    %645 = vmatpush1.bf16.xpose.msra.mxu0 0
    %646 = vmatprep.subr.bf16.mxu0 0
    %647 = vmatpush1.bf16.xpose.msra.mxu0 %v630
    %648 = vmatprep.subr.bf16.mxu0 0
    %649 = vmatpush2.bf16.xpose.msra.mxu0 0
    %650 = vmatprep.subr.bf16.mxu0 0
    %651 = vmatpush2.bf16.xpose.msra.mxu0 0
    %652 = vmatprep.subr.bf16.mxu0 0
    %653 = vmatpush2.bf16.xpose.msra.mxu0 0
    %654 = vmatprep.subr.bf16.mxu0 0
    %655 = vmatpush2.bf16.xpose.msra.mxu0 0
    %656 = vmatprep.subr.bf16.mxu0 0
    %657 = vmatpush2.bf16.xpose.msra.mxu0 0
    %658 = vmatprep.subr.bf16.mxu0 0
    %659 = vmatpush2.bf16.xpose.msra.mxu0 0
    %660 = vmatprep.subr.bf16.mxu0 0
    %661 = vmatpush2.bf16.xpose.msra.mxu0 0
    %662 = vmatprep.subr.bf16.mxu0 0
    %663 = vmatpush2.bf16.xpose.msra.mxu0 0
    %664 = vmatprep.mubr.bf16.mxu0 0
    %665 = vmatmul.mubr.bf16.gmra.mxu0 %v627
    %v666 = vpop.f32.mrf.mxu0
    %v667 = vadd.f32 %v622, %v666
    %v668 = vpop.f32.mrf.mxu0
    %v669 = vpop.f32.mrf.mxu0
    %v670 = vpop.f32.mrf.mxu0
    %671 = vdwg.mxu0
    %v672 = vsel %vm163, %v667, -inf
    %673 = vmax.xlane.f32.xlu0 %v672
    %v674 = vpop.xlane.xlu0 %673
    %v675 = vsub.f32 %v667, %v674
    %v676 = vmul.f32 %v675, 1.442695
    %v677 = vpow.pop %v676
    %v678 = vsel %vm163, %v677, 0.0
    %679 = vadd.xlane.f32.xlu0 %v678
    %v680 = vpop.xlane.xlu0 %679
    %v681 = vrcp.pop %v680
    %v682 = vmul.f32 %v677, %v681
    %v683 = vpack.c.bf16 %v682, %v682
    %684 = vrot.lane.b32.xlu0 %v618, 64
    %v685 = vpop.permute.xlu0 %684
    %v687 = vsel %vm163, %v683, 0
    %v690 = vsel %vm227, %v685, 0
    %692 = vmatprep.subr.bf16.mxu0 0
    %693 = vmatpush1.bf16.msra.mxu0 0
    %694 = vmatprep.subr.bf16.mxu0 0
    %695 = vmatpush1.bf16.msra.mxu0 0
    %696 = vmatprep.subr.bf16.mxu0 0
    %697 = vmatpush1.bf16.msra.mxu0 0
    %698 = vmatprep.subr.bf16.mxu0 0
    %699 = vmatpush1.bf16.msra.mxu0 0
    %700 = vmatprep.subr.bf16.mxu0 0
    %701 = vmatpush1.bf16.msra.mxu0 0
    %702 = vmatprep.subr.bf16.mxu0 0
    %703 = vmatpush1.bf16.msra.mxu0 0
    %704 = vmatprep.subr.bf16.mxu0 0
    %705 = vmatpush1.bf16.msra.mxu0 0
    %706 = vmatprep.subr.bf16.mxu0 0
    %707 = vmatpush1.bf16.msra.mxu0 %v690
    %708 = vmatprep.subr.bf16.mxu0 0
    %709 = vmatpush2.bf16.msra.mxu0 0
    %710 = vmatprep.subr.bf16.mxu0 0
    %711 = vmatpush2.bf16.msra.mxu0 0
    %712 = vmatprep.subr.bf16.mxu0 0
    %713 = vmatpush2.bf16.msra.mxu0 0
    %714 = vmatprep.subr.bf16.mxu0 0
    %715 = vmatpush2.bf16.msra.mxu0 0
    %716 = vmatprep.subr.bf16.mxu0 0
    %717 = vmatpush2.bf16.msra.mxu0 0
    %718 = vmatprep.subr.bf16.mxu0 0
    %719 = vmatpush2.bf16.msra.mxu0 0
    %720 = vmatprep.subr.bf16.mxu0 0
    %721 = vmatpush2.bf16.msra.mxu0 0
    %722 = vmatprep.subr.bf16.mxu0 0
    %723 = vmatpush2.bf16.msra.mxu0 0
    %724 = vmatprep.mubr.bf16.mxu0 0
    %725 = vmatmul.mubr.bf16.gmra.mxu0 %v687
    %v726 = vpop.f32.mrf.mxu0
    %v727 = vadd.f32 0.0, %v726
    %v728 = vpop.f32.mrf.mxu0
    %v729 = vpop.f32.mrf.mxu0
    %v730 = vpop.f32.mrf.mxu0
    %731 = vdwg.mxu0
    %732 = vrot.lane.b32.xlu0 %v618, 120
    %v733 = vpop.permute.xlu0 %732
    %734 = vrot.lane.b32.xlu0 %v618, 88
    %v735 = vpop.permute.xlu0 %734
    %v737 = vsel %vm163, %v733, 0
    %v740 = vsel %vm163, %v735, 0
    %742 = vmatprep.subr.bf16.mxu0 0
    %743 = vmatpush1.bf16.xpose.msra.mxu0 0
    %744 = vmatprep.subr.bf16.mxu0 0
    %745 = vmatpush1.bf16.xpose.msra.mxu0 0
    %746 = vmatprep.subr.bf16.mxu0 0
    %747 = vmatpush1.bf16.xpose.msra.mxu0 0
    %748 = vmatprep.subr.bf16.mxu0 0
    %749 = vmatpush1.bf16.xpose.msra.mxu0 0
    %750 = vmatprep.subr.bf16.mxu0 0
    %751 = vmatpush1.bf16.xpose.msra.mxu0 0
    %752 = vmatprep.subr.bf16.mxu0 0
    %753 = vmatpush1.bf16.xpose.msra.mxu0 0
    %754 = vmatprep.subr.bf16.mxu0 0
    %755 = vmatpush1.bf16.xpose.msra.mxu0 0
    %756 = vmatprep.subr.bf16.mxu0 0
    %757 = vmatpush1.bf16.xpose.msra.mxu0 %v740
    %758 = vmatprep.subr.bf16.mxu0 0
    %759 = vmatpush2.bf16.xpose.msra.mxu0 0
    %760 = vmatprep.subr.bf16.mxu0 0
    %761 = vmatpush2.bf16.xpose.msra.mxu0 0
    %762 = vmatprep.subr.bf16.mxu0 0
    %763 = vmatpush2.bf16.xpose.msra.mxu0 0
    %764 = vmatprep.subr.bf16.mxu0 0
    %765 = vmatpush2.bf16.xpose.msra.mxu0 0
    %766 = vmatprep.subr.bf16.mxu0 0
    %767 = vmatpush2.bf16.xpose.msra.mxu0 0
    %768 = vmatprep.subr.bf16.mxu0 0
    %769 = vmatpush2.bf16.xpose.msra.mxu0 0
    %770 = vmatprep.subr.bf16.mxu0 0
    %771 = vmatpush2.bf16.xpose.msra.mxu0 0
    %772 = vmatprep.subr.bf16.mxu0 0
    %773 = vmatpush2.bf16.xpose.msra.mxu0 0
    %774 = vmatprep.mubr.bf16.mxu0 0
    %775 = vmatmul.mubr.bf16.gmra.mxu0 %v737
    %v776 = vpop.f32.mrf.mxu0
    %v777 = vadd.f32 %v622, %v776
    %v778 = vpop.f32.mrf.mxu0
    %v779 = vpop.f32.mrf.mxu0
    %v780 = vpop.f32.mrf.mxu0
    %781 = vdwg.mxu0
    %v782 = vsel %vm163, %v777, -inf
    %783 = vmax.xlane.f32.xlu0 %v782
    %v784 = vpop.xlane.xlu0 %783
    %v785 = vsub.f32 %v777, %v784
    %v786 = vmul.f32 %v785, 1.442695
    %v787 = vpow.pop %v786
    %v788 = vsel %vm163, %v787, 0.0
    %789 = vadd.xlane.f32.xlu0 %v788
    %v790 = vpop.xlane.xlu0 %789
    %v791 = vrcp.pop %v790
    %v792 = vmul.f32 %v787, %v791
    %v793 = vpack.c.bf16 %v792, %v792
    %794 = vrot.lane.b32.xlu0 %v618, 56
    %v795 = vpop.permute.xlu0 %794
    %v797 = vsel %vm163, %v793, 0
    %v800 = vsel %vm227, %v795, 0
    %802 = vmatprep.subr.bf16.mxu0 0
    %803 = vmatpush1.bf16.msra.mxu0 0
    %804 = vmatprep.subr.bf16.mxu0 0
    %805 = vmatpush1.bf16.msra.mxu0 0
    %806 = vmatprep.subr.bf16.mxu0 0
    %807 = vmatpush1.bf16.msra.mxu0 0
    %808 = vmatprep.subr.bf16.mxu0 0
    %809 = vmatpush1.bf16.msra.mxu0 0
    %810 = vmatprep.subr.bf16.mxu0 0
    %811 = vmatpush1.bf16.msra.mxu0 0
    %812 = vmatprep.subr.bf16.mxu0 0
    %813 = vmatpush1.bf16.msra.mxu0 0
    %814 = vmatprep.subr.bf16.mxu0 0
    %815 = vmatpush1.bf16.msra.mxu0 0
    %816 = vmatprep.subr.bf16.mxu0 0
    %817 = vmatpush1.bf16.msra.mxu0 %v800
    %818 = vmatprep.subr.bf16.mxu0 0
    %819 = vmatpush2.bf16.msra.mxu0 0
    %820 = vmatprep.subr.bf16.mxu0 0
    %821 = vmatpush2.bf16.msra.mxu0 0
    %822 = vmatprep.subr.bf16.mxu0 0
    %823 = vmatpush2.bf16.msra.mxu0 0
    %824 = vmatprep.subr.bf16.mxu0 0
    %825 = vmatpush2.bf16.msra.mxu0 0
    %826 = vmatprep.subr.bf16.mxu0 0
    %827 = vmatpush2.bf16.msra.mxu0 0
    %828 = vmatprep.subr.bf16.mxu0 0
    %829 = vmatpush2.bf16.msra.mxu0 0
    %830 = vmatprep.subr.bf16.mxu0 0
    %831 = vmatpush2.bf16.msra.mxu0 0
    %832 = vmatprep.subr.bf16.mxu0 0
    %833 = vmatpush2.bf16.msra.mxu0 0
    %834 = vmatprep.mubr.bf16.mxu0 0
    %835 = vmatmul.mubr.bf16.gmra.mxu0 %v797
    %v836 = vpop.f32.mrf.mxu0
    %v837 = vadd.f32 0.0, %v836
    %v838 = vpop.f32.mrf.mxu0
    %v839 = vpop.f32.mrf.mxu0
    %v840 = vpop.f32.mrf.mxu0
    %841 = vdwg.mxu0
    %842 = vrot.lane.b32.xlu0 %v618, 112
    %v843 = vpop.permute.xlu0 %842
    %844 = vrot.lane.b32.xlu0 %v618, 80
    %v845 = vpop.permute.xlu0 %844
    %v847 = vsel %vm163, %v843, 0
    %v850 = vsel %vm163, %v845, 0
    %852 = vmatprep.subr.bf16.mxu0 0
    %853 = vmatpush1.bf16.xpose.msra.mxu0 0
    %854 = vmatprep.subr.bf16.mxu0 0
    %855 = vmatpush1.bf16.xpose.msra.mxu0 0
    %856 = vmatprep.subr.bf16.mxu0 0
    %857 = vmatpush1.bf16.xpose.msra.mxu0 0
    %858 = vmatprep.subr.bf16.mxu0 0
    %859 = vmatpush1.bf16.xpose.msra.mxu0 0
    %860 = vmatprep.subr.bf16.mxu0 0
    %861 = vmatpush1.bf16.xpose.msra.mxu0 0
    %862 = vmatprep.subr.bf16.mxu0 0
    %863 = vmatpush1.bf16.xpose.msra.mxu0 0
    %864 = vmatprep.subr.bf16.mxu0 0
    %865 = vmatpush1.bf16.xpose.msra.mxu0 0
    %866 = vmatprep.subr.bf16.mxu0 0
    %867 = vmatpush1.bf16.xpose.msra.mxu0 %v850
    %868 = vmatprep.subr.bf16.mxu0 0
    %869 = vmatpush2.bf16.xpose.msra.mxu0 0
    %870 = vmatprep.subr.bf16.mxu0 0
    %871 = vmatpush2.bf16.xpose.msra.mxu0 0
    %872 = vmatprep.subr.bf16.mxu0 0
    %873 = vmatpush2.bf16.xpose.msra.mxu0 0
    %874 = vmatprep.subr.bf16.mxu0 0
    %875 = vmatpush2.bf16.xpose.msra.mxu0 0
    %876 = vmatprep.subr.bf16.mxu0 0
    %877 = vmatpush2.bf16.xpose.msra.mxu0 0
    %878 = vmatprep.subr.bf16.mxu0 0
    %879 = vmatpush2.bf16.xpose.msra.mxu0 0
    %880 = vmatprep.subr.bf16.mxu0 0
    %881 = vmatpush2.bf16.xpose.msra.mxu0 0
    %882 = vmatprep.subr.bf16.mxu0 0
    %883 = vmatpush2.bf16.xpose.msra.mxu0 0
    %884 = vmatprep.mubr.bf16.mxu0 0
    %885 = vmatmul.mubr.bf16.gmra.mxu0 %v847
    %v886 = vpop.f32.mrf.mxu0
    %v887 = vadd.f32 %v622, %v886
    %v888 = vpop.f32.mrf.mxu0
    %v889 = vpop.f32.mrf.mxu0
    %v890 = vpop.f32.mrf.mxu0
    %891 = vdwg.mxu0
    %v892 = vsel %vm163, %v887, -inf
    %893 = vmax.xlane.f32.xlu0 %v892
    %v894 = vpop.xlane.xlu0 %893
    %v895 = vsub.f32 %v887, %v894
    %v896 = vmul.f32 %v895, 1.442695
    %v897 = vpow.pop %v896
    %v898 = vsel %vm163, %v897, 0.0
    %899 = vadd.xlane.f32.xlu0 %v898
    %v900 = vpop.xlane.xlu0 %899
    %v901 = vrcp.pop %v900
    %v902 = vmul.f32 %v897, %v901
    %v903 = vpack.c.bf16 %v902, %v902
    %904 = vrot.lane.b32.xlu0 %v618, 48
    %v905 = vpop.permute.xlu0 %904
    %v907 = vsel %vm163, %v903, 0
    %v910 = vsel %vm227, %v905, 0
    %912 = vmatprep.subr.bf16.mxu0 0
    %913 = vmatpush1.bf16.msra.mxu0 0
    %914 = vmatprep.subr.bf16.mxu0 0
    %915 = vmatpush1.bf16.msra.mxu0 0
    %916 = vmatprep.subr.bf16.mxu0 0
    %917 = vmatpush1.bf16.msra.mxu0 0
    %918 = vmatprep.subr.bf16.mxu0 0
    %919 = vmatpush1.bf16.msra.mxu0 0
    %920 = vmatprep.subr.bf16.mxu0 0
    %921 = vmatpush1.bf16.msra.mxu0 0
    %922 = vmatprep.subr.bf16.mxu0 0
    %923 = vmatpush1.bf16.msra.mxu0 0
    %924 = vmatprep.subr.bf16.mxu0 0
    %925 = vmatpush1.bf16.msra.mxu0 0
    %926 = vmatprep.subr.bf16.mxu0 0
    %927 = vmatpush1.bf16.msra.mxu0 %v910
    %928 = vmatprep.subr.bf16.mxu0 0
    %929 = vmatpush2.bf16.msra.mxu0 0
    %930 = vmatprep.subr.bf16.mxu0 0
    %931 = vmatpush2.bf16.msra.mxu0 0
    %932 = vmatprep.subr.bf16.mxu0 0
    %933 = vmatpush2.bf16.msra.mxu0 0
    %934 = vmatprep.subr.bf16.mxu0 0
    %935 = vmatpush2.bf16.msra.mxu0 0
    %936 = vmatprep.subr.bf16.mxu0 0
    %937 = vmatpush2.bf16.msra.mxu0 0
    %938 = vmatprep.subr.bf16.mxu0 0
    %939 = vmatpush2.bf16.msra.mxu0 0
    %940 = vmatprep.subr.bf16.mxu0 0
    %941 = vmatpush2.bf16.msra.mxu0 0
    %942 = vmatprep.subr.bf16.mxu0 0
    %943 = vmatpush2.bf16.msra.mxu0 0
    %944 = vmatprep.mubr.bf16.mxu0 0
    %945 = vmatmul.mubr.bf16.gmra.mxu0 %v907
    %v946 = vpop.f32.mrf.mxu0
    %v947 = vadd.f32 0.0, %v946
    %v948 = vpop.f32.mrf.mxu0
    %v949 = vpop.f32.mrf.mxu0
    %v950 = vpop.f32.mrf.mxu0
    %951 = vdwg.mxu0
    %952 = vrot.lane.b32.xlu0 %v618, 104
    %v953 = vpop.permute.xlu0 %952
    %954 = vrot.lane.b32.xlu0 %v618, 72
    %v955 = vpop.permute.xlu0 %954
    %v957 = vsel %vm163, %v953, 0
    %v960 = vsel %vm163, %v955, 0
    %962 = vmatprep.subr.bf16.mxu0 0
    %963 = vmatpush1.bf16.xpose.msra.mxu0 0
    %964 = vmatprep.subr.bf16.mxu0 0
    %965 = vmatpush1.bf16.xpose.msra.mxu0 0
    %966 = vmatprep.subr.bf16.mxu0 0
    %967 = vmatpush1.bf16.xpose.msra.mxu0 0
    %968 = vmatprep.subr.bf16.mxu0 0
    %969 = vmatpush1.bf16.xpose.msra.mxu0 0
    %970 = vmatprep.subr.bf16.mxu0 0
    %971 = vmatpush1.bf16.xpose.msra.mxu0 0
    %972 = vmatprep.subr.bf16.mxu0 0
    %973 = vmatpush1.bf16.xpose.msra.mxu0 0
    %974 = vmatprep.subr.bf16.mxu0 0
    %975 = vmatpush1.bf16.xpose.msra.mxu0 0
    %976 = vmatprep.subr.bf16.mxu0 0
    %977 = vmatpush1.bf16.xpose.msra.mxu0 %v960
    %978 = vmatprep.subr.bf16.mxu0 0
    %979 = vmatpush2.bf16.xpose.msra.mxu0 0
    %980 = vmatprep.subr.bf16.mxu0 0
    %981 = vmatpush2.bf16.xpose.msra.mxu0 0
    %982 = vmatprep.subr.bf16.mxu0 0
    %983 = vmatpush2.bf16.xpose.msra.mxu0 0
    %984 = vmatprep.subr.bf16.mxu0 0
    %985 = vmatpush2.bf16.xpose.msra.mxu0 0
    %986 = vmatprep.subr.bf16.mxu0 0
    %987 = vmatpush2.bf16.xpose.msra.mxu0 0
    %988 = vmatprep.subr.bf16.mxu0 0
    %989 = vmatpush2.bf16.xpose.msra.mxu0 0
    %990 = vmatprep.subr.bf16.mxu0 0
    %991 = vmatpush2.bf16.xpose.msra.mxu0 0
    %992 = vmatprep.subr.bf16.mxu0 0
    %993 = vmatpush2.bf16.xpose.msra.mxu0 0
    %994 = vmatprep.mubr.bf16.mxu0 0
    %995 = vmatmul.mubr.bf16.gmra.mxu0 %v957
    %v996 = vpop.f32.mrf.mxu0
    %v997 = vadd.f32 %v622, %v996
    %v998 = vpop.f32.mrf.mxu0
    %v999 = vpop.f32.mrf.mxu0
    %v1000 = vpop.f32.mrf.mxu0
    %1001 = vdwg.mxu0
    %v1002 = vsel %vm163, %v997, -inf
    %1003 = vmax.xlane.f32.xlu0 %v1002
    %v1004 = vpop.xlane.xlu0 %1003
    %v1005 = vsub.f32 %v997, %v1004
    %v1006 = vmul.f32 %v1005, 1.442695
    %v1007 = vpow.pop %v1006
    %v1008 = vsel %vm163, %v1007, 0.0
    %1009 = vadd.xlane.f32.xlu0 %v1008
    %v1010 = vpop.xlane.xlu0 %1009
    %v1011 = vrcp.pop %v1010
    %v1012 = vmul.f32 %v1007, %v1011
    %v1013 = vpack.c.bf16 %v1012, %v1012
    %1014 = vrot.lane.b32.xlu0 %v618, 40
    %v1015 = vpop.permute.xlu0 %1014
    %v1017 = vsel %vm163, %v1013, 0
    %v1020 = vsel %vm227, %v1015, 0
    %1022 = vmatprep.subr.bf16.mxu0 0
    %1023 = vmatpush1.bf16.msra.mxu0 0
    %1024 = vmatprep.subr.bf16.mxu0 0
    %1025 = vmatpush1.bf16.msra.mxu0 0
    %1026 = vmatprep.subr.bf16.mxu0 0
    %1027 = vmatpush1.bf16.msra.mxu0 0
    %1028 = vmatprep.subr.bf16.mxu0 0
    %1029 = vmatpush1.bf16.msra.mxu0 0
    %1030 = vmatprep.subr.bf16.mxu0 0
    %1031 = vmatpush1.bf16.msra.mxu0 0
    %1032 = vmatprep.subr.bf16.mxu0 0
    %1033 = vmatpush1.bf16.msra.mxu0 0
    %1034 = vmatprep.subr.bf16.mxu0 0
    %1035 = vmatpush1.bf16.msra.mxu0 0
    %1036 = vmatprep.subr.bf16.mxu0 0
    %1037 = vmatpush1.bf16.msra.mxu0 %v1020
    %1038 = vmatprep.subr.bf16.mxu0 0
    %1039 = vmatpush2.bf16.msra.mxu0 0
    %1040 = vmatprep.subr.bf16.mxu0 0
    %1041 = vmatpush2.bf16.msra.mxu0 0
    %1042 = vmatprep.subr.bf16.mxu0 0
    %1043 = vmatpush2.bf16.msra.mxu0 0
    %1044 = vmatprep.subr.bf16.mxu0 0
    %1045 = vmatpush2.bf16.msra.mxu0 0
    %1046 = vmatprep.subr.bf16.mxu0 0
    %1047 = vmatpush2.bf16.msra.mxu0 0
    %1048 = vmatprep.subr.bf16.mxu0 0
    %1049 = vmatpush2.bf16.msra.mxu0 0
    %1050 = vmatprep.subr.bf16.mxu0 0
    %1051 = vmatpush2.bf16.msra.mxu0 0
    %1052 = vmatprep.subr.bf16.mxu0 0
    %1053 = vmatpush2.bf16.msra.mxu0 0
    %1054 = vmatprep.mubr.bf16.mxu0 0
    %1055 = vmatmul.mubr.bf16.gmra.mxu0 %v1017
    %v1056 = vpop.f32.mrf.mxu0
    %v1057 = vadd.f32 0.0, %v1056
    %v1058 = vpop.f32.mrf.mxu0
    %v1059 = vpop.f32.mrf.mxu0
    %v1060 = vpop.f32.mrf.mxu0
    %1061 = vdwg.mxu0
    %1063 = vrot.lane.b32.xlu0 %v837, 8
    %v1064 = vpop.permute.xlu0 %1063
    %1067 = vrot.lane.b32.xlu0 %v947, 16
    %v1068 = vpop.permute.xlu0 %1067
    %1071 = vrot.lane.b32.xlu0 %v1057, 24
    %v1072 = vpop.permute.xlu0 %1071
    %v1074 = vsel %vm163, %v727, %v1064
    %v1075 = vsel %vm614, %v1074, %v1068
    %v1076 = vsel %vm616, %v1075, %v1072
    %v1077 = vpack.c.bf16 %v1076, %v617
    %v1078 = vlaneseq
    %v1079 = vshrl.u32 %v1078, 7
    %v1080 = vsub.s32 6, %v1079
    %v1081 = vrot.slane %v41, %v1080
    %v1086 = vunpack.c.l.b16 %v90
    %v1087 = vunpack.c.l.b16 %v91
    %v1088 = vunpack.c.l.b16 %v92
    %v1089 = vunpack.c.l.b16 %v93
    %v1090 = vpack.c.b16 %v1087, %v1086
    %v1091 = vpack.c.b16 %v1089, %v1088
    %v1095 = vsel %vm46, %v1077, 0
    %1097 = vmatprep.subr.bf16.mxu0 0
    %1098 = vmatpush1.bf16.msra.mxu0 0
    %1099 = vmatprep.subr.bf16.mxu0 0
    %1100 = vmatpush1.bf16.msra.mxu0 0
    %1101 = vmatprep.subr.bf16.mxu0 0
    %1102 = vmatpush1.bf16.msra.mxu0 0
    %1103 = vmatprep.subr.bf16.mxu0 0
    %1104 = vmatpush1.bf16.msra.mxu0 0
    %1105 = vmatprep.subr.bf16.mxu0 0
    %1106 = vmatpush1.bf16.msra.mxu0 0
    %1107 = vmatprep.subr.bf16.mxu0 0
    %1108 = vmatpush1.bf16.msra.mxu0 0
    %1109 = vmatprep.subr.bf16.mxu0 0
    %1110 = vmatpush1.bf16.msra.mxu0 %v1091
    %1111 = vmatprep.subr.bf16.mxu0 0
    %1112 = vmatpush1.bf16.msra.mxu0 %v1090
    %1113 = vmatprep.subr.bf16.mxu0 0
    %1114 = vmatpush2.bf16.msra.mxu0 0
    %1115 = vmatprep.subr.bf16.mxu0 0
    %1116 = vmatpush2.bf16.msra.mxu0 0
    %1117 = vmatprep.subr.bf16.mxu0 0
    %1118 = vmatpush2.bf16.msra.mxu0 0
    %1119 = vmatprep.subr.bf16.mxu0 0
    %1120 = vmatpush2.bf16.msra.mxu0 0
    %1121 = vmatprep.subr.bf16.mxu0 0
    %1122 = vmatpush2.bf16.msra.mxu0 0
    %1123 = vmatprep.subr.bf16.mxu0 0
    %1124 = vmatpush2.bf16.msra.mxu0 0
    %1125 = vmatprep.subr.bf16.mxu0 0
    %1126 = vmatpush2.bf16.msra.mxu0 0
    %1127 = vmatprep.subr.bf16.mxu0 0
    %1128 = vmatpush2.bf16.msra.mxu0 0
    %1129 = vmatprep.mubr.bf16.mxu0 0
    %1130 = vmatmul.mubr.bf16.gmra.mxu0 %v1095
    %v1131 = vpop.f32.mrf.mxu0
    %v1132 = vadd.f32 %v1081, %v1131
    %v1133 = vpop.f32.mrf.mxu0
    %v1134 = vpop.f32.mrf.mxu0
    %v1135 = vadd.f32 %v1081, %v1134
    %v1136 = vpop.f32.mrf.mxu0
    %1137 = vdwg.mxu0
    %v1138 = vadd.f32 %v84, %v1132
    %v1139 = vadd.f32 %v85, %v1135
    %v1140 = vsel %vm46, %v1138, 0.0
    %1141 = vadd.xlane.f32.xlu0 %v1140
    %v1142 = vpop.xlane.xlu0 %1141
    %v1143 = vsel %vm46, %v1139, 0.0
    %1144 = vadd.xlane.f32.xlu0 %v1143
    %v1145 = vpop.xlane.xlu0 %1144
    %v1146 = vmul.f32 %v1142, %v53
    %v1147 = vmul.f32 %v1145, %v53
    %v1148 = vsub.f32 %v1138, %v1146
    %v1149 = vsub.f32 %v1139, %v1147
    %v1150 = vmul.f32 %v1148, %v1148
    %v1151 = vmul.f32 %v1149, %v1149
    %v1152 = vsel %vm46, %v1150, 0.0
    %1153 = vadd.xlane.f32.xlu0 %v1152
    %v1154 = vpop.xlane.xlu0 %1153
    %v1155 = vsel %vm46, %v1151, 0.0
    %1156 = vadd.xlane.f32.xlu0 %v1155
    %v1157 = vpop.xlane.xlu0 %1156
    %v1158 = vmul.f32 %v1154, %v53
    %v1159 = vmul.f32 %v1157, %v53
    %v1160 = vadd.f32 %v1158, 1e-12
    %v1161 = vadd.f32 %v1159, 1e-12
    %v1162 = vrsqrt.pop %v1160
    %v1163 = vrsqrt.pop %v1161
    %v1164 = vmul.f32 %v1148, %v1162
    %v1165 = vmul.f32 %v1149, %v1163
    %v1166 = vlaneseq
    %v1167 = vshrl.u32 %v1166, 7
    %v1168 = vsub.s32 2, %v1167
    %v1169 = vrot.slane %v41, %v1168
    %v1170 = vmul.f32 %v1164, %v1169
    %v1171 = vmul.f32 %v1165, %v1169
    %v1172 = vlaneseq
    %v1173 = vshrl.u32 %v1172, 7
    %v1174 = vsub.s32 3, %v1173
    %v1175 = vrot.slane %v41, %v1174
    %v1176 = vadd.f32 %v1170, %v1175
    %v1177 = vadd.f32 %v1171, %v1175
    %v1178 = vpack.c.bf16 %v1177, %v1176
    %v1179 = vld [vmem:[%s6] sm:$0xf]
    %v1180 = vld [vmem:[%s6 + $0x4] sm:$0xf]
    %v1181 = vld [vmem:[%s6 + $0x8] sm:$0xf]
    %v1182 = vld [vmem:[%s6 + $0xc] sm:$0xf]
    %v1183 = vld [vmem:[%s7] sm:$0x1]
    %v1185 = vlaneseq
    %v1186 = vshrl.u32 %v1185, 7
    %v1187 = vsub.s32 0, %v1186
    %v1188 = vrot.slane %v1183, %v1187
    %v1194 = vunpack.c.l.b16 %v1179
    %v1195 = vunpack.c.l.b16 %v1180
    %v1196 = vunpack.c.l.b16 %v1181
    %v1197 = vunpack.c.l.b16 %v1182
    %v1198 = vpack.c.b16 %v1195, %v1194
    %v1199 = vpack.c.b16 %v1197, %v1196
    %v1203 = vsel %vm46, %v1178, 0
    %1205 = vmatprep.subr.bf16.mxu0 0
    %1206 = vmatpush1.bf16.msra.mxu0 0
    %1207 = vmatprep.subr.bf16.mxu0 0
    %1208 = vmatpush1.bf16.msra.mxu0 0
    %1209 = vmatprep.subr.bf16.mxu0 0
    %1210 = vmatpush1.bf16.msra.mxu0 0
    %1211 = vmatprep.subr.bf16.mxu0 0
    %1212 = vmatpush1.bf16.msra.mxu0 0
    %1213 = vmatprep.subr.bf16.mxu0 0
    %1214 = vmatpush1.bf16.msra.mxu0 0
    %1215 = vmatprep.subr.bf16.mxu0 0
    %1216 = vmatpush1.bf16.msra.mxu0 0
    %1217 = vmatprep.subr.bf16.mxu0 0
    %1218 = vmatpush1.bf16.msra.mxu0 %v1199
    %1219 = vmatprep.subr.bf16.mxu0 0
    %1220 = vmatpush1.bf16.msra.mxu0 %v1198
    %1221 = vmatprep.subr.bf16.mxu0 0
    %1222 = vmatpush2.bf16.msra.mxu0 0
    %1223 = vmatprep.subr.bf16.mxu0 0
    %1224 = vmatpush2.bf16.msra.mxu0 0
    %1225 = vmatprep.subr.bf16.mxu0 0
    %1226 = vmatpush2.bf16.msra.mxu0 0
    %1227 = vmatprep.subr.bf16.mxu0 0
    %1228 = vmatpush2.bf16.msra.mxu0 0
    %1229 = vmatprep.subr.bf16.mxu0 0
    %1230 = vmatpush2.bf16.msra.mxu0 0
    %1231 = vmatprep.subr.bf16.mxu0 0
    %1232 = vmatpush2.bf16.msra.mxu0 0
    %1233 = vmatprep.subr.bf16.mxu0 0
    %1234 = vmatpush2.bf16.msra.mxu0 0
    %1235 = vmatprep.subr.bf16.mxu0 0
    %1236 = vmatpush2.bf16.msra.mxu0 0
    %1237 = vmatprep.mubr.bf16.mxu0 0
    %1238 = vmatmul.mubr.bf16.gmra.mxu0 %v1203
    %v1239 = vpop.f32.mrf.mxu0
    %v1240 = vadd.f32 %v1188, %v1239
    %v1241 = vpop.f32.mrf.mxu0
    %v1242 = vpop.f32.mrf.mxu0
    %v1243 = vadd.f32 %v1188, %v1242
    %v1244 = vpop.f32.mrf.mxu0
    %1245 = vdwg.mxu0
    %v1246 = vmul.f32 %v1240, %v1240
    %v1247 = vmul.f32 %v1243, %v1243
    %v1248 = vmul.f32 %v1240, %v1246
    %v1249 = vmul.f32 %v1243, %v1247
    %v1250 = vmul.f32 %v1248, 0.044715
    %v1251 = vmul.f32 %v1249, 0.044715
    %v1252 = vadd.f32 %v1240, %v1250
    %v1253 = vadd.f32 %v1243, %v1251
    %v1254 = vmul.f32 %v1252, 0.7978846
    %v1255 = vmul.f32 %v1253, 0.7978846
    %v1256 = vtanh.pop %v1254
    %v1257 = vtanh.pop %v1255
    %v1258 = vadd.f32 %v1256, 1.0
    %v1259 = vadd.f32 %v1257, 1.0
    %v1260 = vmul.f32 %v1258, 0.5
    %v1261 = vmul.f32 %v1259, 0.5
    %v1262 = vmul.f32 %v1240, %v1260
    %v1263 = vmul.f32 %v1243, %v1261
    %v1264 = vpack.c.bf16 %v1263, %v1262
    %v1265 = vld [vmem:[%s8] sm:$0xf]
    %v1266 = vld [vmem:[%s8 + $0x4] sm:$0xf]
    %v1267 = vld [vmem:[%s8 + $0x8] sm:$0xf]
    %v1268 = vld [vmem:[%s8 + $0xc] sm:$0xf]
    %v1269 = vld [vmem:[%s8 + $0x10] sm:$0xf]
    %v1270 = vld [vmem:[%s8 + $0x14] sm:$0xf]
    %v1271 = vld [vmem:[%s8 + $0x18] sm:$0xf]
    %v1272 = vld [vmem:[%s8 + $0x1c] sm:$0xf]
    %v1273 = vlaneseq
    %v1274 = vshrl.u32 %v1273, 7
    %v1275 = vsub.s32 7, %v1274
    %v1276 = vrot.slane %v41, %v1275
    %v1285 = vunpack.c.l.b16 %v1265
    %v1286 = vunpack.c.l.b16 %v1266
    %v1287 = vunpack.c.l.b16 %v1267
    %v1288 = vunpack.c.l.b16 %v1268
    %v1289 = vunpack.c.l.b16 %v1269
    %v1290 = vunpack.c.l.b16 %v1270
    %v1291 = vunpack.c.l.b16 %v1271
    %v1292 = vunpack.c.l.b16 %v1272
    %v1293 = vpack.c.b16 %v1286, %v1285
    %v1294 = vpack.c.b16 %v1288, %v1287
    %v1295 = vpack.c.b16 %v1290, %v1289
    %v1296 = vpack.c.b16 %v1292, %v1291
    %vm1301 = vcmask 523264
    %v1303 = vsel %vm1301, %v1264, 0
    %1305 = vmatprep.subr.bf16.mxu0 0
    %1306 = vmatpush1.bf16.msra.mxu0 0
    %1307 = vmatprep.subr.bf16.mxu0 0
    %1308 = vmatpush1.bf16.msra.mxu0 0
    %1309 = vmatprep.subr.bf16.mxu0 0
    %1310 = vmatpush1.bf16.msra.mxu0 0
    %1311 = vmatprep.subr.bf16.mxu0 0
    %1312 = vmatpush1.bf16.msra.mxu0 0
    %1313 = vmatprep.subr.bf16.mxu0 0
    %1314 = vmatpush1.bf16.msra.mxu0 %v1296
    %1315 = vmatprep.subr.bf16.mxu0 0
    %1316 = vmatpush1.bf16.msra.mxu0 %v1295
    %1317 = vmatprep.subr.bf16.mxu0 0
    %1318 = vmatpush1.bf16.msra.mxu0 %v1294
    %1319 = vmatprep.subr.bf16.mxu0 0
    %1320 = vmatpush1.bf16.msra.mxu0 %v1293
    %1321 = vmatprep.subr.bf16.mxu0 0
    %1322 = vmatpush2.bf16.msra.mxu0 0
    %1323 = vmatprep.subr.bf16.mxu0 0
    %1324 = vmatpush2.bf16.msra.mxu0 0
    %1325 = vmatprep.subr.bf16.mxu0 0
    %1326 = vmatpush2.bf16.msra.mxu0 0
    %1327 = vmatprep.subr.bf16.mxu0 0
    %1328 = vmatpush2.bf16.msra.mxu0 0
    %1329 = vmatprep.subr.bf16.mxu0 0
    %1330 = vmatpush2.bf16.msra.mxu0 0
    %1331 = vmatprep.subr.bf16.mxu0 0
    %1332 = vmatpush2.bf16.msra.mxu0 0
    %1333 = vmatprep.subr.bf16.mxu0 0
    %1334 = vmatpush2.bf16.msra.mxu0 0
    %1335 = vmatprep.subr.bf16.mxu0 0
    %1336 = vmatpush2.bf16.msra.mxu0 0
    %1337 = vmatprep.mubr.bf16.mxu0 0
    %1338 = vmatmul.mubr.bf16.gmra.mxu0 %v1303
    %v1339 = vpop.f32.mrf.mxu0
    %v1340 = vadd.f32 %v1276, %v1339
    %v1341 = vpop.f32.mrf.mxu0
    %v1342 = vpop.f32.mrf.mxu0
    %v1343 = vadd.f32 %v1276, %v1342
    %v1344 = vpop.f32.mrf.mxu0
    %1345 = vdwg.mxu0
    %v1346 = vadd.f32 %v1176, %v1340
    %v1347 = vadd.f32 %v1177, %v1343
    %v1348 = vsel %vm46, %v1346, 0.0
    %1349 = vadd.xlane.f32.xlu0 %v1348
    %v1350 = vpop.xlane.xlu0 %1349
    %v1351 = vsel %vm46, %v1347, 0.0
    %1352 = vadd.xlane.f32.xlu0 %v1351
    %v1353 = vpop.xlane.xlu0 %1352
    %v1354 = vmul.f32 %v1350, %v53
    %v1355 = vmul.f32 %v1353, %v53
    %v1356 = vsub.f32 %v1346, %v1354
    %v1357 = vsub.f32 %v1347, %v1355
    %v1358 = vmul.f32 %v1356, %v1356
    %v1359 = vmul.f32 %v1357, %v1357
    %v1360 = vsel %vm46, %v1358, 0.0
    %1361 = vadd.xlane.f32.xlu0 %v1360
    %v1362 = vpop.xlane.xlu0 %1361
    %v1363 = vsel %vm46, %v1359, 0.0
    %1364 = vadd.xlane.f32.xlu0 %v1363
    %v1365 = vpop.xlane.xlu0 %1364
    %v1366 = vmul.f32 %v1362, %v53
    %v1367 = vmul.f32 %v1365, %v53
    %v1368 = vadd.f32 %v1366, 1e-12
    %v1369 = vadd.f32 %v1367, 1e-12
    %v1370 = vrsqrt.pop %v1368
    %v1371 = vrsqrt.pop %v1369
    %v1372 = vmul.f32 %v1356, %v1370
    %v1373 = vmul.f32 %v1357, %v1371
    %v1374 = vlaneseq
    %v1375 = vshrl.u32 %v1374, 7
    %v1376 = vsub.s32 4, %v1375
    %v1377 = vrot.slane %v41, %v1376
    %v1378 = vmul.f32 %v1372, %v1377
    %v1379 = vmul.f32 %v1373, %v1377
    %v1380 = vlaneseq
    %v1381 = vshrl.u32 %v1380, 7
    %v1382 = vsub.s32 5, %v1381
    %v1383 = vrot.slane %v41, %v1382
    %v1384 = vadd.f32 %v1378, %v1383
    %v1385 = vadd.f32 %v1379, %v1383
    %v1386 = vlaneseq
    %v1387 = vshrl.u32 %v1386, 7
    %vm1388 = vcmask 57344
    %v1389 = vsel %vm1388, %v40, 2147483648
    %v1390 = vand.u32 %v1389, 65535
    %v1391 = vshra.s32 %v1389, 16
    %v1392 = vcvt.s32.f32 %v1390
    %v1393 = vcvt.s32.f32 %v1391
    %1394 = vmax.xlane.f32.xlu0 %v1393
    %v1395 = vpop.xlane.xlu0 %1394
    %vm1396 = vcmp.eq.f32.partialorder %v1393, %v1395
    %v1397 = vsel %vm1396, %v1392, -inf
    %1398 = vmax.xlane.f32.xlu0 %v1397
    %v1399 = vpop.xlane.xlu0 %1398
    %v1400 = vcvt.f32.s32 %v1399
    %v1401 = vcvt.f32.s32 %v1395
    %v1402 = vshll.u32 %v1401, 16
    %v1403 = vadd.s32 %v1402, %v1400
    %v1404 = vrot.slane %v1403, 4
    %vm1405 = vcmp.gt.s32.totalorder %v1403, %v1404
    %v1406 = vsel %vm1405, %v1403, %v1404
    %v1407 = vrot.slane %v1406, 2
    %vm1408 = vcmp.gt.s32.totalorder %v1406, %v1407
    %v1409 = vsel %vm1408, %v1406, %v1407
    %v1410 = vrot.slane %v1409, 1
    %vm1411 = vcmp.gt.s32.totalorder %v1409, %v1410
    %v1412 = vsel %vm1411, %v1409, %v1410
    %s1413 = vtos %v1412
    %s1414 = sadd.s32 %s1413, 1
    %v1415 = vlaneseq
    %v1416 = vshrl.u32 %v1415, 7
    %v1417 = vsub.s32 0, %v1416
    %v1418 = vrot.slane %v40, %v1417
    %vm1419 = vcmp.eq.s32.totalorder %v1418, %v1387
    %v1420 = vsel %vm1419, 1, 0
    %v1421 = vcvt.s32.f32 %v1420
    %v1422 = vsel %vm163, %v1421, 0.0
    %1423 = vadd.xlane.f32.xlu0 %v1422
    %v1424 = vpop.xlane.xlu0 %1423
    %v1426 = vsel %vm163, %v1421, 0
    %1428 = vmatprep.subr.mxu0 0.0
    %1429 = vmatpush1.msra.mxu0 0.0
    %1430 = vmatprep.subr.mxu0 0.0
    %1431 = vmatpush1.msra.mxu0 0.0
    %1432 = vmatprep.subr.mxu0 0.0
    %1433 = vmatpush1.msra.mxu0 0.0
    %1434 = vmatprep.subr.mxu0 0.0
    %1435 = vmatpush1.msra.mxu0 0.0
    %1436 = vmatprep.subr.mxu0 0.0
    %1437 = vmatpush1.msra.mxu0 0.0
    %1438 = vmatprep.subr.mxu0 0.0
    %1439 = vmatpush1.msra.mxu0 0.0
    %1440 = vmatprep.subr.mxu0 0.0
    %1441 = vmatpush1.msra.mxu0 0.0
    %1442 = vmatprep.subr.mxu0 0.0
    %1443 = vmatpush1.msra.mxu0 0.0
    %1444 = vmatprep.subr.mxu0 0.0
    %1445 = vmatpush1.msra.mxu0 0.0
    %1446 = vmatprep.subr.mxu0 0.0
    %1447 = vmatpush1.msra.mxu0 0.0
    %1448 = vmatprep.subr.mxu0 0.0
    %1449 = vmatpush1.msra.mxu0 0.0
    %1450 = vmatprep.subr.mxu0 0.0
    %1451 = vmatpush1.msra.mxu0 0.0
    %1452 = vmatprep.subr.mxu0 0.0
    %1453 = vmatpush1.msra.mxu0 0.0
    %1454 = vmatprep.subr.mxu0 0.0
    %1455 = vmatpush1.msra.mxu0 0.0
    %1456 = vmatprep.subr.mxu0 0.0
    %1457 = vmatpush1.msra.mxu0 0.0
    %1458 = vmatprep.subr.mxu0 0.0
    %1459 = vmatpush1.msra.mxu0 %v1384
    %1460 = vmatprep.subr.mxu0 0.0
    %1461 = vmatpush2.msra.mxu0 0.0
    %1462 = vmatprep.subr.mxu0 0.0
    %1463 = vmatpush2.msra.mxu0 0.0
    %1464 = vmatprep.subr.mxu0 0.0
    %1465 = vmatpush2.msra.mxu0 0.0
    %1466 = vmatprep.subr.mxu0 0.0
    %1467 = vmatpush2.msra.mxu0 0.0
    %1468 = vmatprep.subr.mxu0 0.0
    %1469 = vmatpush2.msra.mxu0 0.0
    %1470 = vmatprep.subr.mxu0 0.0
    %1471 = vmatpush2.msra.mxu0 0.0
    %1472 = vmatprep.subr.mxu0 0.0
    %1473 = vmatpush2.msra.mxu0 0.0
    %1474 = vmatprep.subr.mxu0 0.0
    %1475 = vmatpush2.msra.mxu0 0.0
    %1476 = vmatprep.subr.mxu0 0.0
    %1477 = vmatpush2.msra.mxu0 0.0
    %1478 = vmatprep.subr.mxu0 0.0
    %1479 = vmatpush2.msra.mxu0 0.0
    %1480 = vmatprep.subr.mxu0 0.0
    %1481 = vmatpush2.msra.mxu0 0.0
    %1482 = vmatprep.subr.mxu0 0.0
    %1483 = vmatpush2.msra.mxu0 0.0
    %1484 = vmatprep.subr.mxu0 0.0
    %1485 = vmatpush2.msra.mxu0 0.0
    %1486 = vmatprep.subr.mxu0 0.0
    %1487 = vmatpush2.msra.mxu0 0.0
    %1488 = vmatprep.subr.mxu0 0.0
    %1489 = vmatpush2.msra.mxu0 0.0
    %1490 = vmatprep.subr.mxu0 0.0
    %1491 = vmatpush2.msra.mxu0 0.0
    %1492 = vmatprep.mubr.f32.mxu0 0.0
    %1493 = vmatmul.mubr.f32.gmra.mxu0 %v1426
    %v1494 = vpop.f32.mrf.mxu0
    %v1495 = vadd.f32 0.0, %v1494
    %v1496 = vpop.f32.mrf.mxu0
    %1497 = vdwg.mxu0
    %v1498 = vmax.f32 %v1424, 1.0
    %v1499 = vrcp.pop %v1498
    %v1500 = vmul.f32 %v1495, %v1499
    %v1501 = vstv %s1414
    %vm1502 = vcmp.lt.s32.totalorder %v1387, %v1501
    %v1503 = vsel %vm1502, 1, 0
    %vm1504 = vcmp.eq.s32.totalorder %v1503, 1
    %v1505 = vsel %vm1504, %v1500, %v1384
    %vm1506 = vcmask 58369
    %v1507 = vsel %vm1506, %v40, 2147483648
    %v1508 = vand.u32 %v1507, 65535
    %v1509 = vshra.s32 %v1507, 16
    %v1510 = vcvt.s32.f32 %v1508
    %v1511 = vcvt.s32.f32 %v1509
    %1512 = vmax.xlane.f32.xlu0 %v1511
    %v1513 = vpop.xlane.xlu0 %1512
    %vm1514 = vcmp.eq.f32.partialorder %v1511, %v1513
    %v1515 = vsel %vm1514, %v1510, -inf
    %1516 = vmax.xlane.f32.xlu0 %v1515
    %v1517 = vpop.xlane.xlu0 %1516
    %v1518 = vcvt.f32.s32 %v1517
    %v1519 = vcvt.f32.s32 %v1513
    %v1520 = vshll.u32 %v1519, 16
    %v1521 = vadd.s32 %v1520, %v1518
    %v1522 = vrot.slane %v1521, 4
    %vm1523 = vcmp.gt.s32.totalorder %v1521, %v1522
    %v1524 = vsel %vm1523, %v1521, %v1522
    %v1525 = vrot.slane %v1524, 2
    %vm1526 = vcmp.gt.s32.totalorder %v1524, %v1525
    %v1527 = vsel %vm1526, %v1524, %v1525
    %v1528 = vrot.slane %v1527, 1
    %vm1529 = vcmp.gt.s32.totalorder %v1527, %v1528
    %v1530 = vsel %vm1529, %v1527, %v1528
    %s1531 = vtos %v1530
    %s1532 = sadd.s32 %s1531, 1
    %v1533 = vlaneseq
    %v1534 = vshrl.u32 %v1533, 7
    %v1535 = vsub.s32 1, %v1534
    %v1536 = vrot.slane %v40, %v1535
    %vm1537 = vcmp.eq.s32.totalorder %v1536, %v1387
    %v1538 = vsel %vm1537, 1, 0
    %v1539 = vcvt.s32.f32 %v1538
    %v1540 = vsel %vm163, %v1539, 0.0
    %1541 = vadd.xlane.f32.xlu0 %v1540
    %v1542 = vpop.xlane.xlu0 %1541
    %v1544 = vsel %vm163, %v1539, 0
    %1546 = vmatprep.subr.mxu0 0.0
    %1547 = vmatpush1.msra.mxu0 0.0
    %1548 = vmatprep.subr.mxu0 0.0
    %1549 = vmatpush1.msra.mxu0 0.0
    %1550 = vmatprep.subr.mxu0 0.0
    %1551 = vmatpush1.msra.mxu0 0.0
    %1552 = vmatprep.subr.mxu0 0.0
    %1553 = vmatpush1.msra.mxu0 0.0
    %1554 = vmatprep.subr.mxu0 0.0
    %1555 = vmatpush1.msra.mxu0 0.0
    %1556 = vmatprep.subr.mxu0 0.0
    %1557 = vmatpush1.msra.mxu0 0.0
    %1558 = vmatprep.subr.mxu0 0.0
    %1559 = vmatpush1.msra.mxu0 0.0
    %1560 = vmatprep.subr.mxu0 0.0
    %1561 = vmatpush1.msra.mxu0 0.0
    %1562 = vmatprep.subr.mxu0 0.0
    %1563 = vmatpush1.msra.mxu0 0.0
    %1564 = vmatprep.subr.mxu0 0.0
    %1565 = vmatpush1.msra.mxu0 0.0
    %1566 = vmatprep.subr.mxu0 0.0
    %1567 = vmatpush1.msra.mxu0 0.0
    %1568 = vmatprep.subr.mxu0 0.0
    %1569 = vmatpush1.msra.mxu0 0.0
    %1570 = vmatprep.subr.mxu0 0.0
    %1571 = vmatpush1.msra.mxu0 0.0
    %1572 = vmatprep.subr.mxu0 0.0
    %1573 = vmatpush1.msra.mxu0 0.0
    %1574 = vmatprep.subr.mxu0 0.0
    %1575 = vmatpush1.msra.mxu0 0.0
    %1576 = vmatprep.subr.mxu0 0.0
    %1577 = vmatpush1.msra.mxu0 %v1385
    %1578 = vmatprep.subr.mxu0 0.0
    %1579 = vmatpush2.msra.mxu0 0.0
    %1580 = vmatprep.subr.mxu0 0.0
    %1581 = vmatpush2.msra.mxu0 0.0
    %1582 = vmatprep.subr.mxu0 0.0
    %1583 = vmatpush2.msra.mxu0 0.0
    %1584 = vmatprep.subr.mxu0 0.0
    %1585 = vmatpush2.msra.mxu0 0.0
    %1586 = vmatprep.subr.mxu0 0.0
    %1587 = vmatpush2.msra.mxu0 0.0
    %1588 = vmatprep.subr.mxu0 0.0
    %1589 = vmatpush2.msra.mxu0 0.0
    %1590 = vmatprep.subr.mxu0 0.0
    %1591 = vmatpush2.msra.mxu0 0.0
    %1592 = vmatprep.subr.mxu0 0.0
    %1593 = vmatpush2.msra.mxu0 0.0
    %1594 = vmatprep.subr.mxu0 0.0
    %1595 = vmatpush2.msra.mxu0 0.0
    %1596 = vmatprep.subr.mxu0 0.0
    %1597 = vmatpush2.msra.mxu0 0.0
    %1598 = vmatprep.subr.mxu0 0.0
    %1599 = vmatpush2.msra.mxu0 0.0
    %1600 = vmatprep.subr.mxu0 0.0
    %1601 = vmatpush2.msra.mxu0 0.0
    %1602 = vmatprep.subr.mxu0 0.0
    %1603 = vmatpush2.msra.mxu0 0.0
    %1604 = vmatprep.subr.mxu0 0.0
    %1605 = vmatpush2.msra.mxu0 0.0
    %1606 = vmatprep.subr.mxu0 0.0
    %1607 = vmatpush2.msra.mxu0 0.0
    %1608 = vmatprep.subr.mxu0 0.0
    %1609 = vmatpush2.msra.mxu0 0.0
    %1610 = vmatprep.mubr.f32.mxu0 0.0
    %1611 = vmatmul.mubr.f32.gmra.mxu0 %v1544
    %v1612 = vpop.f32.mrf.mxu0
    %v1613 = vadd.f32 0.0, %v1612
    %v1614 = vpop.f32.mrf.mxu0
    %1615 = vdwg.mxu0
    %v1616 = vmax.f32 %v1542, 1.0
    %v1617 = vrcp.pop %v1616
    %v1618 = vmul.f32 %v1613, %v1617
    %v1619 = vstv %s1532
    %vm1620 = vcmp.lt.s32.totalorder %v1387, %v1619
    %v1621 = vsel %vm1620, 1, 0
    %vm1622 = vcmp.eq.s32.totalorder %v1621, 1
    %v1623 = vsel %vm1622, %v1618, %v1385
    %s1624 = scalar_lea.vmem %s3, 16
    %v1625 = vld [vmem:[%s1624] sm:$0xf]
    %v1626 = vld [vmem:[%s1624 + $0x4] sm:$0xf]
    %v1627 = vld [vmem:[%s1624 + $0x8] sm:$0xf]
    %v1628 = vld [vmem:[%s1624 + $0xc] sm:$0xf]
    %s1629 = scalar_lea.vmem %s5, 16
    %v1630 = vld [vmem:[%s1629] sm:$0xf]
    %v1631 = vld [vmem:[%s1629 + $0x4] sm:$0xf]
    %v1632 = vld [vmem:[%s1629 + $0x8] sm:$0xf]
    %v1633 = vld [vmem:[%s1629 + $0xc] sm:$0xf]
    %v1634 = vpack.c.bf16 %v1623, %v1505
    %v1635 = vlaneseq
    %v1636 = vshrl.u32 %v1635, 7
    %v1637 = vsub.s32 1, %v1636
    %v1638 = vrot.slane %v43, %v1637
    %v1643 = vunpack.c.l.b16 %v1625
    %v1644 = vunpack.c.l.b16 %v1626
    %v1645 = vunpack.c.l.b16 %v1627
    %v1646 = vunpack.c.l.b16 %v1628
    %v1647 = vpack.c.b16 %v1644, %v1643
    %v1648 = vpack.c.b16 %v1646, %v1645
    %v1652 = vsel %vm46, %v1634, 0
    %1654 = vmatprep.subr.bf16.mxu0 0
    %1655 = vmatpush1.bf16.msra.mxu0 0
    %1656 = vmatprep.subr.bf16.mxu0 0
    %1657 = vmatpush1.bf16.msra.mxu0 0
    %1658 = vmatprep.subr.bf16.mxu0 0
    %1659 = vmatpush1.bf16.msra.mxu0 0
    %1660 = vmatprep.subr.bf16.mxu0 0
    %1661 = vmatpush1.bf16.msra.mxu0 0
    %1662 = vmatprep.subr.bf16.mxu0 0
    %1663 = vmatpush1.bf16.msra.mxu0 0
    %1664 = vmatprep.subr.bf16.mxu0 0
    %1665 = vmatpush1.bf16.msra.mxu0 0
    %1666 = vmatprep.subr.bf16.mxu0 0
    %1667 = vmatpush1.bf16.msra.mxu0 %v1648
    %1668 = vmatprep.subr.bf16.mxu0 0
    %1669 = vmatpush1.bf16.msra.mxu0 %v1647
    %1670 = vmatprep.subr.bf16.mxu0 0
    %1671 = vmatpush2.bf16.msra.mxu0 0
    %1672 = vmatprep.subr.bf16.mxu0 0
    %1673 = vmatpush2.bf16.msra.mxu0 0
    %1674 = vmatprep.subr.bf16.mxu0 0
    %1675 = vmatpush2.bf16.msra.mxu0 0
    %1676 = vmatprep.subr.bf16.mxu0 0
    %1677 = vmatpush2.bf16.msra.mxu0 0
    %1678 = vmatprep.subr.bf16.mxu0 0
    %1679 = vmatpush2.bf16.msra.mxu0 0
    %1680 = vmatprep.subr.bf16.mxu0 0
    %1681 = vmatpush2.bf16.msra.mxu0 0
    %1682 = vmatprep.subr.bf16.mxu0 0
    %1683 = vmatpush2.bf16.msra.mxu0 0
    %1684 = vmatprep.subr.bf16.mxu0 0
    %1685 = vmatpush2.bf16.msra.mxu0 0
    %1686 = vmatprep.mubr.bf16.mxu0 0
    %1687 = vmatmul.mubr.bf16.gmra.mxu0 %v1652
    %v1688 = vpop.f32.mrf.mxu0
    %v1689 = vadd.f32 %v1638, %v1688
    %v1690 = vpop.f32.mrf.mxu0
    %v1691 = vpop.f32.mrf.mxu0
    %v1692 = vadd.f32 %v1638, %v1691
    %v1693 = vpop.f32.mrf.mxu0
    %1694 = vdwg.mxu0
    %v1695 = vpack.c.bf16 %v1689, %v1689
    %1697 = vrot.lane.b32.xlu0 %v1695, 96
    %v1698 = vpop.permute.xlu0 %1697
    %v1700 = vsel %vm163, %v1695, 0
    %v1703 = vsel %vm163, %v1698, 0
    %1705 = vmatprep.subr.bf16.mxu0 0
    %1706 = vmatpush1.bf16.xpose.msra.mxu0 0
    %1707 = vmatprep.subr.bf16.mxu0 0
    %1708 = vmatpush1.bf16.xpose.msra.mxu0 0
    %1709 = vmatprep.subr.bf16.mxu0 0
    %1710 = vmatpush1.bf16.xpose.msra.mxu0 0
    %1711 = vmatprep.subr.bf16.mxu0 0
    %1712 = vmatpush1.bf16.xpose.msra.mxu0 0
    %1713 = vmatprep.subr.bf16.mxu0 0
    %1714 = vmatpush1.bf16.xpose.msra.mxu0 0
    %1715 = vmatprep.subr.bf16.mxu0 0
    %1716 = vmatpush1.bf16.xpose.msra.mxu0 0
    %1717 = vmatprep.subr.bf16.mxu0 0
    %1718 = vmatpush1.bf16.xpose.msra.mxu0 0
    %1719 = vmatprep.subr.bf16.mxu0 0
    %1720 = vmatpush1.bf16.xpose.msra.mxu0 %v1703
    %1721 = vmatprep.subr.bf16.mxu0 0
    %1722 = vmatpush2.bf16.xpose.msra.mxu0 0
    %1723 = vmatprep.subr.bf16.mxu0 0
    %1724 = vmatpush2.bf16.xpose.msra.mxu0 0
    %1725 = vmatprep.subr.bf16.mxu0 0
    %1726 = vmatpush2.bf16.xpose.msra.mxu0 0
    %1727 = vmatprep.subr.bf16.mxu0 0
    %1728 = vmatpush2.bf16.xpose.msra.mxu0 0
    %1729 = vmatprep.subr.bf16.mxu0 0
    %1730 = vmatpush2.bf16.xpose.msra.mxu0 0
    %1731 = vmatprep.subr.bf16.mxu0 0
    %1732 = vmatpush2.bf16.xpose.msra.mxu0 0
    %1733 = vmatprep.subr.bf16.mxu0 0
    %1734 = vmatpush2.bf16.xpose.msra.mxu0 0
    %1735 = vmatprep.subr.bf16.mxu0 0
    %1736 = vmatpush2.bf16.xpose.msra.mxu0 0
    %1737 = vmatprep.mubr.bf16.mxu0 0
    %1738 = vmatmul.mubr.bf16.gmra.mxu0 %v1700
    %v1739 = vpop.f32.mrf.mxu0
    %v1740 = vadd.f32 %v159, %v1739
    %v1741 = vpop.f32.mrf.mxu0
    %v1742 = vpop.f32.mrf.mxu0
    %v1743 = vpop.f32.mrf.mxu0
    %1744 = vdwg.mxu0
    %v1745 = vsel %vm163, %v1740, -inf
    %1746 = vmax.xlane.f32.xlu0 %v1745
    %v1747 = vpop.xlane.xlu0 %1746
    %v1748 = vsub.f32 %v1740, %v1747
    %v1749 = vmul.f32 %v1748, 1.442695
    %v1750 = vpow.pop %v1749
    %v1751 = vsel %vm163, %v1750, 0.0
    %1752 = vadd.xlane.f32.xlu0 %v1751
    %v1753 = vpop.xlane.xlu0 %1752
    %v1754 = vrcp.pop %v1753
    %v1755 = vmul.f32 %v1750, %v1754
    %v1756 = vpack.c.bf16 %v1755, %v1755
    %1757 = vrot.lane.b32.xlu0 %v1695, 64
    %v1758 = vpop.permute.xlu0 %1757
    %v1760 = vsel %vm163, %v1756, 0
    %v1763 = vsel %vm227, %v1758, 0
    %1765 = vmatprep.subr.bf16.mxu0 0
    %1766 = vmatpush1.bf16.msra.mxu0 0
    %1767 = vmatprep.subr.bf16.mxu0 0
    %1768 = vmatpush1.bf16.msra.mxu0 0
    %1769 = vmatprep.subr.bf16.mxu0 0
    %1770 = vmatpush1.bf16.msra.mxu0 0
    %1771 = vmatprep.subr.bf16.mxu0 0
    %1772 = vmatpush1.bf16.msra.mxu0 0
    %1773 = vmatprep.subr.bf16.mxu0 0
    %1774 = vmatpush1.bf16.msra.mxu0 0
    %1775 = vmatprep.subr.bf16.mxu0 0
    %1776 = vmatpush1.bf16.msra.mxu0 0
    %1777 = vmatprep.subr.bf16.mxu0 0
    %1778 = vmatpush1.bf16.msra.mxu0 0
    %1779 = vmatprep.subr.bf16.mxu0 0
    %1780 = vmatpush1.bf16.msra.mxu0 %v1763
    %1781 = vmatprep.subr.bf16.mxu0 0
    %1782 = vmatpush2.bf16.msra.mxu0 0
    %1783 = vmatprep.subr.bf16.mxu0 0
    %1784 = vmatpush2.bf16.msra.mxu0 0
    %1785 = vmatprep.subr.bf16.mxu0 0
    %1786 = vmatpush2.bf16.msra.mxu0 0
    %1787 = vmatprep.subr.bf16.mxu0 0
    %1788 = vmatpush2.bf16.msra.mxu0 0
    %1789 = vmatprep.subr.bf16.mxu0 0
    %1790 = vmatpush2.bf16.msra.mxu0 0
    %1791 = vmatprep.subr.bf16.mxu0 0
    %1792 = vmatpush2.bf16.msra.mxu0 0
    %1793 = vmatprep.subr.bf16.mxu0 0
    %1794 = vmatpush2.bf16.msra.mxu0 0
    %1795 = vmatprep.subr.bf16.mxu0 0
    %1796 = vmatpush2.bf16.msra.mxu0 0
    %1797 = vmatprep.mubr.bf16.mxu0 0
    %1798 = vmatmul.mubr.bf16.gmra.mxu0 %v1760
    %v1799 = vpop.f32.mrf.mxu0
    %v1800 = vadd.f32 0.0, %v1799
    %v1801 = vpop.f32.mrf.mxu0
    %v1802 = vpop.f32.mrf.mxu0
    %v1803 = vpop.f32.mrf.mxu0
    %1804 = vdwg.mxu0
    %1805 = vrot.lane.b32.xlu0 %v1695, 120
    %v1806 = vpop.permute.xlu0 %1805
    %1807 = vrot.lane.b32.xlu0 %v1695, 88
    %v1808 = vpop.permute.xlu0 %1807
    %v1810 = vsel %vm163, %v1806, 0
    %v1813 = vsel %vm163, %v1808, 0
    %1815 = vmatprep.subr.bf16.mxu0 0
    %1816 = vmatpush1.bf16.xpose.msra.mxu0 0
    %1817 = vmatprep.subr.bf16.mxu0 0
    %1818 = vmatpush1.bf16.xpose.msra.mxu0 0
    %1819 = vmatprep.subr.bf16.mxu0 0
    %1820 = vmatpush1.bf16.xpose.msra.mxu0 0
    %1821 = vmatprep.subr.bf16.mxu0 0
    %1822 = vmatpush1.bf16.xpose.msra.mxu0 0
    %1823 = vmatprep.subr.bf16.mxu0 0
    %1824 = vmatpush1.bf16.xpose.msra.mxu0 0
    %1825 = vmatprep.subr.bf16.mxu0 0
    %1826 = vmatpush1.bf16.xpose.msra.mxu0 0
    %1827 = vmatprep.subr.bf16.mxu0 0
    %1828 = vmatpush1.bf16.xpose.msra.mxu0 0
    %1829 = vmatprep.subr.bf16.mxu0 0
    %1830 = vmatpush1.bf16.xpose.msra.mxu0 %v1813
    %1831 = vmatprep.subr.bf16.mxu0 0
    %1832 = vmatpush2.bf16.xpose.msra.mxu0 0
    %1833 = vmatprep.subr.bf16.mxu0 0
    %1834 = vmatpush2.bf16.xpose.msra.mxu0 0
    %1835 = vmatprep.subr.bf16.mxu0 0
    %1836 = vmatpush2.bf16.xpose.msra.mxu0 0
    %1837 = vmatprep.subr.bf16.mxu0 0
    %1838 = vmatpush2.bf16.xpose.msra.mxu0 0
    %1839 = vmatprep.subr.bf16.mxu0 0
    %1840 = vmatpush2.bf16.xpose.msra.mxu0 0
    %1841 = vmatprep.subr.bf16.mxu0 0
    %1842 = vmatpush2.bf16.xpose.msra.mxu0 0
    %1843 = vmatprep.subr.bf16.mxu0 0
    %1844 = vmatpush2.bf16.xpose.msra.mxu0 0
    %1845 = vmatprep.subr.bf16.mxu0 0
    %1846 = vmatpush2.bf16.xpose.msra.mxu0 0
    %1847 = vmatprep.mubr.bf16.mxu0 0
    %1848 = vmatmul.mubr.bf16.gmra.mxu0 %v1810
    %v1849 = vpop.f32.mrf.mxu0
    %v1850 = vadd.f32 %v159, %v1849
    %v1851 = vpop.f32.mrf.mxu0
    %v1852 = vpop.f32.mrf.mxu0
    %v1853 = vpop.f32.mrf.mxu0
    %1854 = vdwg.mxu0
    %v1855 = vsel %vm163, %v1850, -inf
    %1856 = vmax.xlane.f32.xlu0 %v1855
    %v1857 = vpop.xlane.xlu0 %1856
    %v1858 = vsub.f32 %v1850, %v1857
    %v1859 = vmul.f32 %v1858, 1.442695
    %v1860 = vpow.pop %v1859
    %v1861 = vsel %vm163, %v1860, 0.0
    %1862 = vadd.xlane.f32.xlu0 %v1861
    %v1863 = vpop.xlane.xlu0 %1862
    %v1864 = vrcp.pop %v1863
    %v1865 = vmul.f32 %v1860, %v1864
    %v1866 = vpack.c.bf16 %v1865, %v1865
    %1867 = vrot.lane.b32.xlu0 %v1695, 56
    %v1868 = vpop.permute.xlu0 %1867
    %v1870 = vsel %vm163, %v1866, 0
    %v1873 = vsel %vm227, %v1868, 0
    %1875 = vmatprep.subr.bf16.mxu0 0
    %1876 = vmatpush1.bf16.msra.mxu0 0
    %1877 = vmatprep.subr.bf16.mxu0 0
    %1878 = vmatpush1.bf16.msra.mxu0 0
    %1879 = vmatprep.subr.bf16.mxu0 0
    %1880 = vmatpush1.bf16.msra.mxu0 0
    %1881 = vmatprep.subr.bf16.mxu0 0
    %1882 = vmatpush1.bf16.msra.mxu0 0
    %1883 = vmatprep.subr.bf16.mxu0 0
    %1884 = vmatpush1.bf16.msra.mxu0 0
    %1885 = vmatprep.subr.bf16.mxu0 0
    %1886 = vmatpush1.bf16.msra.mxu0 0
    %1887 = vmatprep.subr.bf16.mxu0 0
    %1888 = vmatpush1.bf16.msra.mxu0 0
    %1889 = vmatprep.subr.bf16.mxu0 0
    %1890 = vmatpush1.bf16.msra.mxu0 %v1873
    %1891 = vmatprep.subr.bf16.mxu0 0
    %1892 = vmatpush2.bf16.msra.mxu0 0
    %1893 = vmatprep.subr.bf16.mxu0 0
    %1894 = vmatpush2.bf16.msra.mxu0 0
    %1895 = vmatprep.subr.bf16.mxu0 0
    %1896 = vmatpush2.bf16.msra.mxu0 0
    %1897 = vmatprep.subr.bf16.mxu0 0
    %1898 = vmatpush2.bf16.msra.mxu0 0
    %1899 = vmatprep.subr.bf16.mxu0 0
    %1900 = vmatpush2.bf16.msra.mxu0 0
    %1901 = vmatprep.subr.bf16.mxu0 0
    %1902 = vmatpush2.bf16.msra.mxu0 0
    %1903 = vmatprep.subr.bf16.mxu0 0
    %1904 = vmatpush2.bf16.msra.mxu0 0
    %1905 = vmatprep.subr.bf16.mxu0 0
    %1906 = vmatpush2.bf16.msra.mxu0 0
    %1907 = vmatprep.mubr.bf16.mxu0 0
    %1908 = vmatmul.mubr.bf16.gmra.mxu0 %v1870
    %v1909 = vpop.f32.mrf.mxu0
    %v1910 = vadd.f32 0.0, %v1909
    %v1911 = vpop.f32.mrf.mxu0
    %v1912 = vpop.f32.mrf.mxu0
    %v1913 = vpop.f32.mrf.mxu0
    %1914 = vdwg.mxu0
    %1915 = vrot.lane.b32.xlu0 %v1695, 112
    %v1916 = vpop.permute.xlu0 %1915
    %1917 = vrot.lane.b32.xlu0 %v1695, 80
    %v1918 = vpop.permute.xlu0 %1917
    %v1920 = vsel %vm163, %v1916, 0
    %v1923 = vsel %vm163, %v1918, 0
    %1925 = vmatprep.subr.bf16.mxu0 0
    %1926 = vmatpush1.bf16.xpose.msra.mxu0 0
    %1927 = vmatprep.subr.bf16.mxu0 0
    %1928 = vmatpush1.bf16.xpose.msra.mxu0 0
    %1929 = vmatprep.subr.bf16.mxu0 0
    %1930 = vmatpush1.bf16.xpose.msra.mxu0 0
    %1931 = vmatprep.subr.bf16.mxu0 0
    %1932 = vmatpush1.bf16.xpose.msra.mxu0 0
    %1933 = vmatprep.subr.bf16.mxu0 0
    %1934 = vmatpush1.bf16.xpose.msra.mxu0 0
    %1935 = vmatprep.subr.bf16.mxu0 0
    %1936 = vmatpush1.bf16.xpose.msra.mxu0 0
    %1937 = vmatprep.subr.bf16.mxu0 0
    %1938 = vmatpush1.bf16.xpose.msra.mxu0 0
    %1939 = vmatprep.subr.bf16.mxu0 0
    %1940 = vmatpush1.bf16.xpose.msra.mxu0 %v1923
    %1941 = vmatprep.subr.bf16.mxu0 0
    %1942 = vmatpush2.bf16.xpose.msra.mxu0 0
    %1943 = vmatprep.subr.bf16.mxu0 0
    %1944 = vmatpush2.bf16.xpose.msra.mxu0 0
    %1945 = vmatprep.subr.bf16.mxu0 0
    %1946 = vmatpush2.bf16.xpose.msra.mxu0 0
    %1947 = vmatprep.subr.bf16.mxu0 0
    %1948 = vmatpush2.bf16.xpose.msra.mxu0 0
    %1949 = vmatprep.subr.bf16.mxu0 0
    %1950 = vmatpush2.bf16.xpose.msra.mxu0 0
    %1951 = vmatprep.subr.bf16.mxu0 0
    %1952 = vmatpush2.bf16.xpose.msra.mxu0 0
    %1953 = vmatprep.subr.bf16.mxu0 0
    %1954 = vmatpush2.bf16.xpose.msra.mxu0 0
    %1955 = vmatprep.subr.bf16.mxu0 0
    %1956 = vmatpush2.bf16.xpose.msra.mxu0 0
    %1957 = vmatprep.mubr.bf16.mxu0 0
    %1958 = vmatmul.mubr.bf16.gmra.mxu0 %v1920
    %v1959 = vpop.f32.mrf.mxu0
    %v1960 = vadd.f32 %v159, %v1959
    %v1961 = vpop.f32.mrf.mxu0
    %v1962 = vpop.f32.mrf.mxu0
    %v1963 = vpop.f32.mrf.mxu0
    %1964 = vdwg.mxu0
    %v1965 = vsel %vm163, %v1960, -inf
    %1966 = vmax.xlane.f32.xlu0 %v1965
    %v1967 = vpop.xlane.xlu0 %1966
    %v1968 = vsub.f32 %v1960, %v1967
    %v1969 = vmul.f32 %v1968, 1.442695
    %v1970 = vpow.pop %v1969
    %v1971 = vsel %vm163, %v1970, 0.0
    %1972 = vadd.xlane.f32.xlu0 %v1971
    %v1973 = vpop.xlane.xlu0 %1972
    %v1974 = vrcp.pop %v1973
    %v1975 = vmul.f32 %v1970, %v1974
    %v1976 = vpack.c.bf16 %v1975, %v1975
    %1977 = vrot.lane.b32.xlu0 %v1695, 48
    %v1978 = vpop.permute.xlu0 %1977
    %v1980 = vsel %vm163, %v1976, 0
    %v1983 = vsel %vm227, %v1978, 0
    %1985 = vmatprep.subr.bf16.mxu0 0
    %1986 = vmatpush1.bf16.msra.mxu0 0
    %1987 = vmatprep.subr.bf16.mxu0 0
    %1988 = vmatpush1.bf16.msra.mxu0 0
    %1989 = vmatprep.subr.bf16.mxu0 0
    %1990 = vmatpush1.bf16.msra.mxu0 0
    %1991 = vmatprep.subr.bf16.mxu0 0
    %1992 = vmatpush1.bf16.msra.mxu0 0
    %1993 = vmatprep.subr.bf16.mxu0 0
    %1994 = vmatpush1.bf16.msra.mxu0 0
    %1995 = vmatprep.subr.bf16.mxu0 0
    %1996 = vmatpush1.bf16.msra.mxu0 0
    %1997 = vmatprep.subr.bf16.mxu0 0
    %1998 = vmatpush1.bf16.msra.mxu0 0
    %1999 = vmatprep.subr.bf16.mxu0 0
    %2000 = vmatpush1.bf16.msra.mxu0 %v1983
    %2001 = vmatprep.subr.bf16.mxu0 0
    %2002 = vmatpush2.bf16.msra.mxu0 0
    %2003 = vmatprep.subr.bf16.mxu0 0
    %2004 = vmatpush2.bf16.msra.mxu0 0
    %2005 = vmatprep.subr.bf16.mxu0 0
    %2006 = vmatpush2.bf16.msra.mxu0 0
    %2007 = vmatprep.subr.bf16.mxu0 0
    %2008 = vmatpush2.bf16.msra.mxu0 0
    %2009 = vmatprep.subr.bf16.mxu0 0
    %2010 = vmatpush2.bf16.msra.mxu0 0
    %2011 = vmatprep.subr.bf16.mxu0 0
    %2012 = vmatpush2.bf16.msra.mxu0 0
    %2013 = vmatprep.subr.bf16.mxu0 0
    %2014 = vmatpush2.bf16.msra.mxu0 0
    %2015 = vmatprep.subr.bf16.mxu0 0
    %2016 = vmatpush2.bf16.msra.mxu0 0
    %2017 = vmatprep.mubr.bf16.mxu0 0
    %2018 = vmatmul.mubr.bf16.gmra.mxu0 %v1980
    %v2019 = vpop.f32.mrf.mxu0
    %v2020 = vadd.f32 0.0, %v2019
    %v2021 = vpop.f32.mrf.mxu0
    %v2022 = vpop.f32.mrf.mxu0
    %v2023 = vpop.f32.mrf.mxu0
    %2024 = vdwg.mxu0
    %2025 = vrot.lane.b32.xlu0 %v1695, 104
    %v2026 = vpop.permute.xlu0 %2025
    %2027 = vrot.lane.b32.xlu0 %v1695, 72
    %v2028 = vpop.permute.xlu0 %2027
    %v2030 = vsel %vm163, %v2026, 0
    %v2033 = vsel %vm163, %v2028, 0
    %2035 = vmatprep.subr.bf16.mxu0 0
    %2036 = vmatpush1.bf16.xpose.msra.mxu0 0
    %2037 = vmatprep.subr.bf16.mxu0 0
    %2038 = vmatpush1.bf16.xpose.msra.mxu0 0
    %2039 = vmatprep.subr.bf16.mxu0 0
    %2040 = vmatpush1.bf16.xpose.msra.mxu0 0
    %2041 = vmatprep.subr.bf16.mxu0 0
    %2042 = vmatpush1.bf16.xpose.msra.mxu0 0
    %2043 = vmatprep.subr.bf16.mxu0 0
    %2044 = vmatpush1.bf16.xpose.msra.mxu0 0
    %2045 = vmatprep.subr.bf16.mxu0 0
    %2046 = vmatpush1.bf16.xpose.msra.mxu0 0
    %2047 = vmatprep.subr.bf16.mxu0 0
    %2048 = vmatpush1.bf16.xpose.msra.mxu0 0
    %2049 = vmatprep.subr.bf16.mxu0 0
    %2050 = vmatpush1.bf16.xpose.msra.mxu0 %v2033
    %2051 = vmatprep.subr.bf16.mxu0 0
    %2052 = vmatpush2.bf16.xpose.msra.mxu0 0
    %2053 = vmatprep.subr.bf16.mxu0 0
    %2054 = vmatpush2.bf16.xpose.msra.mxu0 0
    %2055 = vmatprep.subr.bf16.mxu0 0
    %2056 = vmatpush2.bf16.xpose.msra.mxu0 0
    %2057 = vmatprep.subr.bf16.mxu0 0
    %2058 = vmatpush2.bf16.xpose.msra.mxu0 0
    %2059 = vmatprep.subr.bf16.mxu0 0
    %2060 = vmatpush2.bf16.xpose.msra.mxu0 0
    %2061 = vmatprep.subr.bf16.mxu0 0
    %2062 = vmatpush2.bf16.xpose.msra.mxu0 0
    %2063 = vmatprep.subr.bf16.mxu0 0
    %2064 = vmatpush2.bf16.xpose.msra.mxu0 0
    %2065 = vmatprep.subr.bf16.mxu0 0
    %2066 = vmatpush2.bf16.xpose.msra.mxu0 0
    %2067 = vmatprep.mubr.bf16.mxu0 0
    %2068 = vmatmul.mubr.bf16.gmra.mxu0 %v2030
    %v2069 = vpop.f32.mrf.mxu0
    %v2070 = vadd.f32 %v159, %v2069
    %v2071 = vpop.f32.mrf.mxu0
    %v2072 = vpop.f32.mrf.mxu0
    %v2073 = vpop.f32.mrf.mxu0
    %2074 = vdwg.mxu0
    %v2075 = vsel %vm163, %v2070, -inf
    %2076 = vmax.xlane.f32.xlu0 %v2075
    %v2077 = vpop.xlane.xlu0 %2076
    %v2078 = vsub.f32 %v2070, %v2077
    %v2079 = vmul.f32 %v2078, 1.442695
    %v2080 = vpow.pop %v2079
    %v2081 = vsel %vm163, %v2080, 0.0
    %2082 = vadd.xlane.f32.xlu0 %v2081
    %v2083 = vpop.xlane.xlu0 %2082
    %v2084 = vrcp.pop %v2083
    %v2085 = vmul.f32 %v2080, %v2084
    %v2086 = vpack.c.bf16 %v2085, %v2085
    %2087 = vrot.lane.b32.xlu0 %v1695, 40
    %v2088 = vpop.permute.xlu0 %2087
    %v2090 = vsel %vm163, %v2086, 0
    %v2093 = vsel %vm227, %v2088, 0
    %2095 = vmatprep.subr.bf16.mxu0 0
    %2096 = vmatpush1.bf16.msra.mxu0 0
    %2097 = vmatprep.subr.bf16.mxu0 0
    %2098 = vmatpush1.bf16.msra.mxu0 0
    %2099 = vmatprep.subr.bf16.mxu0 0
    %2100 = vmatpush1.bf16.msra.mxu0 0
    %2101 = vmatprep.subr.bf16.mxu0 0
    %2102 = vmatpush1.bf16.msra.mxu0 0
    %2103 = vmatprep.subr.bf16.mxu0 0
    %2104 = vmatpush1.bf16.msra.mxu0 0
    %2105 = vmatprep.subr.bf16.mxu0 0
    %2106 = vmatpush1.bf16.msra.mxu0 0
    %2107 = vmatprep.subr.bf16.mxu0 0
    %2108 = vmatpush1.bf16.msra.mxu0 0
    %2109 = vmatprep.subr.bf16.mxu0 0
    %2110 = vmatpush1.bf16.msra.mxu0 %v2093
    %2111 = vmatprep.subr.bf16.mxu0 0
    %2112 = vmatpush2.bf16.msra.mxu0 0
    %2113 = vmatprep.subr.bf16.mxu0 0
    %2114 = vmatpush2.bf16.msra.mxu0 0
    %2115 = vmatprep.subr.bf16.mxu0 0
    %2116 = vmatpush2.bf16.msra.mxu0 0
    %2117 = vmatprep.subr.bf16.mxu0 0
    %2118 = vmatpush2.bf16.msra.mxu0 0
    %2119 = vmatprep.subr.bf16.mxu0 0
    %2120 = vmatpush2.bf16.msra.mxu0 0
    %2121 = vmatprep.subr.bf16.mxu0 0
    %2122 = vmatpush2.bf16.msra.mxu0 0
    %2123 = vmatprep.subr.bf16.mxu0 0
    %2124 = vmatpush2.bf16.msra.mxu0 0
    %2125 = vmatprep.subr.bf16.mxu0 0
    %2126 = vmatpush2.bf16.msra.mxu0 0
    %2127 = vmatprep.mubr.bf16.mxu0 0
    %2128 = vmatmul.mubr.bf16.gmra.mxu0 %v2090
    %v2129 = vpop.f32.mrf.mxu0
    %v2130 = vadd.f32 0.0, %v2129
    %v2131 = vpop.f32.mrf.mxu0
    %v2132 = vpop.f32.mrf.mxu0
    %v2133 = vpop.f32.mrf.mxu0
    %2134 = vdwg.mxu0
    %2136 = vrot.lane.b32.xlu0 %v1910, 8
    %v2137 = vpop.permute.xlu0 %2136
    %2140 = vrot.lane.b32.xlu0 %v2020, 16
    %v2141 = vpop.permute.xlu0 %2140
    %2144 = vrot.lane.b32.xlu0 %v2130, 24
    %v2145 = vpop.permute.xlu0 %2144
    %v2147 = vsel %vm163, %v1800, %v2137
    %v2148 = vsel %vm614, %v2147, %v2141
    %v2149 = vsel %vm616, %v2148, %v2145
    %v2150 = vpack.c.bf16 %v1692, %v1692
    %2152 = vrot.lane.b32.xlu0 %v2150, 96
    %v2153 = vpop.permute.xlu0 %2152
    %v2155 = vsel %vm163, %v2150, 0
    %v2158 = vsel %vm163, %v2153, 0
    %2160 = vmatprep.subr.bf16.mxu0 0
    %2161 = vmatpush1.bf16.xpose.msra.mxu0 0
    %2162 = vmatprep.subr.bf16.mxu0 0
    %2163 = vmatpush1.bf16.xpose.msra.mxu0 0
    %2164 = vmatprep.subr.bf16.mxu0 0
    %2165 = vmatpush1.bf16.xpose.msra.mxu0 0
    %2166 = vmatprep.subr.bf16.mxu0 0
    %2167 = vmatpush1.bf16.xpose.msra.mxu0 0
    %2168 = vmatprep.subr.bf16.mxu0 0
    %2169 = vmatpush1.bf16.xpose.msra.mxu0 0
    %2170 = vmatprep.subr.bf16.mxu0 0
    %2171 = vmatpush1.bf16.xpose.msra.mxu0 0
    %2172 = vmatprep.subr.bf16.mxu0 0
    %2173 = vmatpush1.bf16.xpose.msra.mxu0 0
    %2174 = vmatprep.subr.bf16.mxu0 0
    %2175 = vmatpush1.bf16.xpose.msra.mxu0 %v2158
    %2176 = vmatprep.subr.bf16.mxu0 0
    %2177 = vmatpush2.bf16.xpose.msra.mxu0 0
    %2178 = vmatprep.subr.bf16.mxu0 0
    %2179 = vmatpush2.bf16.xpose.msra.mxu0 0
    %2180 = vmatprep.subr.bf16.mxu0 0
    %2181 = vmatpush2.bf16.xpose.msra.mxu0 0
    %2182 = vmatprep.subr.bf16.mxu0 0
    %2183 = vmatpush2.bf16.xpose.msra.mxu0 0
    %2184 = vmatprep.subr.bf16.mxu0 0
    %2185 = vmatpush2.bf16.xpose.msra.mxu0 0
    %2186 = vmatprep.subr.bf16.mxu0 0
    %2187 = vmatpush2.bf16.xpose.msra.mxu0 0
    %2188 = vmatprep.subr.bf16.mxu0 0
    %2189 = vmatpush2.bf16.xpose.msra.mxu0 0
    %2190 = vmatprep.subr.bf16.mxu0 0
    %2191 = vmatpush2.bf16.xpose.msra.mxu0 0
    %2192 = vmatprep.mubr.bf16.mxu0 0
    %2193 = vmatmul.mubr.bf16.gmra.mxu0 %v2155
    %v2194 = vpop.f32.mrf.mxu0
    %v2195 = vadd.f32 %v622, %v2194
    %v2196 = vpop.f32.mrf.mxu0
    %v2197 = vpop.f32.mrf.mxu0
    %v2198 = vpop.f32.mrf.mxu0
    %2199 = vdwg.mxu0
    %v2200 = vsel %vm163, %v2195, -inf
    %2201 = vmax.xlane.f32.xlu0 %v2200
    %v2202 = vpop.xlane.xlu0 %2201
    %v2203 = vsub.f32 %v2195, %v2202
    %v2204 = vmul.f32 %v2203, 1.442695
    %v2205 = vpow.pop %v2204
    %v2206 = vsel %vm163, %v2205, 0.0
    %2207 = vadd.xlane.f32.xlu0 %v2206
    %v2208 = vpop.xlane.xlu0 %2207
    %v2209 = vrcp.pop %v2208
    %v2210 = vmul.f32 %v2205, %v2209
    %v2211 = vpack.c.bf16 %v2210, %v2210
    %2212 = vrot.lane.b32.xlu0 %v2150, 64
    %v2213 = vpop.permute.xlu0 %2212
    %v2215 = vsel %vm163, %v2211, 0
    %v2218 = vsel %vm227, %v2213, 0
    %2220 = vmatprep.subr.bf16.mxu0 0
    %2221 = vmatpush1.bf16.msra.mxu0 0
    %2222 = vmatprep.subr.bf16.mxu0 0
    %2223 = vmatpush1.bf16.msra.mxu0 0
    %2224 = vmatprep.subr.bf16.mxu0 0
    %2225 = vmatpush1.bf16.msra.mxu0 0
    %2226 = vmatprep.subr.bf16.mxu0 0
    %2227 = vmatpush1.bf16.msra.mxu0 0
    %2228 = vmatprep.subr.bf16.mxu0 0
    %2229 = vmatpush1.bf16.msra.mxu0 0
    %2230 = vmatprep.subr.bf16.mxu0 0
    %2231 = vmatpush1.bf16.msra.mxu0 0
    %2232 = vmatprep.subr.bf16.mxu0 0
    %2233 = vmatpush1.bf16.msra.mxu0 0
    %2234 = vmatprep.subr.bf16.mxu0 0
    %2235 = vmatpush1.bf16.msra.mxu0 %v2218
    %2236 = vmatprep.subr.bf16.mxu0 0
    %2237 = vmatpush2.bf16.msra.mxu0 0
    %2238 = vmatprep.subr.bf16.mxu0 0
    %2239 = vmatpush2.bf16.msra.mxu0 0
    %2240 = vmatprep.subr.bf16.mxu0 0
    %2241 = vmatpush2.bf16.msra.mxu0 0
    %2242 = vmatprep.subr.bf16.mxu0 0
    %2243 = vmatpush2.bf16.msra.mxu0 0
    %2244 = vmatprep.subr.bf16.mxu0 0
    %2245 = vmatpush2.bf16.msra.mxu0 0
    %2246 = vmatprep.subr.bf16.mxu0 0
    %2247 = vmatpush2.bf16.msra.mxu0 0
    %2248 = vmatprep.subr.bf16.mxu0 0
    %2249 = vmatpush2.bf16.msra.mxu0 0
    %2250 = vmatprep.subr.bf16.mxu0 0
    %2251 = vmatpush2.bf16.msra.mxu0 0
    %2252 = vmatprep.mubr.bf16.mxu0 0
    %2253 = vmatmul.mubr.bf16.gmra.mxu0 %v2215
    %v2254 = vpop.f32.mrf.mxu0
    %v2255 = vadd.f32 0.0, %v2254
    %v2256 = vpop.f32.mrf.mxu0
    %v2257 = vpop.f32.mrf.mxu0
    %v2258 = vpop.f32.mrf.mxu0
    %2259 = vdwg.mxu0
    %2260 = vrot.lane.b32.xlu0 %v2150, 120
    %v2261 = vpop.permute.xlu0 %2260
    %2262 = vrot.lane.b32.xlu0 %v2150, 88
    %v2263 = vpop.permute.xlu0 %2262
    %v2265 = vsel %vm163, %v2261, 0
    %v2268 = vsel %vm163, %v2263, 0
    %2270 = vmatprep.subr.bf16.mxu0 0
    %2271 = vmatpush1.bf16.xpose.msra.mxu0 0
    %2272 = vmatprep.subr.bf16.mxu0 0
    %2273 = vmatpush1.bf16.xpose.msra.mxu0 0
    %2274 = vmatprep.subr.bf16.mxu0 0
    %2275 = vmatpush1.bf16.xpose.msra.mxu0 0
    %2276 = vmatprep.subr.bf16.mxu0 0
    %2277 = vmatpush1.bf16.xpose.msra.mxu0 0
    %2278 = vmatprep.subr.bf16.mxu0 0
    %2279 = vmatpush1.bf16.xpose.msra.mxu0 0
    %2280 = vmatprep.subr.bf16.mxu0 0
    %2281 = vmatpush1.bf16.xpose.msra.mxu0 0
    %2282 = vmatprep.subr.bf16.mxu0 0
    %2283 = vmatpush1.bf16.xpose.msra.mxu0 0
    %2284 = vmatprep.subr.bf16.mxu0 0
    %2285 = vmatpush1.bf16.xpose.msra.mxu0 %v2268
    %2286 = vmatprep.subr.bf16.mxu0 0
    %2287 = vmatpush2.bf16.xpose.msra.mxu0 0
    %2288 = vmatprep.subr.bf16.mxu0 0
    %2289 = vmatpush2.bf16.xpose.msra.mxu0 0
    %2290 = vmatprep.subr.bf16.mxu0 0
    %2291 = vmatpush2.bf16.xpose.msra.mxu0 0
    %2292 = vmatprep.subr.bf16.mxu0 0
    %2293 = vmatpush2.bf16.xpose.msra.mxu0 0
    %2294 = vmatprep.subr.bf16.mxu0 0
    %2295 = vmatpush2.bf16.xpose.msra.mxu0 0
    %2296 = vmatprep.subr.bf16.mxu0 0
    %2297 = vmatpush2.bf16.xpose.msra.mxu0 0
    %2298 = vmatprep.subr.bf16.mxu0 0
    %2299 = vmatpush2.bf16.xpose.msra.mxu0 0
    %2300 = vmatprep.subr.bf16.mxu0 0
    %2301 = vmatpush2.bf16.xpose.msra.mxu0 0
    %2302 = vmatprep.mubr.bf16.mxu0 0
    %2303 = vmatmul.mubr.bf16.gmra.mxu0 %v2265
    %v2304 = vpop.f32.mrf.mxu0
    %v2305 = vadd.f32 %v622, %v2304
    %v2306 = vpop.f32.mrf.mxu0
    %v2307 = vpop.f32.mrf.mxu0
    %v2308 = vpop.f32.mrf.mxu0
    %2309 = vdwg.mxu0
    %v2310 = vsel %vm163, %v2305, -inf
    %2311 = vmax.xlane.f32.xlu0 %v2310
    %v2312 = vpop.xlane.xlu0 %2311
    %v2313 = vsub.f32 %v2305, %v2312
    %v2314 = vmul.f32 %v2313, 1.442695
    %v2315 = vpow.pop %v2314
    %v2316 = vsel %vm163, %v2315, 0.0
    %2317 = vadd.xlane.f32.xlu0 %v2316
    %v2318 = vpop.xlane.xlu0 %2317
    %v2319 = vrcp.pop %v2318
    %v2320 = vmul.f32 %v2315, %v2319
    %v2321 = vpack.c.bf16 %v2320, %v2320
    %2322 = vrot.lane.b32.xlu0 %v2150, 56
    %v2323 = vpop.permute.xlu0 %2322
    %v2325 = vsel %vm163, %v2321, 0
    %v2328 = vsel %vm227, %v2323, 0
    %2330 = vmatprep.subr.bf16.mxu0 0
    %2331 = vmatpush1.bf16.msra.mxu0 0
    %2332 = vmatprep.subr.bf16.mxu0 0
    %2333 = vmatpush1.bf16.msra.mxu0 0
    %2334 = vmatprep.subr.bf16.mxu0 0
    %2335 = vmatpush1.bf16.msra.mxu0 0
    %2336 = vmatprep.subr.bf16.mxu0 0
    %2337 = vmatpush1.bf16.msra.mxu0 0
    %2338 = vmatprep.subr.bf16.mxu0 0
    %2339 = vmatpush1.bf16.msra.mxu0 0
    %2340 = vmatprep.subr.bf16.mxu0 0
    %2341 = vmatpush1.bf16.msra.mxu0 0
    %2342 = vmatprep.subr.bf16.mxu0 0
    %2343 = vmatpush1.bf16.msra.mxu0 0
    %2344 = vmatprep.subr.bf16.mxu0 0
    %2345 = vmatpush1.bf16.msra.mxu0 %v2328
    %2346 = vmatprep.subr.bf16.mxu0 0
    %2347 = vmatpush2.bf16.msra.mxu0 0
    %2348 = vmatprep.subr.bf16.mxu0 0
    %2349 = vmatpush2.bf16.msra.mxu0 0
    %2350 = vmatprep.subr.bf16.mxu0 0
    %2351 = vmatpush2.bf16.msra.mxu0 0
    %2352 = vmatprep.subr.bf16.mxu0 0
    %2353 = vmatpush2.bf16.msra.mxu0 0
    %2354 = vmatprep.subr.bf16.mxu0 0
    %2355 = vmatpush2.bf16.msra.mxu0 0
    %2356 = vmatprep.subr.bf16.mxu0 0
    %2357 = vmatpush2.bf16.msra.mxu0 0
    %2358 = vmatprep.subr.bf16.mxu0 0
    %2359 = vmatpush2.bf16.msra.mxu0 0
    %2360 = vmatprep.subr.bf16.mxu0 0
    %2361 = vmatpush2.bf16.msra.mxu0 0
    %2362 = vmatprep.mubr.bf16.mxu0 0
    %2363 = vmatmul.mubr.bf16.gmra.mxu0 %v2325
    %v2364 = vpop.f32.mrf.mxu0
    %v2365 = vadd.f32 0.0, %v2364
    %v2366 = vpop.f32.mrf.mxu0
    %v2367 = vpop.f32.mrf.mxu0
    %v2368 = vpop.f32.mrf.mxu0
    %2369 = vdwg.mxu0
    %2370 = vrot.lane.b32.xlu0 %v2150, 112
    %v2371 = vpop.permute.xlu0 %2370
    %2372 = vrot.lane.b32.xlu0 %v2150, 80
    %v2373 = vpop.permute.xlu0 %2372
    %v2375 = vsel %vm163, %v2371, 0
    %v2378 = vsel %vm163, %v2373, 0
    %2380 = vmatprep.subr.bf16.mxu0 0
    %2381 = vmatpush1.bf16.xpose.msra.mxu0 0
    %2382 = vmatprep.subr.bf16.mxu0 0
    %2383 = vmatpush1.bf16.xpose.msra.mxu0 0
    %2384 = vmatprep.subr.bf16.mxu0 0
    %2385 = vmatpush1.bf16.xpose.msra.mxu0 0
    %2386 = vmatprep.subr.bf16.mxu0 0
    %2387 = vmatpush1.bf16.xpose.msra.mxu0 0
    %2388 = vmatprep.subr.bf16.mxu0 0
    %2389 = vmatpush1.bf16.xpose.msra.mxu0 0
    %2390 = vmatprep.subr.bf16.mxu0 0
    %2391 = vmatpush1.bf16.xpose.msra.mxu0 0
    %2392 = vmatprep.subr.bf16.mxu0 0
    %2393 = vmatpush1.bf16.xpose.msra.mxu0 0
    %2394 = vmatprep.subr.bf16.mxu0 0
    %2395 = vmatpush1.bf16.xpose.msra.mxu0 %v2378
    %2396 = vmatprep.subr.bf16.mxu0 0
    %2397 = vmatpush2.bf16.xpose.msra.mxu0 0
    %2398 = vmatprep.subr.bf16.mxu0 0
    %2399 = vmatpush2.bf16.xpose.msra.mxu0 0
    %2400 = vmatprep.subr.bf16.mxu0 0
    %2401 = vmatpush2.bf16.xpose.msra.mxu0 0
    %2402 = vmatprep.subr.bf16.mxu0 0
    %2403 = vmatpush2.bf16.xpose.msra.mxu0 0
    %2404 = vmatprep.subr.bf16.mxu0 0
    %2405 = vmatpush2.bf16.xpose.msra.mxu0 0
    %2406 = vmatprep.subr.bf16.mxu0 0
    %2407 = vmatpush2.bf16.xpose.msra.mxu0 0
    %2408 = vmatprep.subr.bf16.mxu0 0
    %2409 = vmatpush2.bf16.xpose.msra.mxu0 0
    %2410 = vmatprep.subr.bf16.mxu0 0
    %2411 = vmatpush2.bf16.xpose.msra.mxu0 0
    %2412 = vmatprep.mubr.bf16.mxu0 0
    %2413 = vmatmul.mubr.bf16.gmra.mxu0 %v2375
    %v2414 = vpop.f32.mrf.mxu0
    %v2415 = vadd.f32 %v622, %v2414
    %v2416 = vpop.f32.mrf.mxu0
    %v2417 = vpop.f32.mrf.mxu0
    %v2418 = vpop.f32.mrf.mxu0
    %2419 = vdwg.mxu0
    %v2420 = vsel %vm163, %v2415, -inf
    %2421 = vmax.xlane.f32.xlu0 %v2420
    %v2422 = vpop.xlane.xlu0 %2421
    %v2423 = vsub.f32 %v2415, %v2422
    %v2424 = vmul.f32 %v2423, 1.442695
    %v2425 = vpow.pop %v2424
    %v2426 = vsel %vm163, %v2425, 0.0
    %2427 = vadd.xlane.f32.xlu0 %v2426
    %v2428 = vpop.xlane.xlu0 %2427
    %v2429 = vrcp.pop %v2428
    %v2430 = vmul.f32 %v2425, %v2429
    %v2431 = vpack.c.bf16 %v2430, %v2430
    %2432 = vrot.lane.b32.xlu0 %v2150, 48
    %v2433 = vpop.permute.xlu0 %2432
    %v2435 = vsel %vm163, %v2431, 0
    %v2438 = vsel %vm227, %v2433, 0
    %2440 = vmatprep.subr.bf16.mxu0 0
    %2441 = vmatpush1.bf16.msra.mxu0 0
    %2442 = vmatprep.subr.bf16.mxu0 0
    %2443 = vmatpush1.bf16.msra.mxu0 0
    %2444 = vmatprep.subr.bf16.mxu0 0
    %2445 = vmatpush1.bf16.msra.mxu0 0
    %2446 = vmatprep.subr.bf16.mxu0 0
    %2447 = vmatpush1.bf16.msra.mxu0 0
    %2448 = vmatprep.subr.bf16.mxu0 0
    %2449 = vmatpush1.bf16.msra.mxu0 0
    %2450 = vmatprep.subr.bf16.mxu0 0
    %2451 = vmatpush1.bf16.msra.mxu0 0
    %2452 = vmatprep.subr.bf16.mxu0 0
    %2453 = vmatpush1.bf16.msra.mxu0 0
    %2454 = vmatprep.subr.bf16.mxu0 0
    %2455 = vmatpush1.bf16.msra.mxu0 %v2438
    %2456 = vmatprep.subr.bf16.mxu0 0
    %2457 = vmatpush2.bf16.msra.mxu0 0
    %2458 = vmatprep.subr.bf16.mxu0 0
    %2459 = vmatpush2.bf16.msra.mxu0 0
    %2460 = vmatprep.subr.bf16.mxu0 0
    %2461 = vmatpush2.bf16.msra.mxu0 0
    %2462 = vmatprep.subr.bf16.mxu0 0
    %2463 = vmatpush2.bf16.msra.mxu0 0
    %2464 = vmatprep.subr.bf16.mxu0 0
    %2465 = vmatpush2.bf16.msra.mxu0 0
    %2466 = vmatprep.subr.bf16.mxu0 0
    %2467 = vmatpush2.bf16.msra.mxu0 0
    %2468 = vmatprep.subr.bf16.mxu0 0
    %2469 = vmatpush2.bf16.msra.mxu0 0
    %2470 = vmatprep.subr.bf16.mxu0 0
    %2471 = vmatpush2.bf16.msra.mxu0 0
    %2472 = vmatprep.mubr.bf16.mxu0 0
    %2473 = vmatmul.mubr.bf16.gmra.mxu0 %v2435
    %v2474 = vpop.f32.mrf.mxu0
    %v2475 = vadd.f32 0.0, %v2474
    %v2476 = vpop.f32.mrf.mxu0
    %v2477 = vpop.f32.mrf.mxu0
    %v2478 = vpop.f32.mrf.mxu0
    %2479 = vdwg.mxu0
    %2480 = vrot.lane.b32.xlu0 %v2150, 104
    %v2481 = vpop.permute.xlu0 %2480
    %2482 = vrot.lane.b32.xlu0 %v2150, 72
    %v2483 = vpop.permute.xlu0 %2482
    %v2485 = vsel %vm163, %v2481, 0
    %v2488 = vsel %vm163, %v2483, 0
    %2490 = vmatprep.subr.bf16.mxu0 0
    %2491 = vmatpush1.bf16.xpose.msra.mxu0 0
    %2492 = vmatprep.subr.bf16.mxu0 0
    %2493 = vmatpush1.bf16.xpose.msra.mxu0 0
    %2494 = vmatprep.subr.bf16.mxu0 0
    %2495 = vmatpush1.bf16.xpose.msra.mxu0 0
    %2496 = vmatprep.subr.bf16.mxu0 0
    %2497 = vmatpush1.bf16.xpose.msra.mxu0 0
    %2498 = vmatprep.subr.bf16.mxu0 0
    %2499 = vmatpush1.bf16.xpose.msra.mxu0 0
    %2500 = vmatprep.subr.bf16.mxu0 0
    %2501 = vmatpush1.bf16.xpose.msra.mxu0 0
    %2502 = vmatprep.subr.bf16.mxu0 0
    %2503 = vmatpush1.bf16.xpose.msra.mxu0 0
    %2504 = vmatprep.subr.bf16.mxu0 0
    %2505 = vmatpush1.bf16.xpose.msra.mxu0 %v2488
    %2506 = vmatprep.subr.bf16.mxu0 0
    %2507 = vmatpush2.bf16.xpose.msra.mxu0 0
    %2508 = vmatprep.subr.bf16.mxu0 0
    %2509 = vmatpush2.bf16.xpose.msra.mxu0 0
    %2510 = vmatprep.subr.bf16.mxu0 0
    %2511 = vmatpush2.bf16.xpose.msra.mxu0 0
    %2512 = vmatprep.subr.bf16.mxu0 0
    %2513 = vmatpush2.bf16.xpose.msra.mxu0 0
    %2514 = vmatprep.subr.bf16.mxu0 0
    %2515 = vmatpush2.bf16.xpose.msra.mxu0 0
    %2516 = vmatprep.subr.bf16.mxu0 0
    %2517 = vmatpush2.bf16.xpose.msra.mxu0 0
    %2518 = vmatprep.subr.bf16.mxu0 0
    %2519 = vmatpush2.bf16.xpose.msra.mxu0 0
    %2520 = vmatprep.subr.bf16.mxu0 0
    %2521 = vmatpush2.bf16.xpose.msra.mxu0 0
    %2522 = vmatprep.mubr.bf16.mxu0 0
    %2523 = vmatmul.mubr.bf16.gmra.mxu0 %v2485
    %v2524 = vpop.f32.mrf.mxu0
    %v2525 = vadd.f32 %v622, %v2524
    %v2526 = vpop.f32.mrf.mxu0
    %v2527 = vpop.f32.mrf.mxu0
    %v2528 = vpop.f32.mrf.mxu0
    %2529 = vdwg.mxu0
    %v2530 = vsel %vm163, %v2525, -inf
    %2531 = vmax.xlane.f32.xlu0 %v2530
    %v2532 = vpop.xlane.xlu0 %2531
    %v2533 = vsub.f32 %v2525, %v2532
    %v2534 = vmul.f32 %v2533, 1.442695
    %v2535 = vpow.pop %v2534
    %v2536 = vsel %vm163, %v2535, 0.0
    %2537 = vadd.xlane.f32.xlu0 %v2536
    %v2538 = vpop.xlane.xlu0 %2537
    %v2539 = vrcp.pop %v2538
    %v2540 = vmul.f32 %v2535, %v2539
    %v2541 = vpack.c.bf16 %v2540, %v2540
    %2542 = vrot.lane.b32.xlu0 %v2150, 40
    %v2543 = vpop.permute.xlu0 %2542
    %v2545 = vsel %vm163, %v2541, 0
    %v2548 = vsel %vm227, %v2543, 0
    %2550 = vmatprep.subr.bf16.mxu0 0
    %2551 = vmatpush1.bf16.msra.mxu0 0
    %2552 = vmatprep.subr.bf16.mxu0 0
    %2553 = vmatpush1.bf16.msra.mxu0 0
    %2554 = vmatprep.subr.bf16.mxu0 0
    %2555 = vmatpush1.bf16.msra.mxu0 0
    %2556 = vmatprep.subr.bf16.mxu0 0
    %2557 = vmatpush1.bf16.msra.mxu0 0
    %2558 = vmatprep.subr.bf16.mxu0 0
    %2559 = vmatpush1.bf16.msra.mxu0 0
    %2560 = vmatprep.subr.bf16.mxu0 0
    %2561 = vmatpush1.bf16.msra.mxu0 0
    %2562 = vmatprep.subr.bf16.mxu0 0
    %2563 = vmatpush1.bf16.msra.mxu0 0
    %2564 = vmatprep.subr.bf16.mxu0 0
    %2565 = vmatpush1.bf16.msra.mxu0 %v2548
    %2566 = vmatprep.subr.bf16.mxu0 0
    %2567 = vmatpush2.bf16.msra.mxu0 0
    %2568 = vmatprep.subr.bf16.mxu0 0
    %2569 = vmatpush2.bf16.msra.mxu0 0
    %2570 = vmatprep.subr.bf16.mxu0 0
    %2571 = vmatpush2.bf16.msra.mxu0 0
    %2572 = vmatprep.subr.bf16.mxu0 0
    %2573 = vmatpush2.bf16.msra.mxu0 0
    %2574 = vmatprep.subr.bf16.mxu0 0
    %2575 = vmatpush2.bf16.msra.mxu0 0
    %2576 = vmatprep.subr.bf16.mxu0 0
    %2577 = vmatpush2.bf16.msra.mxu0 0
    %2578 = vmatprep.subr.bf16.mxu0 0
    %2579 = vmatpush2.bf16.msra.mxu0 0
    %2580 = vmatprep.subr.bf16.mxu0 0
    %2581 = vmatpush2.bf16.msra.mxu0 0
    %2582 = vmatprep.mubr.bf16.mxu0 0
    %2583 = vmatmul.mubr.bf16.gmra.mxu0 %v2545
    %v2584 = vpop.f32.mrf.mxu0
    %v2585 = vadd.f32 0.0, %v2584
    %v2586 = vpop.f32.mrf.mxu0
    %v2587 = vpop.f32.mrf.mxu0
    %v2588 = vpop.f32.mrf.mxu0
    %2589 = vdwg.mxu0
    %2591 = vrot.lane.b32.xlu0 %v2365, 8
    %v2592 = vpop.permute.xlu0 %2591
    %2595 = vrot.lane.b32.xlu0 %v2475, 16
    %v2596 = vpop.permute.xlu0 %2595
    %2599 = vrot.lane.b32.xlu0 %v2585, 24
    %v2600 = vpop.permute.xlu0 %2599
    %v2602 = vsel %vm163, %v2255, %v2592
    %v2603 = vsel %vm614, %v2602, %v2596
    %v2604 = vsel %vm616, %v2603, %v2600
    %v2605 = vpack.c.bf16 %v2604, %v2149
    %v2606 = vlaneseq
    %v2607 = vshrl.u32 %v2606, 7
    %v2608 = vsub.s32 0, %v2607
    %v2609 = vrot.slane %v42, %v2608
    %v2614 = vunpack.c.l.b16 %v1630
    %v2615 = vunpack.c.l.b16 %v1631
    %v2616 = vunpack.c.l.b16 %v1632
    %v2617 = vunpack.c.l.b16 %v1633
    %v2618 = vpack.c.b16 %v2615, %v2614
    %v2619 = vpack.c.b16 %v2617, %v2616
    %v2623 = vsel %vm46, %v2605, 0
    %2625 = vmatprep.subr.bf16.mxu0 0
    %2626 = vmatpush1.bf16.msra.mxu0 0
    %2627 = vmatprep.subr.bf16.mxu0 0
    %2628 = vmatpush1.bf16.msra.mxu0 0
    %2629 = vmatprep.subr.bf16.mxu0 0
    %2630 = vmatpush1.bf16.msra.mxu0 0
    %2631 = vmatprep.subr.bf16.mxu0 0
    %2632 = vmatpush1.bf16.msra.mxu0 0
    %2633 = vmatprep.subr.bf16.mxu0 0
    %2634 = vmatpush1.bf16.msra.mxu0 0
    %2635 = vmatprep.subr.bf16.mxu0 0
    %2636 = vmatpush1.bf16.msra.mxu0 0
    %2637 = vmatprep.subr.bf16.mxu0 0
    %2638 = vmatpush1.bf16.msra.mxu0 %v2619
    %2639 = vmatprep.subr.bf16.mxu0 0
    %2640 = vmatpush1.bf16.msra.mxu0 %v2618
    %2641 = vmatprep.subr.bf16.mxu0 0
    %2642 = vmatpush2.bf16.msra.mxu0 0
    %2643 = vmatprep.subr.bf16.mxu0 0
    %2644 = vmatpush2.bf16.msra.mxu0 0
    %2645 = vmatprep.subr.bf16.mxu0 0
    %2646 = vmatpush2.bf16.msra.mxu0 0
    %2647 = vmatprep.subr.bf16.mxu0 0
    %2648 = vmatpush2.bf16.msra.mxu0 0
    %2649 = vmatprep.subr.bf16.mxu0 0
    %2650 = vmatpush2.bf16.msra.mxu0 0
    %2651 = vmatprep.subr.bf16.mxu0 0
    %2652 = vmatpush2.bf16.msra.mxu0 0
    %2653 = vmatprep.subr.bf16.mxu0 0
    %2654 = vmatpush2.bf16.msra.mxu0 0
    %2655 = vmatprep.subr.bf16.mxu0 0
    %2656 = vmatpush2.bf16.msra.mxu0 0
    %2657 = vmatprep.mubr.bf16.mxu0 0
    %2658 = vmatmul.mubr.bf16.gmra.mxu0 %v2623
    %v2659 = vpop.f32.mrf.mxu0
    %v2660 = vadd.f32 %v2609, %v2659
    %v2661 = vpop.f32.mrf.mxu0
    %v2662 = vpop.f32.mrf.mxu0
    %v2663 = vadd.f32 %v2609, %v2662
    %v2664 = vpop.f32.mrf.mxu0
    %2665 = vdwg.mxu0
    %2666 = vst.msk [vmem:[#allocation2] sm:$0xff] %vm46, %v2660
    %2667 = vst.msk [vmem:[#allocation2 + $0x8] sm:$0xff] %vm46, %v2663
    // Predicated region
    $region42: #{encoder_forward.1} parent=1 // pred_check
      _
    $region43: #{encoder_forward.1} parent=1 // pred_check_branch
      %2669 = sbr.rel (0) target = $region45
    $region44: #{encoder_forward.1} parent=1 // pred_region
      %s2671 = ssub.s32 256, 256
      %2672 = vsyncadd [#allocation3], %s2671
      %s2673 = sshll.u32 [#allocation2], 4
      %s2674 = int_to_ptr.vmem [resolvable:$true] %s2673
      %2679 = dma.vmem_to_hbm [thread:$0]  %s2674, 256, %s10, [#allocation3], 128, 128, 8
    $region45: #{encoder_forward.1} parent=1 // pred_fallthru
      _
    // Predicated region
    $region46: #{encoder_forward.1} parent=1 // pred_check
      _
    $region47: #{encoder_forward.1} parent=1 // pred_check_branch
      %2681 = sbr.rel (0) target = $region49
    $region48: #{encoder_forward.1} parent=1 // pred_region
      %2682 = dma.done [#allocation3], 256
    $region49: #{encoder_forward.1} parent=1 // pred_fallthru
      _
    %2683 = vsyncpa [#allocation3], 1

</llo_original>
